<compile_context>
chip_gen: v7x
topology: tpu7x:2x2x1
jax: 0.10.0
libtpu: 0.0.40
codegen_flags: <defaults>
</compile_context>

<pallas_src>
import jax
import jax.numpy as jnp
from jax.experimental import pallas as pl
from jax.experimental.pallas import tpu as pltpu

# TODO(synk): fc_image nominally consumes 150528*224 = 33,718,272 input features;
# that is unallocatable here, so the image feature dim is scaled to 1024 for a
# runnable synthetic kernel (all other semantics are identical). Restoring the
# real dim requires a K-streamed, double-buffered bf16 grid over w_img.
IMAGE_FEAT_DIM = 1024
MESH_FEAT_DIM = 256
HIDDEN = 512
OUTPUT_DIM = 128
NOISE_DIM = 64
BATCH = 8
BN_EPS = 1e-5
LRELU_SLOPE = 0.2

# Row indices inside the packed (8, HIDDEN) per-feature-vector array.
_ROW_G_IMG, _ROW_BT_IMG = 0, 1
_ROW_G_MESH, _ROW_BT_MESH = 2, 3
_ROW_G_C, _ROW_BT_C = 4, 5
_ROW_B_OUT = 6  # output bias, padded from OUTPUT_DIM to HIDDEN with zeros


def _generator_kernel(
    img_ref, mesh_ref,
    w_img_ref, w_mesh_ref, wc_a_ref, wc_b_ref, w_out_ref,
    vec_ref,
    out_ref,
):
    def bn_lrelu(x, gamma, beta):
        # BatchNorm1d (training): batch mean + biased variance over axis 0,
        # with gamma folded into the normalization scale. All math in f32.
        mean = jnp.mean(x, axis=0, keepdims=True)
        centered = x - mean
        var = jnp.mean(centered * centered, axis=0, keepdims=True)
        scale = gamma * jax.lax.rsqrt(var + BN_EPS)
        y = centered * scale + beta
        # LeakyReLU(0.2)
        return jnp.where(y > 0, y, LRELU_SLOPE * y)

    # Image branch: Linear (bias-free: cancelled by BN) -> BN -> LeakyReLU
    h_img = jnp.dot(
        img_ref[...].astype(jnp.bfloat16), w_img_ref[...],
        preferred_element_type=jnp.float32,
    )
    h_img = bn_lrelu(
        h_img,
        vec_ref[_ROW_G_IMG:_ROW_G_IMG + 1, :],
        vec_ref[_ROW_BT_IMG:_ROW_BT_IMG + 1, :],
    )

    # Mesh branch: Linear (bias-free) -> BN -> LeakyReLU
    h_mesh = jnp.dot(
        mesh_ref[...].astype(jnp.bfloat16), w_mesh_ref[...],
        preferred_element_type=jnp.float32,
    )
    h_mesh = bn_lrelu(
        h_mesh,
        vec_ref[_ROW_G_MESH:_ROW_G_MESH + 1, :],
        vec_ref[_ROW_BT_MESH:_ROW_BT_MESH + 1, :],
    )

    # Combined: cat(img, mesh) @ W_comb  ==  img @ W_a + mesh @ W_b  (bias-free)
    h_c = (
        jnp.dot(h_img.astype(jnp.bfloat16), wc_a_ref[...],
                preferred_element_type=jnp.float32)
        + jnp.dot(h_mesh.astype(jnp.bfloat16), wc_b_ref[...],
                  preferred_element_type=jnp.float32)
    )
    h_c = bn_lrelu(
        h_c,
        vec_ref[_ROW_G_C:_ROW_G_C + 1, :],
        vec_ref[_ROW_BT_C:_ROW_BT_C + 1, :],
    )

    # Output head: Linear (with bias) -> Tanh
    out = (
        jnp.dot(h_c.astype(jnp.bfloat16), w_out_ref[...],
                preferred_element_type=jnp.float32)
        + vec_ref[_ROW_B_OUT:_ROW_B_OUT + 1, :OUTPUT_DIM]
    )
    out_ref[...] = jnp.tanh(out)


def generator_forward(noise, image, mesh_features, params):
    # `noise` is unused in the reference forward pass; kept for signature parity.
    del noise
    batch = image.shape[0]
    args = (
        image, mesh_features,
        params["w_img"], params["w_mesh"],
        params["wc_a"], params["wc_b"], params["w_out"],
        params["vec"],
    )
    vmem_spec = pl.BlockSpec(memory_space=pltpu.MemorySpace.VMEM)
    return pl.pallas_call(
        _generator_kernel,
        out_shape=jax.ShapeDtypeStruct((batch, OUTPUT_DIM), jnp.float32),
        in_specs=[vmem_spec] * len(args),
        out_specs=vmem_spec,
        compiler_params=pltpu.CompilerParams(vmem_limit_bytes=16 * 1024 * 1024),
    )(*args)


def _xavier_uniform(key, fan_in, fan_out):
    bound = jnp.sqrt(6.0 / (fan_in + fan_out))
    # Stored as (in, out) — transposed relative to PyTorch's (out, in).
    return jax.random.uniform(
        key, (fan_in, fan_out), jnp.float32, minval=-bound, maxval=bound
    )


def _linear_bias(key, fan_in, fan_out):
    bound = 1.0 / jnp.sqrt(fan_in)
    return jax.random.uniform(
        key, (fan_out,), jnp.float32, minval=-bound, maxval=bound
    )


def init_params(key):
    keys = jax.random.split(key, 8)

    # Weights: init in f32 (matching PyTorch xavier_uniform_), store as bf16.
    w_img = _xavier_uniform(keys[0], IMAGE_FEAT_DIM, HIDDEN)
    w_mesh = _xavier_uniform(keys[2], MESH_FEAT_DIM, HIDDEN)
    w_comb = _xavier_uniform(keys[4], 2 * HIDDEN, HIDDEN)
    w_out = _xavier_uniform(keys[6], HIDDEN, OUTPUT_DIM)

    # Output bias (the only Linear bias that survives: the three pre-BN biases
    # are exactly cancelled by BatchNorm's mean subtraction).
    b_out = _linear_bias(keys[7], HIDDEN, OUTPUT_DIM)

    # Packed per-feature vectors: (8, HIDDEN) f32.
    vec = jnp.zeros((8, HIDDEN), jnp.float32)
    vec = vec.at[_ROW_G_IMG].set(jnp.ones((HIDDEN,), jnp.float32))    # gamma_img
    vec = vec.at[_ROW_G_MESH].set(jnp.ones((HIDDEN,), jnp.float32))   # gamma_mesh
    vec = vec.at[_ROW_G_C].set(jnp.ones((HIDDEN,), jnp.float32))      # gamma_comb
    # betas (rows 1, 3, 5) stay zero (PyTorch BatchNorm1d default).
    vec = vec.at[_ROW_B_OUT, :OUTPUT_DIM].set(b_out)                  # output bias

    return {
        "w_img": w_img.astype(jnp.bfloat16),
        "w_mesh": w_mesh.astype(jnp.bfloat16),
        "wc_a": w_comb[:HIDDEN, :].astype(jnp.bfloat16),
        "wc_b": w_comb[HIDDEN:, :].astype(jnp.bfloat16),
        "w_out": w_out.astype(jnp.bfloat16),
        "vec": vec,
    }


if __name__ == "__main__":
    key = jax.random.PRNGKey(0)
    k_params, k_noise, k_img, k_mesh = jax.random.split(key, 4)

    params = init_params(k_params)
    noise = jax.random.normal(k_noise, (BATCH, NOISE_DIM), jnp.float32)
    image = jax.random.normal(k_img, (BATCH, IMAGE_FEAT_DIM), jnp.float32)
    mesh = jax.random.normal(k_mesh, (BATCH, MESH_FEAT_DIM), jnp.float32)

    out = generator_forward(noise, image, mesh, params)
    out = jax.block_until_ready(out)

    assert out.shape == (BATCH, OUTPUT_DIM)
    assert bool(jnp.all(jnp.isfinite(out)))
    assert bool(jnp.all(jnp.abs(out) <= 1.0))  # tanh output range
    print("KERNEL_OK")
</pallas_src>

<mosaic_0001>
module attributes {stable_mosaic.version = 11 : i64} {
  func.func @_generator_kernel(%arg0: memref<8x1024xf32, #tpu.memory_space<vmem>>, %arg1: memref<8x256xf32, #tpu.memory_space<vmem>>, %arg2: memref<1024x512xbf16, #tpu.memory_space<vmem>>, %arg3: memref<256x512xbf16, #tpu.memory_space<vmem>>, %arg4: memref<512x512xbf16, #tpu.memory_space<vmem>>, %arg5: memref<512x512xbf16, #tpu.memory_space<vmem>>, %arg6: memref<512x128xbf16, #tpu.memory_space<vmem>>, %arg7: memref<8x512xf32, #tpu.memory_space<vmem>>, %arg8: memref<8x128xf32, #tpu.memory_space<vmem>>) attributes {dimension_semantics = [], scalar_prefetch = 0 : i64, scratch_operands = 0 : i64, tpu.core_type = #tpu.core_type<tc>} {
    %c0 = arith.constant 0 : index
    %c0_0 = arith.constant 0 : index
    %0 = vector.load %arg0[%c0, %c0_0] : memref<8x1024xf32, #tpu.memory_space<vmem>>, vector<8x1024xf32>
    %1 = arith.truncf %0 : vector<8x1024xf32> to vector<8x1024xbf16>
    %c0_1 = arith.constant 0 : index
    %c0_2 = arith.constant 0 : index
    %2 = vector.load %arg2[%c0_1, %c0_2] : memref<1024x512xbf16, #tpu.memory_space<vmem>>, vector<1024x512xbf16>
    %cst = arith.constant dense<0.000000e+00> : vector<8x512xf32>
    %3 = tpu.matmul %1, %2, %cst {dimension_numbers = #tpu.dot_dimension_numbers<[1], [0], [0], [1], [0, 0, 1, 1], [], []>} : vector<8x1024xbf16>, vector<1024x512xbf16>, vector<8x512xf32> -> vector<8x512xf32>
    %c0_3 = arith.constant 0 : index
    %c0_4 = arith.constant 0 : index
    %4 = vector.load %arg7[%c0_3, %c0_4] : memref<8x512xf32, #tpu.memory_space<vmem>>, vector<1x512xf32>
    %c1 = arith.constant 1 : index
    %c0_5 = arith.constant 0 : index
    %5 = vector.load %arg7[%c1, %c0_5] : memref<8x512xf32, #tpu.memory_space<vmem>>, vector<1x512xf32>
    %cst_6 = arith.constant dense<0.000000e+00> : vector<512xf32>
    %6 = vector.multi_reduction <add>, %3, %cst_6 [0] : vector<8x512xf32> to vector<512xf32>
    %7 = vector.shape_cast %6 : vector<512xf32> to vector<1x512xf32>
    %cst_7 = arith.constant 8.000000e+00 : f32
    %8 = vector.broadcast %cst_7 : f32 to vector<1x512xf32>
    %9 = arith.divf %7, %8 : vector<1x512xf32>
    %10 = vector.broadcast %9 : vector<1x512xf32> to vector<8x512xf32>
    %11 = arith.subf %3, %10 : vector<8x512xf32>
    %12 = arith.mulf %11, %11 : vector<8x512xf32>
    %cst_8 = arith.constant dense<0.000000e+00> : vector<512xf32>
    %13 = vector.multi_reduction <add>, %12, %cst_8 [0] : vector<8x512xf32> to vector<512xf32>
    %14 = vector.shape_cast %13 : vector<512xf32> to vector<1x512xf32>
    %cst_9 = arith.constant 8.000000e+00 : f32
    %15 = vector.broadcast %cst_9 : f32 to vector<1x512xf32>
    %16 = arith.divf %14, %15 : vector<1x512xf32>
    %cst_10 = arith.constant 9.99999974E-6 : f32
    %17 = vector.broadcast %cst_10 : f32 to vector<1x512xf32>
    %18 = arith.addf %16, %17 : vector<1x512xf32>
    %19 = math.rsqrt %18 : vector<1x512xf32>
    %20 = arith.mulf %4, %19 : vector<1x512xf32>
    %21 = vector.broadcast %20 : vector<1x512xf32> to vector<8x512xf32>
    %22 = arith.mulf %11, %21 : vector<8x512xf32>
    %23 = vector.broadcast %5 : vector<1x512xf32> to vector<8x512xf32>
    %24 = arith.addf %22, %23 : vector<8x512xf32>
    %cst_11 = arith.constant 0.000000e+00 : f32
    %25 = vector.broadcast %cst_11 : f32 to vector<8x512xf32>
    %26 = arith.cmpf ogt, %24, %25 : vector<8x512xf32>
    %cst_12 = arith.constant 2.000000e-01 : f32
    %27 = vector.broadcast %cst_12 : f32 to vector<8x512xf32>
    %28 = arith.mulf %27, %24 : vector<8x512xf32>
    %29 = arith.select %26, %24, %28 : vector<8x512xi1>, vector<8x512xf32>
    %c0_13 = arith.constant 0 : index
    %c0_14 = arith.constant 0 : index
    %30 = vector.load %arg1[%c0_13, %c0_14] : memref<8x256xf32, #tpu.memory_space<vmem>>, vector<8x256xf32>
    %31 = arith.truncf %30 : vector<8x256xf32> to vector<8x256xbf16>
    %c0_15 = arith.constant 0 : index
    %c0_16 = arith.constant 0 : index
    %32 = vector.load %arg3[%c0_15, %c0_16] : memref<256x512xbf16, #tpu.memory_space<vmem>>, vector<256x512xbf16>
    %cst_17 = arith.constant dense<0.000000e+00> : vector<8x512xf32>
    %33 = tpu.matmul %31, %32, %cst_17 {dimension_numbers = #tpu.dot_dimension_numbers<[1], [0], [0], [1], [0, 0, 1, 1], [], []>} : vector<8x256xbf16>, vector<256x512xbf16>, vector<8x512xf32> -> vector<8x512xf32>
    %c2 = arith.constant 2 : index
    %c0_18 = arith.constant 0 : index
    %34 = vector.load %arg7[%c2, %c0_18] : memref<8x512xf32, #tpu.memory_space<vmem>>, vector<1x512xf32>
    %c3 = arith.constant 3 : index
    %c0_19 = arith.constant 0 : index
    %35 = vector.load %arg7[%c3, %c0_19] : memref<8x512xf32, #tpu.memory_space<vmem>>, vector<1x512xf32>
    %cst_20 = arith.constant dense<0.000000e+00> : vector<512xf32>
    %36 = vector.multi_reduction <add>, %33, %cst_20 [0] : vector<8x512xf32> to vector<512xf32>
    %37 = vector.shape_cast %36 : vector<512xf32> to vector<1x512xf32>
    %cst_21 = arith.constant 8.000000e+00 : f32
    %38 = vector.broadcast %cst_21 : f32 to vector<1x512xf32>
    %39 = arith.divf %37, %38 : vector<1x512xf32>
    %40 = vector.broadcast %39 : vector<1x512xf32> to vector<8x512xf32>
    %41 = arith.subf %33, %40 : vector<8x512xf32>
    %42 = arith.mulf %41, %41 : vector<8x512xf32>
    %cst_22 = arith.constant dense<0.000000e+00> : vector<512xf32>
    %43 = vector.multi_reduction <add>, %42, %cst_22 [0] : vector<8x512xf32> to vector<512xf32>
    %44 = vector.shape_cast %43 : vector<512xf32> to vector<1x512xf32>
    %cst_23 = arith.constant 8.000000e+00 : f32
    %45 = vector.broadcast %cst_23 : f32 to vector<1x512xf32>
    %46 = arith.divf %44, %45 : vector<1x512xf32>
    %cst_24 = arith.constant 9.99999974E-6 : f32
    %47 = vector.broadcast %cst_24 : f32 to vector<1x512xf32>
    %48 = arith.addf %46, %47 : vector<1x512xf32>
    %49 = math.rsqrt %48 : vector<1x512xf32>
    %50 = arith.mulf %34, %49 : vector<1x512xf32>
    %51 = vector.broadcast %50 : vector<1x512xf32> to vector<8x512xf32>
    %52 = arith.mulf %41, %51 : vector<8x512xf32>
    %53 = vector.broadcast %35 : vector<1x512xf32> to vector<8x512xf32>
    %54 = arith.addf %52, %53 : vector<8x512xf32>
    %cst_25 = arith.constant 0.000000e+00 : f32
    %55 = vector.broadcast %cst_25 : f32 to vector<8x512xf32>
    %56 = arith.cmpf ogt, %54, %55 : vector<8x512xf32>
    %cst_26 = arith.constant 2.000000e-01 : f32
    %57 = vector.broadcast %cst_26 : f32 to vector<8x512xf32>
    %58 = arith.mulf %57, %54 : vector<8x512xf32>
    %59 = arith.select %56, %54, %58 : vector<8x512xi1>, vector<8x512xf32>
    %60 = arith.truncf %29 : vector<8x512xf32> to vector<8x512xbf16>
    %c0_27 = arith.constant 0 : index
    %c0_28 = arith.constant 0 : index
    %61 = vector.load %arg4[%c0_27, %c0_28] : memref<512x512xbf16, #tpu.memory_space<vmem>>, vector<512x512xbf16>
    %cst_29 = arith.constant dense<0.000000e+00> : vector<8x512xf32>
    %62 = tpu.matmul %60, %61, %cst_29 {dimension_numbers = #tpu.dot_dimension_numbers<[1], [0], [0], [1], [0, 0, 1, 1], [], []>} : vector<8x512xbf16>, vector<512x512xbf16>, vector<8x512xf32> -> vector<8x512xf32>
    %63 = arith.truncf %59 : vector<8x512xf32> to vector<8x512xbf16>
    %c0_30 = arith.constant 0 : index
    %c0_31 = arith.constant 0 : index
    %64 = vector.load %arg5[%c0_30, %c0_31] : memref<512x512xbf16, #tpu.memory_space<vmem>>, vector<512x512xbf16>
    %cst_32 = arith.constant dense<0.000000e+00> : vector<8x512xf32>
    %65 = tpu.matmul %63, %64, %cst_32 {dimension_numbers = #tpu.dot_dimension_numbers<[1], [0], [0], [1], [0, 0, 1, 1], [], []>} : vector<8x512xbf16>, vector<512x512xbf16>, vector<8x512xf32> -> vector<8x512xf32>
    %66 = arith.addf %62, %65 : vector<8x512xf32>
    %c4 = arith.constant 4 : index
    %c0_33 = arith.constant 0 : index
    %67 = vector.load %arg7[%c4, %c0_33] : memref<8x512xf32, #tpu.memory_space<vmem>>, vector<1x512xf32>
    %c5 = arith.constant 5 : index
    %c0_34 = arith.constant 0 : index
    %68 = vector.load %arg7[%c5, %c0_34] : memref<8x512xf32, #tpu.memory_space<vmem>>, vector<1x512xf32>
    %cst_35 = arith.constant dense<0.000000e+00> : vector<512xf32>
    %69 = vector.multi_reduction <add>, %66, %cst_35 [0] : vector<8x512xf32> to vector<512xf32>
    %70 = vector.shape_cast %69 : vector<512xf32> to vector<1x512xf32>
    %cst_36 = arith.constant 8.000000e+00 : f32
    %71 = vector.broadcast %cst_36 : f32 to vector<1x512xf32>
    %72 = arith.divf %70, %71 : vector<1x512xf32>
    %73 = vector.broadcast %72 : vector<1x512xf32> to vector<8x512xf32>
    %74 = arith.subf %66, %73 : vector<8x512xf32>
    %75 = arith.mulf %74, %74 : vector<8x512xf32>
    %cst_37 = arith.constant dense<0.000000e+00> : vector<512xf32>
    %76 = vector.multi_reduction <add>, %75, %cst_37 [0] : vector<8x512xf32> to vector<512xf32>
    %77 = vector.shape_cast %76 : vector<512xf32> to vector<1x512xf32>
    %cst_38 = arith.constant 8.000000e+00 : f32
    %78 = vector.broadcast %cst_38 : f32 to vector<1x512xf32>
    %79 = arith.divf %77, %78 : vector<1x512xf32>
    %cst_39 = arith.constant 9.99999974E-6 : f32
    %80 = vector.broadcast %cst_39 : f32 to vector<1x512xf32>
    %81 = arith.addf %79, %80 : vector<1x512xf32>
    %82 = math.rsqrt %81 : vector<1x512xf32>
    %83 = arith.mulf %67, %82 : vector<1x512xf32>
    %84 = vector.broadcast %83 : vector<1x512xf32> to vector<8x512xf32>
    %85 = arith.mulf %74, %84 : vector<8x512xf32>
    %86 = vector.broadcast %68 : vector<1x512xf32> to vector<8x512xf32>
    %87 = arith.addf %85, %86 : vector<8x512xf32>
    %cst_40 = arith.constant 0.000000e+00 : f32
    %88 = vector.broadcast %cst_40 : f32 to vector<8x512xf32>
    %89 = arith.cmpf ogt, %87, %88 : vector<8x512xf32>
    %cst_41 = arith.constant 2.000000e-01 : f32
    %90 = vector.broadcast %cst_41 : f32 to vector<8x512xf32>
    %91 = arith.mulf %90, %87 : vector<8x512xf32>
    %92 = arith.select %89, %87, %91 : vector<8x512xi1>, vector<8x512xf32>
    %93 = arith.truncf %92 : vector<8x512xf32> to vector<8x512xbf16>
    %c0_42 = arith.constant 0 : index
    %c0_43 = arith.constant 0 : index
    %94 = vector.load %arg6[%c0_42, %c0_43] : memref<512x128xbf16, #tpu.memory_space<vmem>>, vector<512x128xbf16>
    %cst_44 = arith.constant dense<0.000000e+00> : vector<8x128xf32>
    %95 = tpu.matmul %93, %94, %cst_44 {dimension_numbers = #tpu.dot_dimension_numbers<[1], [0], [0], [1], [0, 0, 1, 1], [], []>} : vector<8x512xbf16>, vector<512x128xbf16>, vector<8x128xf32> -> vector<8x128xf32>
    %c6 = arith.constant 6 : index
    %c0_45 = arith.constant 0 : index
    %96 = vector.load %arg7[%c6, %c0_45] : memref<8x512xf32, #tpu.memory_space<vmem>>, vector<1x128xf32>
    %97 = vector.broadcast %96 : vector<1x128xf32> to vector<8x128xf32>
    %98 = arith.addf %95, %97 : vector<8x128xf32>
    %99 = math.tanh %98 : vector<8x128xf32>
    %c0_46 = arith.constant 0 : index
    %c0_47 = arith.constant 0 : index
    %100 = vector.load %arg8[%c0_46, %c0_47] : memref<8x128xf32, #tpu.memory_space<vmem>>, vector<8x128xf32>
    tpu.vector_store %arg8[%c0_46, %c0_47], %99 {strides = array<i32>} : memref<8x128xf32, #tpu.memory_space<vmem>>, vector<8x128xf32>,
    return
  }
}

</mosaic_0001>

<llo_original>
// kernel: tpu_custom_call.1
$region0: #{tpu_custom_call.1}
  #allocation0 [shape = 'u32[]', space=smem, size = 0x4, offset = 0x4, fixed_abs, tag = 'smem constant byte address 0x4 - core index']
  #allocation1 [shape = 'u32[144,128]{1,0:T(1,128)}', space=vmem, size = 0x12000, scoped, tag = 'internal scratch']
  %s0 = inlined_call_operand.hbm [shape: f32[8,1024], index: 0, kind: input, shape index: {}]
  %s1 = inlined_call_operand.hbm [shape: f32[8,256], index: 1, kind: input, shape index: {}]
  %s2 = inlined_call_operand.hbm [shape: bf16[1024,512], index: 2, kind: input, shape index: {}]
  %s3 = inlined_call_operand.hbm [shape: bf16[256,512], index: 3, kind: input, shape index: {}]
  %s4 = inlined_call_operand.hbm [shape: bf16[512,512], index: 4, kind: input, shape index: {}]
  %s5 = inlined_call_operand.hbm [shape: bf16[512,512], index: 5, kind: input, shape index: {}]
  %s6 = inlined_call_operand.hbm [shape: bf16[512,128], index: 6, kind: input, shape index: {}]
  %s7 = inlined_call_operand.hbm [shape: f32[8,512], index: 7, kind: input, shape index: {}]
  %s8 = inlined_call_operand.hbm [shape: f32[8,128], index: 8, kind: output, shape index: {}]
  %s9 = sld [smem:[#allocation0]]
  $region74: #{tpu_custom_call.1} parent=0
    _
  %s11 = ssub.s32 1, %s9
  %s12 = scalar_select 0, %s11, %s9
  $region1: #{tpu_custom_call.1} parent=0
    #allocation2 [shape = 'u8[32768]{0}', space=vmem, size = 0x8000, scoped, tag = 'input window, operand 0, single buffered']
    #allocation3 [shape = 's32[1]{0}', space=sflag, size = 0x4, scoped, tag = 'scoped memory for tpu_custom_call.1']
    #allocation4 [shape = 's32[1]{0}', space=sflag, size = 0x4, scoped, tag = 'scoped memory for tpu_custom_call.1']
    #allocation5 [shape = 'u8[8192]{0}', space=vmem, size = 0x2000, scoped, tag = 'input window, operand 1, single buffered']
    #allocation6 [shape = 's32[1]{0}', space=sflag, size = 0x4, scoped, tag = 'scoped memory for tpu_custom_call.1']
    #allocation7 [shape = 'u8[1048576]{0}', space=vmem, size = 0x100000, scoped, tag = 'input window, operand 2, single buffered']
    #allocation8 [shape = 'u8[262144]{0}', space=vmem, size = 0x40000, scoped, tag = 'input window, operand 3, single buffered']
    #allocation9 [shape = 's32[1]{0}', space=sflag, size = 0x4, scoped, tag = 'scoped memory for tpu_custom_call.1']
    #allocation10 [shape = 'u8[524288]{0}', space=vmem, size = 0x80000, scoped, tag = 'input window, operand 4, single buffered']
    #allocation11 [shape = 'u8[524288]{0}', space=vmem, size = 0x80000, scoped, tag = 'input window, operand 5, single buffered']
    #allocation12 [shape = 's32[1]{0}', space=sflag, size = 0x4, scoped, tag = 'scoped memory for tpu_custom_call.1']
    #allocation13 [shape = 'u8[131072]{0}', space=vmem, size = 0x20000, scoped, tag = 'input window, operand 6, single buffered']
    #allocation14 [shape = 'u8[16384]{0}', space=vmem, size = 0x4000, scoped, tag = 'input window, operand 7, single buffered']
    #allocation15 [shape = 's32[1]{0}', space=sflag, size = 0x4, scoped, tag = 'scoped memory for tpu_custom_call.1']
    #allocation16 [shape = 'u8[4096]{0}', space=vmem, size = 0x1000, scoped, tag = 'output window, operand 0, single buffered']
    %13 = vsyncpa [#allocation3], 0
    %14 = vsyncpa [#allocation6], 0
    %15 = vsyncpa [#allocation9], 0
    %16 = vsyncpa [#allocation12], 0
    %17 = vsyncpa [#allocation15], 0
    %18 = vsyncpa [#allocation4], 0
    // Predicated region
    $region2: #{tpu_custom_call.1} parent=1 // pred_check
      _
    $region3: #{tpu_custom_call.1} parent=1 // pred_check_branch
      %20 = sbr.rel (0) target = $region5
    $region4: #{tpu_custom_call.1} parent=1 // pred_region
      %s22 = ssub.s32 1024, 1024
      %23 = vsyncadd [#allocation3], %s22
      %s25 = sshll.u32 [#allocation2], 4
      %s26 = int_to_ptr.vmem [resolvable:$true] %s25
      %28 = dma.hbm_to_vmem [thread:$0]  %s0, 1024, %s26, [#allocation3]
    $region5: #{tpu_custom_call.1} parent=1 // pred_fallthru
      _
    // Predicated region
    $region6: #{tpu_custom_call.1} parent=1 // pred_check
      _
    $region7: #{tpu_custom_call.1} parent=1 // pred_check_branch
      %30 = sbr.rel (0) target = $region9
    $region8: #{tpu_custom_call.1} parent=1 // pred_region
      %s32 = ssub.s32 256, 256
      %33 = vsyncadd [#allocation6], %s32
      %s35 = sshll.u32 [#allocation5], 4
      %s36 = int_to_ptr.vmem [resolvable:$true] %s35
      %38 = dma.hbm_to_vmem [thread:$0]  %s1, 256, %s36, [#allocation6]
    $region9: #{tpu_custom_call.1} parent=1 // pred_fallthru
      _
    // Predicated region
    $region10: #{tpu_custom_call.1} parent=1 // pred_check
      _
    $region11: #{tpu_custom_call.1} parent=1 // pred_check_branch
      %40 = sbr.rel (0) target = $region13
    $region12: #{tpu_custom_call.1} parent=1 // pred_region
      %s42 = ssub.s32 32768, 32768
      %43 = vsyncadd [#allocation6], %s42
      %s44 = sshll.u32 [#allocation7], 4
      %s45 = int_to_ptr.vmem [resolvable:$true] %s44
      %50 = dma.hbm_to_vmem [thread:$0]  %s2, 32768, %s45, [#allocation6], 256, 256, 16
    $region13: #{tpu_custom_call.1} parent=1 // pred_fallthru
      _
    // Predicated region
    $region14: #{tpu_custom_call.1} parent=1 // pred_check
      _
    $region15: #{tpu_custom_call.1} parent=1 // pred_check_branch
      %52 = sbr.rel (0) target = $region17
    $region16: #{tpu_custom_call.1} parent=1 // pred_region
      %s54 = ssub.s32 8192, 8192
      %55 = vsyncadd [#allocation9], %s54
      %s56 = sshll.u32 [#allocation8], 4
      %s57 = int_to_ptr.vmem [resolvable:$true] %s56
      %62 = dma.hbm_to_vmem [thread:$0]  %s3, 8192, %s57, [#allocation9], 256, 256, 16
    $region17: #{tpu_custom_call.1} parent=1 // pred_fallthru
      _
    // Predicated region
    $region18: #{tpu_custom_call.1} parent=1 // pred_check
      _
    $region19: #{tpu_custom_call.1} parent=1 // pred_check_branch
      %64 = sbr.rel (0) target = $region21
    $region20: #{tpu_custom_call.1} parent=1 // pred_region
      %s66 = ssub.s32 16384, 16384
      %67 = vsyncadd [#allocation9], %s66
      %s68 = sshll.u32 [#allocation10], 4
      %s69 = int_to_ptr.vmem [resolvable:$true] %s68
      %74 = dma.hbm_to_vmem [thread:$0]  %s4, 16384, %s69, [#allocation9], 256, 256, 16
    $region21: #{tpu_custom_call.1} parent=1 // pred_fallthru
      _
    // Predicated region
    $region22: #{tpu_custom_call.1} parent=1 // pred_check
      _
    $region23: #{tpu_custom_call.1} parent=1 // pred_check_branch
      %76 = sbr.rel (0) target = $region25
    $region24: #{tpu_custom_call.1} parent=1 // pred_region
      %s78 = ssub.s32 16384, 16384
      %79 = vsyncadd [#allocation12], %s78
      %s80 = sshll.u32 [#allocation11], 4
      %s81 = int_to_ptr.vmem [resolvable:$true] %s80
      %86 = dma.hbm_to_vmem [thread:$0]  %s5, 16384, %s81, [#allocation12], 256, 256, 16
    $region25: #{tpu_custom_call.1} parent=1 // pred_fallthru
      _
    // Predicated region
    $region26: #{tpu_custom_call.1} parent=1 // pred_check
      _
    $region27: #{tpu_custom_call.1} parent=1 // pred_check_branch
      %88 = sbr.rel (0) target = $region29
    $region28: #{tpu_custom_call.1} parent=1 // pred_region
      %s90 = ssub.s32 4096, 4096
      %91 = vsyncadd [#allocation12], %s90
      %s92 = sshll.u32 [#allocation13], 4
      %s93 = int_to_ptr.vmem [resolvable:$true] %s92
      %98 = dma.hbm_to_vmem [thread:$0]  %s6, 4096, %s93, [#allocation12], 64, 64, 4
    $region29: #{tpu_custom_call.1} parent=1 // pred_fallthru
      _
    // Predicated region
    $region30: #{tpu_custom_call.1} parent=1 // pred_check
      _
    $region31: #{tpu_custom_call.1} parent=1 // pred_check_branch
      %100 = sbr.rel (0) target = $region33
    $region32: #{tpu_custom_call.1} parent=1 // pred_region
      %s102 = ssub.s32 512, 512
      %103 = vsyncadd [#allocation15], %s102
      %s105 = sshll.u32 [#allocation14], 4
      %s106 = int_to_ptr.vmem [resolvable:$true] %s105
      %108 = dma.hbm_to_vmem [thread:$0]  %s7, 512, %s106, [#allocation15]
    $region33: #{tpu_custom_call.1} parent=1 // pred_fallthru
      _
    // Predicated region
    $region34: #{tpu_custom_call.1} parent=1 // pred_check
      _
    $region35: #{tpu_custom_call.1} parent=1 // pred_check_branch
      %110 = sbr.rel (0) target = $region37
    $region36: #{tpu_custom_call.1} parent=1 // pred_region
      %111 = dma.done [#allocation3], 1024
    $region37: #{tpu_custom_call.1} parent=1 // pred_fallthru
      _
    // Predicated region
    $region38: #{tpu_custom_call.1} parent=1 // pred_check
      _
    $region39: #{tpu_custom_call.1} parent=1 // pred_check_branch
      %113 = sbr.rel (0) target = $region41
    $region40: #{tpu_custom_call.1} parent=1 // pred_region
      %114 = dma.done [#allocation6], 256
    $region41: #{tpu_custom_call.1} parent=1 // pred_fallthru
      _
    // Predicated region
    $region42: #{tpu_custom_call.1} parent=1 // pred_check
      _
    $region43: #{tpu_custom_call.1} parent=1 // pred_check_branch
      %116 = sbr.rel (0) target = $region45
    $region44: #{tpu_custom_call.1} parent=1 // pred_region
      %117 = dma.done [#allocation6], 32768
    $region45: #{tpu_custom_call.1} parent=1 // pred_fallthru
      _
    // Predicated region
    $region46: #{tpu_custom_call.1} parent=1 // pred_check
      _
    $region47: #{tpu_custom_call.1} parent=1 // pred_check_branch
      %119 = sbr.rel (0) target = $region49
    $region48: #{tpu_custom_call.1} parent=1 // pred_region
      %120 = dma.done [#allocation9], 8192
    $region49: #{tpu_custom_call.1} parent=1 // pred_fallthru
      _
    // Predicated region
    $region50: #{tpu_custom_call.1} parent=1 // pred_check
      _
    $region51: #{tpu_custom_call.1} parent=1 // pred_check_branch
      %122 = sbr.rel (0) target = $region53
    $region52: #{tpu_custom_call.1} parent=1 // pred_region
      %123 = dma.done [#allocation9], 16384
    $region53: #{tpu_custom_call.1} parent=1 // pred_fallthru
      _
    // Predicated region
    $region54: #{tpu_custom_call.1} parent=1 // pred_check
      _
    $region55: #{tpu_custom_call.1} parent=1 // pred_check_branch
      %125 = sbr.rel (0) target = $region57
    $region56: #{tpu_custom_call.1} parent=1 // pred_region
      %126 = dma.done [#allocation12], 16384
    $region57: #{tpu_custom_call.1} parent=1 // pred_fallthru
      _
    // Predicated region
    $region58: #{tpu_custom_call.1} parent=1 // pred_check
      _
    $region59: #{tpu_custom_call.1} parent=1 // pred_check_branch
      %128 = sbr.rel (0) target = $region61
    $region60: #{tpu_custom_call.1} parent=1 // pred_region
      %129 = dma.done [#allocation12], 4096
    $region61: #{tpu_custom_call.1} parent=1 // pred_fallthru
      _
    // Predicated region
    $region62: #{tpu_custom_call.1} parent=1 // pred_check
      _
    $region63: #{tpu_custom_call.1} parent=1 // pred_check_branch
      %131 = sbr.rel (0) target = $region65
    $region64: #{tpu_custom_call.1} parent=1 // pred_region
      %132 = dma.done [#allocation15], 512
    $region65: #{tpu_custom_call.1} parent=1 // pred_fallthru
      _
    %v134 = vld [vmem:[#allocation2] sm:$0xff]
    %v135 = vld [vmem:[#allocation2 + $0x8] sm:$0xff]
    %v136 = vld [vmem:[#allocation2 + $0x10] sm:$0xff]
    %v137 = vld [vmem:[#allocation2 + $0x18] sm:$0xff]
    %v138 = vld [vmem:[#allocation2 + $0x20] sm:$0xff]
    %v139 = vld [vmem:[#allocation2 + $0x28] sm:$0xff]
    %v140 = vld [vmem:[#allocation2 + $0x30] sm:$0xff]
    %v141 = vld [vmem:[#allocation2 + $0x38] sm:$0xff]
    %v142 = vpack.c.bf16 %v134, %v134
    %v143 = vpack.c.bf16 %v135, %v135
    %v144 = vpack.c.bf16 %v136, %v136
    %v145 = vpack.c.bf16 %v137, %v137
    %v146 = vpack.c.bf16 %v138, %v138
    %v147 = vpack.c.bf16 %v139, %v139
    %v148 = vpack.c.bf16 %v140, %v140
    %v149 = vpack.c.bf16 %v141, %v141
    %v150 = vld [vmem:[#allocation7] sm:$0xff]
    %v151 = vld [vmem:[#allocation7 + $0x8] sm:$0xff]
    %v152 = vld [vmem:[#allocation7 + $0x10] sm:$0xff]
    %v153 = vld [vmem:[#allocation7 + $0x18] sm:$0xff]
    %v154 = vld [vmem:[#allocation7 + $0x20] sm:$0xff]
    %v155 = vld [vmem:[#allocation7 + $0x28] sm:$0xff]
    %v156 = vld [vmem:[#allocation7 + $0x30] sm:$0xff]
    %v157 = vld [vmem:[#allocation7 + $0x38] sm:$0xff]
    %v158 = vld [vmem:[#allocation7 + $0x40] sm:$0xff]
    %v159 = vld [vmem:[#allocation7 + $0x48] sm:$0xff]
    %v160 = vld [vmem:[#allocation7 + $0x50] sm:$0xff]
    %v161 = vld [vmem:[#allocation7 + $0x58] sm:$0xff]
    %v162 = vld [vmem:[#allocation7 + $0x60] sm:$0xff]
    %v163 = vld [vmem:[#allocation7 + $0x68] sm:$0xff]
    %v164 = vld [vmem:[#allocation7 + $0x70] sm:$0xff]
    %v165 = vld [vmem:[#allocation7 + $0x78] sm:$0xff]
    %v166 = vld [vmem:[#allocation7 + $0x80] sm:$0xff]
    %v167 = vld [vmem:[#allocation7 + $0x88] sm:$0xff]
    %v168 = vld [vmem:[#allocation7 + $0x90] sm:$0xff]
    %v169 = vld [vmem:[#allocation7 + $0x98] sm:$0xff]
    %v170 = vld [vmem:[#allocation7 + $0xa0] sm:$0xff]
    %v171 = vld [vmem:[#allocation7 + $0xa8] sm:$0xff]
    %v172 = vld [vmem:[#allocation7 + $0xb0] sm:$0xff]
    %v173 = vld [vmem:[#allocation7 + $0xb8] sm:$0xff]
    %v174 = vld [vmem:[#allocation7 + $0xc0] sm:$0xff]
    %v175 = vld [vmem:[#allocation7 + $0xc8] sm:$0xff]
    %v176 = vld [vmem:[#allocation7 + $0xd0] sm:$0xff]
    %v177 = vld [vmem:[#allocation7 + $0xd8] sm:$0xff]
    %v178 = vld [vmem:[#allocation7 + $0xe0] sm:$0xff]
    %v179 = vld [vmem:[#allocation7 + $0xe8] sm:$0xff]
    %v180 = vld [vmem:[#allocation7 + $0xf0] sm:$0xff]
    %v181 = vld [vmem:[#allocation7 + $0xf8] sm:$0xff]
    %v182 = vld [vmem:[#allocation7 + $0x100] sm:$0xff]
    %v183 = vld [vmem:[#allocation7 + $0x108] sm:$0xff]
    %v184 = vld [vmem:[#allocation7 + $0x110] sm:$0xff]
    %v185 = vld [vmem:[#allocation7 + $0x118] sm:$0xff]
    %v186 = vld [vmem:[#allocation7 + $0x120] sm:$0xff]
    %v187 = vld [vmem:[#allocation7 + $0x128] sm:$0xff]
    %v188 = vld [vmem:[#allocation7 + $0x130] sm:$0xff]
    %v189 = vld [vmem:[#allocation7 + $0x138] sm:$0xff]
    %v190 = vld [vmem:[#allocation7 + $0x140] sm:$0xff]
    %v191 = vld [vmem:[#allocation7 + $0x148] sm:$0xff]
    %v192 = vld [vmem:[#allocation7 + $0x150] sm:$0xff]
    %v193 = vld [vmem:[#allocation7 + $0x158] sm:$0xff]
    %v194 = vld [vmem:[#allocation7 + $0x160] sm:$0xff]
    %v195 = vld [vmem:[#allocation7 + $0x168] sm:$0xff]
    %v196 = vld [vmem:[#allocation7 + $0x170] sm:$0xff]
    %v197 = vld [vmem:[#allocation7 + $0x178] sm:$0xff]
    %v198 = vld [vmem:[#allocation7 + $0x180] sm:$0xff]
    %v199 = vld [vmem:[#allocation7 + $0x188] sm:$0xff]
    %v200 = vld [vmem:[#allocation7 + $0x190] sm:$0xff]
    %v201 = vld [vmem:[#allocation7 + $0x198] sm:$0xff]
    %v202 = vld [vmem:[#allocation7 + $0x1a0] sm:$0xff]
    %v203 = vld [vmem:[#allocation7 + $0x1a8] sm:$0xff]
    %v204 = vld [vmem:[#allocation7 + $0x1b0] sm:$0xff]
    %v205 = vld [vmem:[#allocation7 + $0x1b8] sm:$0xff]
    %v206 = vld [vmem:[#allocation7 + $0x1c0] sm:$0xff]
    %v207 = vld [vmem:[#allocation7 + $0x1c8] sm:$0xff]
    %v208 = vld [vmem:[#allocation7 + $0x1d0] sm:$0xff]
    %v209 = vld [vmem:[#allocation7 + $0x1d8] sm:$0xff]
    %v210 = vld [vmem:[#allocation7 + $0x1e0] sm:$0xff]
    %v211 = vld [vmem:[#allocation7 + $0x1e8] sm:$0xff]
    %v212 = vld [vmem:[#allocation7 + $0x1f0] sm:$0xff]
    %v213 = vld [vmem:[#allocation7 + $0x1f8] sm:$0xff]
    %v214 = vld [vmem:[#allocation7 + $0x200] sm:$0xff]
    %v215 = vld [vmem:[#allocation7 + $0x208] sm:$0xff]
    %v216 = vld [vmem:[#allocation7 + $0x210] sm:$0xff]
    %v217 = vld [vmem:[#allocation7 + $0x218] sm:$0xff]
    %v218 = vld [vmem:[#allocation7 + $0x220] sm:$0xff]
    %v219 = vld [vmem:[#allocation7 + $0x228] sm:$0xff]
    %v220 = vld [vmem:[#allocation7 + $0x230] sm:$0xff]
    %v221 = vld [vmem:[#allocation7 + $0x238] sm:$0xff]
    %v222 = vld [vmem:[#allocation7 + $0x240] sm:$0xff]
    %v223 = vld [vmem:[#allocation7 + $0x248] sm:$0xff]
    %v224 = vld [vmem:[#allocation7 + $0x250] sm:$0xff]
    %v225 = vld [vmem:[#allocation7 + $0x258] sm:$0xff]
    %v226 = vld [vmem:[#allocation7 + $0x260] sm:$0xff]
    %v227 = vld [vmem:[#allocation7 + $0x268] sm:$0xff]
    %v228 = vld [vmem:[#allocation7 + $0x270] sm:$0xff]
    %v229 = vld [vmem:[#allocation7 + $0x278] sm:$0xff]
    %v230 = vld [vmem:[#allocation7 + $0x280] sm:$0xff]
    %v231 = vld [vmem:[#allocation7 + $0x288] sm:$0xff]
    %v232 = vld [vmem:[#allocation7 + $0x290] sm:$0xff]
    %v233 = vld [vmem:[#allocation7 + $0x298] sm:$0xff]
    %v234 = vld [vmem:[#allocation7 + $0x2a0] sm:$0xff]
    %v235 = vld [vmem:[#allocation7 + $0x2a8] sm:$0xff]
    %v236 = vld [vmem:[#allocation7 + $0x2b0] sm:$0xff]
    %v237 = vld [vmem:[#allocation7 + $0x2b8] sm:$0xff]
    %v238 = vld [vmem:[#allocation7 + $0x2c0] sm:$0xff]
    %v239 = vld [vmem:[#allocation7 + $0x2c8] sm:$0xff]
    %v240 = vld [vmem:[#allocation7 + $0x2d0] sm:$0xff]
    %v241 = vld [vmem:[#allocation7 + $0x2d8] sm:$0xff]
    %v242 = vld [vmem:[#allocation7 + $0x2e0] sm:$0xff]
    %v243 = vld [vmem:[#allocation7 + $0x2e8] sm:$0xff]
    %v244 = vld [vmem:[#allocation7 + $0x2f0] sm:$0xff]
    %v245 = vld [vmem:[#allocation7 + $0x2f8] sm:$0xff]
    %v246 = vld [vmem:[#allocation7 + $0x300] sm:$0xff]
    %v247 = vld [vmem:[#allocation7 + $0x308] sm:$0xff]
    %v248 = vld [vmem:[#allocation7 + $0x310] sm:$0xff]
    %v249 = vld [vmem:[#allocation7 + $0x318] sm:$0xff]
    %v250 = vld [vmem:[#allocation7 + $0x320] sm:$0xff]
    %v251 = vld [vmem:[#allocation7 + $0x328] sm:$0xff]
    %v252 = vld [vmem:[#allocation7 + $0x330] sm:$0xff]
    %v253 = vld [vmem:[#allocation7 + $0x338] sm:$0xff]
    %v254 = vld [vmem:[#allocation7 + $0x340] sm:$0xff]
    %v255 = vld [vmem:[#allocation7 + $0x348] sm:$0xff]
    %v256 = vld [vmem:[#allocation7 + $0x350] sm:$0xff]
    %v257 = vld [vmem:[#allocation7 + $0x358] sm:$0xff]
    %v258 = vld [vmem:[#allocation7 + $0x360] sm:$0xff]
    %v259 = vld [vmem:[#allocation7 + $0x368] sm:$0xff]
    %v260 = vld [vmem:[#allocation7 + $0x370] sm:$0xff]
    %v261 = vld [vmem:[#allocation7 + $0x378] sm:$0xff]
    %v262 = vld [vmem:[#allocation7 + $0x380] sm:$0xff]
    %v263 = vld [vmem:[#allocation7 + $0x388] sm:$0xff]
    %v264 = vld [vmem:[#allocation7 + $0x390] sm:$0xff]
    %v265 = vld [vmem:[#allocation7 + $0x398] sm:$0xff]
    %v266 = vld [vmem:[#allocation7 + $0x3a0] sm:$0xff]
    %v267 = vld [vmem:[#allocation7 + $0x3a8] sm:$0xff]
    %v268 = vld [vmem:[#allocation7 + $0x3b0] sm:$0xff]
    %v269 = vld [vmem:[#allocation7 + $0x3b8] sm:$0xff]
    %v270 = vld [vmem:[#allocation7 + $0x3c0] sm:$0xff]
    %v271 = vld [vmem:[#allocation7 + $0x3c8] sm:$0xff]
    %v272 = vld [vmem:[#allocation7 + $0x3d0] sm:$0xff]
    %v273 = vld [vmem:[#allocation7 + $0x3d8] sm:$0xff]
    %v274 = vld [vmem:[#allocation7 + $0x3e0] sm:$0xff]
    %v275 = vld [vmem:[#allocation7 + $0x3e8] sm:$0xff]
    %v276 = vld [vmem:[#allocation7 + $0x3f0] sm:$0xff]
    %v277 = vld [vmem:[#allocation7 + $0x3f8] sm:$0xff]
    %v278 = vld [vmem:[#allocation7 + $0x400] sm:$0xff]
    %v279 = vld [vmem:[#allocation7 + $0x408] sm:$0xff]
    %v280 = vld [vmem:[#allocation7 + $0x410] sm:$0xff]
    %v281 = vld [vmem:[#allocation7 + $0x418] sm:$0xff]
    %v282 = vld [vmem:[#allocation7 + $0x420] sm:$0xff]
    %v283 = vld [vmem:[#allocation7 + $0x428] sm:$0xff]
    %v284 = vld [vmem:[#allocation7 + $0x430] sm:$0xff]
    %v285 = vld [vmem:[#allocation7 + $0x438] sm:$0xff]
    %v286 = vld [vmem:[#allocation7 + $0x440] sm:$0xff]
    %v287 = vld [vmem:[#allocation7 + $0x448] sm:$0xff]
    %v288 = vld [vmem:[#allocation7 + $0x450] sm:$0xff]
    %v289 = vld [vmem:[#allocation7 + $0x458] sm:$0xff]
    %v290 = vld [vmem:[#allocation7 + $0x460] sm:$0xff]
    %v291 = vld [vmem:[#allocation7 + $0x468] sm:$0xff]
    %v292 = vld [vmem:[#allocation7 + $0x470] sm:$0xff]
    %v293 = vld [vmem:[#allocation7 + $0x478] sm:$0xff]
    %v294 = vld [vmem:[#allocation7 + $0x480] sm:$0xff]
    %v295 = vld [vmem:[#allocation7 + $0x488] sm:$0xff]
    %v296 = vld [vmem:[#allocation7 + $0x490] sm:$0xff]
    %v297 = vld [vmem:[#allocation7 + $0x498] sm:$0xff]
    %v298 = vld [vmem:[#allocation7 + $0x4a0] sm:$0xff]
    %v299 = vld [vmem:[#allocation7 + $0x4a8] sm:$0xff]
    %v300 = vld [vmem:[#allocation7 + $0x4b0] sm:$0xff]
    %v301 = vld [vmem:[#allocation7 + $0x4b8] sm:$0xff]
    %v302 = vld [vmem:[#allocation7 + $0x4c0] sm:$0xff]
    %v303 = vld [vmem:[#allocation7 + $0x4c8] sm:$0xff]
    %v304 = vld [vmem:[#allocation7 + $0x4d0] sm:$0xff]
    %v305 = vld [vmem:[#allocation7 + $0x4d8] sm:$0xff]
    %v306 = vld [vmem:[#allocation7 + $0x4e0] sm:$0xff]
    %v307 = vld [vmem:[#allocation7 + $0x4e8] sm:$0xff]
    %v308 = vld [vmem:[#allocation7 + $0x4f0] sm:$0xff]
    %v309 = vld [vmem:[#allocation7 + $0x4f8] sm:$0xff]
    %v310 = vld [vmem:[#allocation7 + $0x500] sm:$0xff]
    %v311 = vld [vmem:[#allocation7 + $0x508] sm:$0xff]
    %v312 = vld [vmem:[#allocation7 + $0x510] sm:$0xff]
    %v313 = vld [vmem:[#allocation7 + $0x518] sm:$0xff]
    %v314 = vld [vmem:[#allocation7 + $0x520] sm:$0xff]
    %v315 = vld [vmem:[#allocation7 + $0x528] sm:$0xff]
    %v316 = vld [vmem:[#allocation7 + $0x530] sm:$0xff]
    %v317 = vld [vmem:[#allocation7 + $0x538] sm:$0xff]
    %v318 = vld [vmem:[#allocation7 + $0x540] sm:$0xff]
    %v319 = vld [vmem:[#allocation7 + $0x548] sm:$0xff]
    %v320 = vld [vmem:[#allocation7 + $0x550] sm:$0xff]
    %v321 = vld [vmem:[#allocation7 + $0x558] sm:$0xff]
    %v322 = vld [vmem:[#allocation7 + $0x560] sm:$0xff]
    %v323 = vld [vmem:[#allocation7 + $0x568] sm:$0xff]
    %v324 = vld [vmem:[#allocation7 + $0x570] sm:$0xff]
    %v325 = vld [vmem:[#allocation7 + $0x578] sm:$0xff]
    %v326 = vld [vmem:[#allocation7 + $0x580] sm:$0xff]
    %v327 = vld [vmem:[#allocation7 + $0x588] sm:$0xff]
    %v328 = vld [vmem:[#allocation7 + $0x590] sm:$0xff]
    %v329 = vld [vmem:[#allocation7 + $0x598] sm:$0xff]
    %v330 = vld [vmem:[#allocation7 + $0x5a0] sm:$0xff]
    %v331 = vld [vmem:[#allocation7 + $0x5a8] sm:$0xff]
    %v332 = vld [vmem:[#allocation7 + $0x5b0] sm:$0xff]
    %v333 = vld [vmem:[#allocation7 + $0x5b8] sm:$0xff]
    %v334 = vld [vmem:[#allocation7 + $0x5c0] sm:$0xff]
    %v335 = vld [vmem:[#allocation7 + $0x5c8] sm:$0xff]
    %v336 = vld [vmem:[#allocation7 + $0x5d0] sm:$0xff]
    %v337 = vld [vmem:[#allocation7 + $0x5d8] sm:$0xff]
    %v338 = vld [vmem:[#allocation7 + $0x5e0] sm:$0xff]
    %v339 = vld [vmem:[#allocation7 + $0x5e8] sm:$0xff]
    %v340 = vld [vmem:[#allocation7 + $0x5f0] sm:$0xff]
    %v341 = vld [vmem:[#allocation7 + $0x5f8] sm:$0xff]
    %v342 = vld [vmem:[#allocation7 + $0x600] sm:$0xff]
    %v343 = vld [vmem:[#allocation7 + $0x608] sm:$0xff]
    %v344 = vld [vmem:[#allocation7 + $0x610] sm:$0xff]
    %v345 = vld [vmem:[#allocation7 + $0x618] sm:$0xff]
    %v346 = vld [vmem:[#allocation7 + $0x620] sm:$0xff]
    %v347 = vld [vmem:[#allocation7 + $0x628] sm:$0xff]
    %v348 = vld [vmem:[#allocation7 + $0x630] sm:$0xff]
    %v349 = vld [vmem:[#allocation7 + $0x638] sm:$0xff]
    %v350 = vld [vmem:[#allocation7 + $0x640] sm:$0xff]
    %v351 = vld [vmem:[#allocation7 + $0x648] sm:$0xff]
    %v352 = vld [vmem:[#allocation7 + $0x650] sm:$0xff]
    %v353 = vld [vmem:[#allocation7 + $0x658] sm:$0xff]
    %v354 = vld [vmem:[#allocation7 + $0x660] sm:$0xff]
    %v355 = vld [vmem:[#allocation7 + $0x668] sm:$0xff]
    %v356 = vld [vmem:[#allocation7 + $0x670] sm:$0xff]
    %v357 = vld [vmem:[#allocation7 + $0x678] sm:$0xff]
    %v358 = vld [vmem:[#allocation7 + $0x680] sm:$0xff]
    %v359 = vld [vmem:[#allocation7 + $0x688] sm:$0xff]
    %v360 = vld [vmem:[#allocation7 + $0x690] sm:$0xff]
    %v361 = vld [vmem:[#allocation7 + $0x698] sm:$0xff]
    %v362 = vld [vmem:[#allocation7 + $0x6a0] sm:$0xff]
    %v363 = vld [vmem:[#allocation7 + $0x6a8] sm:$0xff]
    %v364 = vld [vmem:[#allocation7 + $0x6b0] sm:$0xff]
    %v365 = vld [vmem:[#allocation7 + $0x6b8] sm:$0xff]
    %v366 = vld [vmem:[#allocation7 + $0x6c0] sm:$0xff]
    %v367 = vld [vmem:[#allocation7 + $0x6c8] sm:$0xff]
    %v368 = vld [vmem:[#allocation7 + $0x6d0] sm:$0xff]
    %v369 = vld [vmem:[#allocation7 + $0x6d8] sm:$0xff]
    %v370 = vld [vmem:[#allocation7 + $0x6e0] sm:$0xff]
    %v371 = vld [vmem:[#allocation7 + $0x6e8] sm:$0xff]
    %v372 = vld [vmem:[#allocation7 + $0x6f0] sm:$0xff]
    %v373 = vld [vmem:[#allocation7 + $0x6f8] sm:$0xff]
    %v374 = vld [vmem:[#allocation7 + $0x700] sm:$0xff]
    %v375 = vld [vmem:[#allocation7 + $0x708] sm:$0xff]
    %v376 = vld [vmem:[#allocation7 + $0x710] sm:$0xff]
    %v377 = vld [vmem:[#allocation7 + $0x718] sm:$0xff]
    %v378 = vld [vmem:[#allocation7 + $0x720] sm:$0xff]
    %v379 = vld [vmem:[#allocation7 + $0x728] sm:$0xff]
    %v380 = vld [vmem:[#allocation7 + $0x730] sm:$0xff]
    %v381 = vld [vmem:[#allocation7 + $0x738] sm:$0xff]
    %v382 = vld [vmem:[#allocation7 + $0x740] sm:$0xff]
    %v383 = vld [vmem:[#allocation7 + $0x748] sm:$0xff]
    %v384 = vld [vmem:[#allocation7 + $0x750] sm:$0xff]
    %v385 = vld [vmem:[#allocation7 + $0x758] sm:$0xff]
    %v386 = vld [vmem:[#allocation7 + $0x760] sm:$0xff]
    %v387 = vld [vmem:[#allocation7 + $0x768] sm:$0xff]
    %v388 = vld [vmem:[#allocation7 + $0x770] sm:$0xff]
    %v389 = vld [vmem:[#allocation7 + $0x778] sm:$0xff]
    %v390 = vld [vmem:[#allocation7 + $0x780] sm:$0xff]
    %v391 = vld [vmem:[#allocation7 + $0x788] sm:$0xff]
    %v392 = vld [vmem:[#allocation7 + $0x790] sm:$0xff]
    %v393 = vld [vmem:[#allocation7 + $0x798] sm:$0xff]
    %v394 = vld [vmem:[#allocation7 + $0x7a0] sm:$0xff]
    %v395 = vld [vmem:[#allocation7 + $0x7a8] sm:$0xff]
    %v396 = vld [vmem:[#allocation7 + $0x7b0] sm:$0xff]
    %v397 = vld [vmem:[#allocation7 + $0x7b8] sm:$0xff]
    %v398 = vld [vmem:[#allocation7 + $0x7c0] sm:$0xff]
    %v399 = vld [vmem:[#allocation7 + $0x7c8] sm:$0xff]
    %v400 = vld [vmem:[#allocation7 + $0x7d0] sm:$0xff]
    %v401 = vld [vmem:[#allocation7 + $0x7d8] sm:$0xff]
    %v402 = vld [vmem:[#allocation7 + $0x7e0] sm:$0xff]
    %v403 = vld [vmem:[#allocation7 + $0x7e8] sm:$0xff]
    %v404 = vld [vmem:[#allocation7 + $0x7f0] sm:$0xff]
    %v405 = vld [vmem:[#allocation7 + $0x7f8] sm:$0xff]
    %v662 = vunpack.c.l.b16 %v150
    %v663 = vunpack.c.h.b16 %v150
    %v664 = vunpack.c.l.b16 %v151
    %v665 = vunpack.c.h.b16 %v151
    %v666 = vunpack.c.l.b16 %v152
    %v667 = vunpack.c.h.b16 %v152
    %v668 = vunpack.c.l.b16 %v153
    %v669 = vunpack.c.h.b16 %v153
    %v670 = vunpack.c.l.b16 %v154
    %v671 = vunpack.c.h.b16 %v154
    %v672 = vunpack.c.l.b16 %v155
    %v673 = vunpack.c.h.b16 %v155
    %v674 = vunpack.c.l.b16 %v156
    %v675 = vunpack.c.h.b16 %v156
    %v676 = vunpack.c.l.b16 %v157
    %v677 = vunpack.c.h.b16 %v157
    %v678 = vunpack.c.l.b16 %v158
    %v679 = vunpack.c.h.b16 %v158
    %v680 = vunpack.c.l.b16 %v159
    %v681 = vunpack.c.h.b16 %v159
    %v682 = vunpack.c.l.b16 %v160
    %v683 = vunpack.c.h.b16 %v160
    %v684 = vunpack.c.l.b16 %v161
    %v685 = vunpack.c.h.b16 %v161
    %v686 = vunpack.c.l.b16 %v162
    %v687 = vunpack.c.h.b16 %v162
    %v688 = vunpack.c.l.b16 %v163
    %v689 = vunpack.c.h.b16 %v163
    %v690 = vunpack.c.l.b16 %v164
    %v691 = vunpack.c.h.b16 %v164
    %v692 = vunpack.c.l.b16 %v165
    %v693 = vunpack.c.h.b16 %v165
    %v694 = vunpack.c.l.b16 %v166
    %v695 = vunpack.c.h.b16 %v166
    %v696 = vunpack.c.l.b16 %v167
    %v697 = vunpack.c.h.b16 %v167
    %v698 = vunpack.c.l.b16 %v168
    %v699 = vunpack.c.h.b16 %v168
    %v700 = vunpack.c.l.b16 %v169
    %v701 = vunpack.c.h.b16 %v169
    %v702 = vunpack.c.l.b16 %v170
    %v703 = vunpack.c.h.b16 %v170
    %v704 = vunpack.c.l.b16 %v171
    %v705 = vunpack.c.h.b16 %v171
    %v706 = vunpack.c.l.b16 %v172
    %v707 = vunpack.c.h.b16 %v172
    %v708 = vunpack.c.l.b16 %v173
    %v709 = vunpack.c.h.b16 %v173
    %v710 = vunpack.c.l.b16 %v174
    %v711 = vunpack.c.h.b16 %v174
    %v712 = vunpack.c.l.b16 %v175
    %v713 = vunpack.c.h.b16 %v175
    %v714 = vunpack.c.l.b16 %v176
    %v715 = vunpack.c.h.b16 %v176
    %v716 = vunpack.c.l.b16 %v177
    %v717 = vunpack.c.h.b16 %v177
    %v718 = vunpack.c.l.b16 %v178
    %v719 = vunpack.c.h.b16 %v178
    %v720 = vunpack.c.l.b16 %v179
    %v721 = vunpack.c.h.b16 %v179
    %v722 = vunpack.c.l.b16 %v180
    %v723 = vunpack.c.h.b16 %v180
    %v724 = vunpack.c.l.b16 %v181
    %v725 = vunpack.c.h.b16 %v181
    %v726 = vunpack.c.l.b16 %v182
    %v727 = vunpack.c.h.b16 %v182
    %v728 = vunpack.c.l.b16 %v183
    %v729 = vunpack.c.h.b16 %v183
    %v730 = vunpack.c.l.b16 %v184
    %v731 = vunpack.c.h.b16 %v184
    %v732 = vunpack.c.l.b16 %v185
    %v733 = vunpack.c.h.b16 %v185
    %v734 = vunpack.c.l.b16 %v186
    %v735 = vunpack.c.h.b16 %v186
    %v736 = vunpack.c.l.b16 %v187
    %v737 = vunpack.c.h.b16 %v187
    %v738 = vunpack.c.l.b16 %v188
    %v739 = vunpack.c.h.b16 %v188
    %v740 = vunpack.c.l.b16 %v189
    %v741 = vunpack.c.h.b16 %v189
    %v742 = vunpack.c.l.b16 %v190
    %v743 = vunpack.c.h.b16 %v190
    %v744 = vunpack.c.l.b16 %v191
    %v745 = vunpack.c.h.b16 %v191
    %v746 = vunpack.c.l.b16 %v192
    %v747 = vunpack.c.h.b16 %v192
    %v748 = vunpack.c.l.b16 %v193
    %v749 = vunpack.c.h.b16 %v193
    %v750 = vunpack.c.l.b16 %v194
    %v751 = vunpack.c.h.b16 %v194
    %v752 = vunpack.c.l.b16 %v195
    %v753 = vunpack.c.h.b16 %v195
    %v754 = vunpack.c.l.b16 %v196
    %v755 = vunpack.c.h.b16 %v196
    %v756 = vunpack.c.l.b16 %v197
    %v757 = vunpack.c.h.b16 %v197
    %v758 = vunpack.c.l.b16 %v198
    %v759 = vunpack.c.h.b16 %v198
    %v760 = vunpack.c.l.b16 %v199
    %v761 = vunpack.c.h.b16 %v199
    %v762 = vunpack.c.l.b16 %v200
    %v763 = vunpack.c.h.b16 %v200
    %v764 = vunpack.c.l.b16 %v201
    %v765 = vunpack.c.h.b16 %v201
    %v766 = vunpack.c.l.b16 %v202
    %v767 = vunpack.c.h.b16 %v202
    %v768 = vunpack.c.l.b16 %v203
    %v769 = vunpack.c.h.b16 %v203
    %v770 = vunpack.c.l.b16 %v204
    %v771 = vunpack.c.h.b16 %v204
    %v772 = vunpack.c.l.b16 %v205
    %v773 = vunpack.c.h.b16 %v205
    %v774 = vunpack.c.l.b16 %v206
    %v775 = vunpack.c.h.b16 %v206
    %v776 = vunpack.c.l.b16 %v207
    %v777 = vunpack.c.h.b16 %v207
    %v778 = vunpack.c.l.b16 %v208
    %v779 = vunpack.c.h.b16 %v208
    %v780 = vunpack.c.l.b16 %v209
    %v781 = vunpack.c.h.b16 %v209
    %v782 = vunpack.c.l.b16 %v210
    %v783 = vunpack.c.h.b16 %v210
    %v784 = vunpack.c.l.b16 %v211
    %v785 = vunpack.c.h.b16 %v211
    %v786 = vunpack.c.l.b16 %v212
    %v787 = vunpack.c.h.b16 %v212
    %v788 = vunpack.c.l.b16 %v213
    %v789 = vunpack.c.h.b16 %v213
    %v790 = vunpack.c.l.b16 %v214
    %v791 = vunpack.c.h.b16 %v214
    %v792 = vunpack.c.l.b16 %v215
    %v793 = vunpack.c.h.b16 %v215
    %v794 = vunpack.c.l.b16 %v216
    %v795 = vunpack.c.h.b16 %v216
    %v796 = vunpack.c.l.b16 %v217
    %v797 = vunpack.c.h.b16 %v217
    %v798 = vunpack.c.l.b16 %v218
    %v799 = vunpack.c.h.b16 %v218
    %v800 = vunpack.c.l.b16 %v219
    %v801 = vunpack.c.h.b16 %v219
    %v802 = vunpack.c.l.b16 %v220
    %v803 = vunpack.c.h.b16 %v220
    %v804 = vunpack.c.l.b16 %v221
    %v805 = vunpack.c.h.b16 %v221
    %v806 = vunpack.c.l.b16 %v222
    %v807 = vunpack.c.h.b16 %v222
    %v808 = vunpack.c.l.b16 %v223
    %v809 = vunpack.c.h.b16 %v223
    %v810 = vunpack.c.l.b16 %v224
    %v811 = vunpack.c.h.b16 %v224
    %v812 = vunpack.c.l.b16 %v225
    %v813 = vunpack.c.h.b16 %v225
    %v814 = vunpack.c.l.b16 %v226
    %v815 = vunpack.c.h.b16 %v226
    %v816 = vunpack.c.l.b16 %v227
    %v817 = vunpack.c.h.b16 %v227
    %v818 = vunpack.c.l.b16 %v228
    %v819 = vunpack.c.h.b16 %v228
    %v820 = vunpack.c.l.b16 %v229
    %v821 = vunpack.c.h.b16 %v229
    %v822 = vunpack.c.l.b16 %v230
    %v823 = vunpack.c.h.b16 %v230
    %v824 = vunpack.c.l.b16 %v231
    %v825 = vunpack.c.h.b16 %v231
    %v826 = vunpack.c.l.b16 %v232
    %v827 = vunpack.c.h.b16 %v232
    %v828 = vunpack.c.l.b16 %v233
    %v829 = vunpack.c.h.b16 %v233
    %v830 = vunpack.c.l.b16 %v234
    %v831 = vunpack.c.h.b16 %v234
    %v832 = vunpack.c.l.b16 %v235
    %v833 = vunpack.c.h.b16 %v235
    %v834 = vunpack.c.l.b16 %v236
    %v835 = vunpack.c.h.b16 %v236
    %v836 = vunpack.c.l.b16 %v237
    %v837 = vunpack.c.h.b16 %v237
    %v838 = vunpack.c.l.b16 %v238
    %v839 = vunpack.c.h.b16 %v238
    %v840 = vunpack.c.l.b16 %v239
    %v841 = vunpack.c.h.b16 %v239
    %v842 = vunpack.c.l.b16 %v240
    %v843 = vunpack.c.h.b16 %v240
    %v844 = vunpack.c.l.b16 %v241
    %v845 = vunpack.c.h.b16 %v241
    %v846 = vunpack.c.l.b16 %v242
    %v847 = vunpack.c.h.b16 %v242
    %v848 = vunpack.c.l.b16 %v243
    %v849 = vunpack.c.h.b16 %v243
    %v850 = vunpack.c.l.b16 %v244
    %v851 = vunpack.c.h.b16 %v244
    %v852 = vunpack.c.l.b16 %v245
    %v853 = vunpack.c.h.b16 %v245
    %v854 = vunpack.c.l.b16 %v246
    %v855 = vunpack.c.h.b16 %v246
    %v856 = vunpack.c.l.b16 %v247
    %v857 = vunpack.c.h.b16 %v247
    %v858 = vunpack.c.l.b16 %v248
    %v859 = vunpack.c.h.b16 %v248
    %v860 = vunpack.c.l.b16 %v249
    %v861 = vunpack.c.h.b16 %v249
    %v862 = vunpack.c.l.b16 %v250
    %v863 = vunpack.c.h.b16 %v250
    %v864 = vunpack.c.l.b16 %v251
    %v865 = vunpack.c.h.b16 %v251
    %v866 = vunpack.c.l.b16 %v252
    %v867 = vunpack.c.h.b16 %v252
    %v868 = vunpack.c.l.b16 %v253
    %v869 = vunpack.c.h.b16 %v253
    %v870 = vunpack.c.l.b16 %v254
    %v871 = vunpack.c.h.b16 %v254
    %v872 = vunpack.c.l.b16 %v255
    %v873 = vunpack.c.h.b16 %v255
    %v874 = vunpack.c.l.b16 %v256
    %v875 = vunpack.c.h.b16 %v256
    %v876 = vunpack.c.l.b16 %v257
    %v877 = vunpack.c.h.b16 %v257
    %v878 = vunpack.c.l.b16 %v258
    %v879 = vunpack.c.h.b16 %v258
    %v880 = vunpack.c.l.b16 %v259
    %v881 = vunpack.c.h.b16 %v259
    %v882 = vunpack.c.l.b16 %v260
    %v883 = vunpack.c.h.b16 %v260
    %v884 = vunpack.c.l.b16 %v261
    %v885 = vunpack.c.h.b16 %v261
    %v886 = vunpack.c.l.b16 %v262
    %v887 = vunpack.c.h.b16 %v262
    %v888 = vunpack.c.l.b16 %v263
    %v889 = vunpack.c.h.b16 %v263
    %v890 = vunpack.c.l.b16 %v264
    %v891 = vunpack.c.h.b16 %v264
    %v892 = vunpack.c.l.b16 %v265
    %v893 = vunpack.c.h.b16 %v265
    %v894 = vunpack.c.l.b16 %v266
    %v895 = vunpack.c.h.b16 %v266
    %v896 = vunpack.c.l.b16 %v267
    %v897 = vunpack.c.h.b16 %v267
    %v898 = vunpack.c.l.b16 %v268
    %v899 = vunpack.c.h.b16 %v268
    %v900 = vunpack.c.l.b16 %v269
    %v901 = vunpack.c.h.b16 %v269
    %v902 = vunpack.c.l.b16 %v270
    %v903 = vunpack.c.h.b16 %v270
    %v904 = vunpack.c.l.b16 %v271
    %v905 = vunpack.c.h.b16 %v271
    %v906 = vunpack.c.l.b16 %v272
    %v907 = vunpack.c.h.b16 %v272
    %v908 = vunpack.c.l.b16 %v273
    %v909 = vunpack.c.h.b16 %v273
    %v910 = vunpack.c.l.b16 %v274
    %v911 = vunpack.c.h.b16 %v274
    %v912 = vunpack.c.l.b16 %v275
    %v913 = vunpack.c.h.b16 %v275
    %v914 = vunpack.c.l.b16 %v276
    %v915 = vunpack.c.h.b16 %v276
    %v916 = vunpack.c.l.b16 %v277
    %v917 = vunpack.c.h.b16 %v277
    %v918 = vunpack.c.l.b16 %v278
    %v919 = vunpack.c.h.b16 %v278
    %v920 = vunpack.c.l.b16 %v279
    %v921 = vunpack.c.h.b16 %v279
    %v922 = vunpack.c.l.b16 %v280
    %v923 = vunpack.c.h.b16 %v280
    %v924 = vunpack.c.l.b16 %v281
    %v925 = vunpack.c.h.b16 %v281
    %v926 = vunpack.c.l.b16 %v282
    %v927 = vunpack.c.h.b16 %v282
    %v928 = vunpack.c.l.b16 %v283
    %v929 = vunpack.c.h.b16 %v283
    %v930 = vunpack.c.l.b16 %v284
    %v931 = vunpack.c.h.b16 %v284
    %v932 = vunpack.c.l.b16 %v285
    %v933 = vunpack.c.h.b16 %v285
    %v934 = vunpack.c.l.b16 %v286
    %v935 = vunpack.c.h.b16 %v286
    %v936 = vunpack.c.l.b16 %v287
    %v937 = vunpack.c.h.b16 %v287
    %v938 = vunpack.c.l.b16 %v288
    %v939 = vunpack.c.h.b16 %v288
    %v940 = vunpack.c.l.b16 %v289
    %v941 = vunpack.c.h.b16 %v289
    %v942 = vunpack.c.l.b16 %v290
    %v943 = vunpack.c.h.b16 %v290
    %v944 = vunpack.c.l.b16 %v291
    %v945 = vunpack.c.h.b16 %v291
    %v946 = vunpack.c.l.b16 %v292
    %v947 = vunpack.c.h.b16 %v292
    %v948 = vunpack.c.l.b16 %v293
    %v949 = vunpack.c.h.b16 %v293
    %v950 = vunpack.c.l.b16 %v294
    %v951 = vunpack.c.h.b16 %v294
    %v952 = vunpack.c.l.b16 %v295
    %v953 = vunpack.c.h.b16 %v295
    %v954 = vunpack.c.l.b16 %v296
    %v955 = vunpack.c.h.b16 %v296
    %v956 = vunpack.c.l.b16 %v297
    %v957 = vunpack.c.h.b16 %v297
    %v958 = vunpack.c.l.b16 %v298
    %v959 = vunpack.c.h.b16 %v298
    %v960 = vunpack.c.l.b16 %v299
    %v961 = vunpack.c.h.b16 %v299
    %v962 = vunpack.c.l.b16 %v300
    %v963 = vunpack.c.h.b16 %v300
    %v964 = vunpack.c.l.b16 %v301
    %v965 = vunpack.c.h.b16 %v301
    %v966 = vunpack.c.l.b16 %v302
    %v967 = vunpack.c.h.b16 %v302
    %v968 = vunpack.c.l.b16 %v303
    %v969 = vunpack.c.h.b16 %v303
    %v970 = vunpack.c.l.b16 %v304
    %v971 = vunpack.c.h.b16 %v304
    %v972 = vunpack.c.l.b16 %v305
    %v973 = vunpack.c.h.b16 %v305
    %v974 = vunpack.c.l.b16 %v306
    %v975 = vunpack.c.h.b16 %v306
    %v976 = vunpack.c.l.b16 %v307
    %v977 = vunpack.c.h.b16 %v307
    %v978 = vunpack.c.l.b16 %v308
    %v979 = vunpack.c.h.b16 %v308
    %v980 = vunpack.c.l.b16 %v309
    %v981 = vunpack.c.h.b16 %v309
    %v982 = vunpack.c.l.b16 %v310
    %v983 = vunpack.c.h.b16 %v310
    %v984 = vunpack.c.l.b16 %v311
    %v985 = vunpack.c.h.b16 %v311
    %v986 = vunpack.c.l.b16 %v312
    %v987 = vunpack.c.h.b16 %v312
    %v988 = vunpack.c.l.b16 %v313
    %v989 = vunpack.c.h.b16 %v313
    %v990 = vunpack.c.l.b16 %v314
    %v991 = vunpack.c.h.b16 %v314
    %v992 = vunpack.c.l.b16 %v315
    %v993 = vunpack.c.h.b16 %v315
    %v994 = vunpack.c.l.b16 %v316
    %v995 = vunpack.c.h.b16 %v316
    %v996 = vunpack.c.l.b16 %v317
    %v997 = vunpack.c.h.b16 %v317
    %v998 = vunpack.c.l.b16 %v318
    %v999 = vunpack.c.h.b16 %v318
    %v1000 = vunpack.c.l.b16 %v319
    %v1001 = vunpack.c.h.b16 %v319
    %v1002 = vunpack.c.l.b16 %v320
    %v1003 = vunpack.c.h.b16 %v320
    %v1004 = vunpack.c.l.b16 %v321
    %v1005 = vunpack.c.h.b16 %v321
    %v1006 = vunpack.c.l.b16 %v322
    %v1007 = vunpack.c.h.b16 %v322
    %v1008 = vunpack.c.l.b16 %v323
    %v1009 = vunpack.c.h.b16 %v323
    %v1010 = vunpack.c.l.b16 %v324
    %v1011 = vunpack.c.h.b16 %v324
    %v1012 = vunpack.c.l.b16 %v325
    %v1013 = vunpack.c.h.b16 %v325
    %v1014 = vunpack.c.l.b16 %v326
    %v1015 = vunpack.c.h.b16 %v326
    %v1016 = vunpack.c.l.b16 %v327
    %v1017 = vunpack.c.h.b16 %v327
    %v1018 = vunpack.c.l.b16 %v328
    %v1019 = vunpack.c.h.b16 %v328
    %v1020 = vunpack.c.l.b16 %v329
    %v1021 = vunpack.c.h.b16 %v329
    %v1022 = vunpack.c.l.b16 %v330
    %v1023 = vunpack.c.h.b16 %v330
    %v1024 = vunpack.c.l.b16 %v331
    %v1025 = vunpack.c.h.b16 %v331
    %v1026 = vunpack.c.l.b16 %v332
    %v1027 = vunpack.c.h.b16 %v332
    %v1028 = vunpack.c.l.b16 %v333
    %v1029 = vunpack.c.h.b16 %v333
    %v1030 = vunpack.c.l.b16 %v334
    %v1031 = vunpack.c.h.b16 %v334
    %v1032 = vunpack.c.l.b16 %v335
    %v1033 = vunpack.c.h.b16 %v335
    %v1034 = vunpack.c.l.b16 %v336
    %v1035 = vunpack.c.h.b16 %v336
    %v1036 = vunpack.c.l.b16 %v337
    %v1037 = vunpack.c.h.b16 %v337
    %v1038 = vunpack.c.l.b16 %v338
    %v1039 = vunpack.c.h.b16 %v338
    %v1040 = vunpack.c.l.b16 %v339
    %v1041 = vunpack.c.h.b16 %v339
    %v1042 = vunpack.c.l.b16 %v340
    %v1043 = vunpack.c.h.b16 %v340
    %v1044 = vunpack.c.l.b16 %v341
    %v1045 = vunpack.c.h.b16 %v341
    %v1046 = vunpack.c.l.b16 %v342
    %v1047 = vunpack.c.h.b16 %v342
    %v1048 = vunpack.c.l.b16 %v343
    %v1049 = vunpack.c.h.b16 %v343
    %v1050 = vunpack.c.l.b16 %v344
    %v1051 = vunpack.c.h.b16 %v344
    %v1052 = vunpack.c.l.b16 %v345
    %v1053 = vunpack.c.h.b16 %v345
    %v1054 = vunpack.c.l.b16 %v346
    %v1055 = vunpack.c.h.b16 %v346
    %v1056 = vunpack.c.l.b16 %v347
    %v1057 = vunpack.c.h.b16 %v347
    %v1058 = vunpack.c.l.b16 %v348
    %v1059 = vunpack.c.h.b16 %v348
    %v1060 = vunpack.c.l.b16 %v349
    %v1061 = vunpack.c.h.b16 %v349
    %v1062 = vunpack.c.l.b16 %v350
    %v1063 = vunpack.c.h.b16 %v350
    %v1064 = vunpack.c.l.b16 %v351
    %v1065 = vunpack.c.h.b16 %v351
    %v1066 = vunpack.c.l.b16 %v352
    %v1067 = vunpack.c.h.b16 %v352
    %v1068 = vunpack.c.l.b16 %v353
    %v1069 = vunpack.c.h.b16 %v353
    %v1070 = vunpack.c.l.b16 %v354
    %v1071 = vunpack.c.h.b16 %v354
    %v1072 = vunpack.c.l.b16 %v355
    %v1073 = vunpack.c.h.b16 %v355
    %v1074 = vunpack.c.l.b16 %v356
    %v1075 = vunpack.c.h.b16 %v356
    %v1076 = vunpack.c.l.b16 %v357
    %v1077 = vunpack.c.h.b16 %v357
    %v1078 = vunpack.c.l.b16 %v358
    %v1079 = vunpack.c.h.b16 %v358
    %v1080 = vunpack.c.l.b16 %v359
    %v1081 = vunpack.c.h.b16 %v359
    %v1082 = vunpack.c.l.b16 %v360
    %v1083 = vunpack.c.h.b16 %v360
    %v1084 = vunpack.c.l.b16 %v361
    %v1085 = vunpack.c.h.b16 %v361
    %v1086 = vunpack.c.l.b16 %v362
    %v1087 = vunpack.c.h.b16 %v362
    %v1088 = vunpack.c.l.b16 %v363
    %v1089 = vunpack.c.h.b16 %v363
    %v1090 = vunpack.c.l.b16 %v364
    %v1091 = vunpack.c.h.b16 %v364
    %v1092 = vunpack.c.l.b16 %v365
    %v1093 = vunpack.c.h.b16 %v365
    %v1094 = vunpack.c.l.b16 %v366
    %v1095 = vunpack.c.h.b16 %v366
    %v1096 = vunpack.c.l.b16 %v367
    %v1097 = vunpack.c.h.b16 %v367
    %v1098 = vunpack.c.l.b16 %v368
    %v1099 = vunpack.c.h.b16 %v368
    %v1100 = vunpack.c.l.b16 %v369
    %v1101 = vunpack.c.h.b16 %v369
    %v1102 = vunpack.c.l.b16 %v370
    %v1103 = vunpack.c.h.b16 %v370
    %v1104 = vunpack.c.l.b16 %v371
    %v1105 = vunpack.c.h.b16 %v371
    %v1106 = vunpack.c.l.b16 %v372
    %v1107 = vunpack.c.h.b16 %v372
    %v1108 = vunpack.c.l.b16 %v373
    %v1109 = vunpack.c.h.b16 %v373
    %v1110 = vunpack.c.l.b16 %v374
    %v1111 = vunpack.c.h.b16 %v374
    %v1112 = vunpack.c.l.b16 %v375
    %v1113 = vunpack.c.h.b16 %v375
    %v1114 = vunpack.c.l.b16 %v376
    %v1115 = vunpack.c.h.b16 %v376
    %v1116 = vunpack.c.l.b16 %v377
    %v1117 = vunpack.c.h.b16 %v377
    %v1118 = vunpack.c.l.b16 %v378
    %v1119 = vunpack.c.h.b16 %v378
    %v1120 = vunpack.c.l.b16 %v379
    %v1121 = vunpack.c.h.b16 %v379
    %v1122 = vunpack.c.l.b16 %v380
    %v1123 = vunpack.c.h.b16 %v380
    %v1124 = vunpack.c.l.b16 %v381
    %v1125 = vunpack.c.h.b16 %v381
    %v1126 = vunpack.c.l.b16 %v382
    %v1127 = vunpack.c.h.b16 %v382
    %v1128 = vunpack.c.l.b16 %v383
    %v1129 = vunpack.c.h.b16 %v383
    %v1130 = vunpack.c.l.b16 %v384
    %v1131 = vunpack.c.h.b16 %v384
    %v1132 = vunpack.c.l.b16 %v385
    %v1133 = vunpack.c.h.b16 %v385
    %v1134 = vunpack.c.l.b16 %v386
    %v1135 = vunpack.c.h.b16 %v386
    %v1136 = vunpack.c.l.b16 %v387
    %v1137 = vunpack.c.h.b16 %v387
    %v1138 = vunpack.c.l.b16 %v388
    %v1139 = vunpack.c.h.b16 %v388
    %v1140 = vunpack.c.l.b16 %v389
    %v1141 = vunpack.c.h.b16 %v389
    %v1142 = vunpack.c.l.b16 %v390
    %v1143 = vunpack.c.h.b16 %v390
    %v1144 = vunpack.c.l.b16 %v391
    %v1145 = vunpack.c.h.b16 %v391
    %v1146 = vunpack.c.l.b16 %v392
    %v1147 = vunpack.c.h.b16 %v392
    %v1148 = vunpack.c.l.b16 %v393
    %v1149 = vunpack.c.h.b16 %v393
    %v1150 = vunpack.c.l.b16 %v394
    %v1151 = vunpack.c.h.b16 %v394
    %v1152 = vunpack.c.l.b16 %v395
    %v1153 = vunpack.c.h.b16 %v395
    %v1154 = vunpack.c.l.b16 %v396
    %v1155 = vunpack.c.h.b16 %v396
    %v1156 = vunpack.c.l.b16 %v397
    %v1157 = vunpack.c.h.b16 %v397
    %v1158 = vunpack.c.l.b16 %v398
    %v1159 = vunpack.c.h.b16 %v398
    %v1160 = vunpack.c.l.b16 %v399
    %v1161 = vunpack.c.h.b16 %v399
    %v1162 = vunpack.c.l.b16 %v400
    %v1163 = vunpack.c.h.b16 %v400
    %v1164 = vunpack.c.l.b16 %v401
    %v1165 = vunpack.c.h.b16 %v401
    %v1166 = vunpack.c.l.b16 %v402
    %v1167 = vunpack.c.h.b16 %v402
    %v1168 = vunpack.c.l.b16 %v403
    %v1169 = vunpack.c.h.b16 %v403
    %v1170 = vunpack.c.l.b16 %v404
    %v1171 = vunpack.c.h.b16 %v404
    %v1172 = vunpack.c.l.b16 %v405
    %v1173 = vunpack.c.h.b16 %v405
    %v1174 = vpack.c.b16 %v666, %v662
    %v1175 = vpack.c.b16 %v667, %v663
    %v1176 = vpack.c.b16 %v668, %v664
    %v1177 = vpack.c.b16 %v669, %v665
    %v1178 = vpack.c.b16 %v674, %v670
    %v1179 = vpack.c.b16 %v675, %v671
    %v1180 = vpack.c.b16 %v676, %v672
    %v1181 = vpack.c.b16 %v677, %v673
    %v1182 = vpack.c.b16 %v682, %v678
    %v1183 = vpack.c.b16 %v683, %v679
    %v1184 = vpack.c.b16 %v684, %v680
    %v1185 = vpack.c.b16 %v685, %v681
    %v1186 = vpack.c.b16 %v690, %v686
    %v1187 = vpack.c.b16 %v691, %v687
    %v1188 = vpack.c.b16 %v692, %v688
    %v1189 = vpack.c.b16 %v693, %v689
    %v1190 = vpack.c.b16 %v698, %v694
    %v1191 = vpack.c.b16 %v699, %v695
    %v1192 = vpack.c.b16 %v700, %v696
    %v1193 = vpack.c.b16 %v701, %v697
    %v1194 = vpack.c.b16 %v706, %v702
    %v1195 = vpack.c.b16 %v707, %v703
    %v1196 = vpack.c.b16 %v708, %v704
    %v1197 = vpack.c.b16 %v709, %v705
    %v1198 = vpack.c.b16 %v714, %v710
    %v1199 = vpack.c.b16 %v715, %v711
    %v1200 = vpack.c.b16 %v716, %v712
    %v1201 = vpack.c.b16 %v717, %v713
    %v1202 = vpack.c.b16 %v722, %v718
    %v1203 = vpack.c.b16 %v723, %v719
    %v1204 = vpack.c.b16 %v724, %v720
    %v1205 = vpack.c.b16 %v725, %v721
    %v1206 = vpack.c.b16 %v730, %v726
    %v1207 = vpack.c.b16 %v731, %v727
    %v1208 = vpack.c.b16 %v732, %v728
    %v1209 = vpack.c.b16 %v733, %v729
    %v1210 = vpack.c.b16 %v738, %v734
    %v1211 = vpack.c.b16 %v739, %v735
    %v1212 = vpack.c.b16 %v740, %v736
    %v1213 = vpack.c.b16 %v741, %v737
    %v1214 = vpack.c.b16 %v746, %v742
    %v1215 = vpack.c.b16 %v747, %v743
    %v1216 = vpack.c.b16 %v748, %v744
    %v1217 = vpack.c.b16 %v749, %v745
    %v1218 = vpack.c.b16 %v754, %v750
    %v1219 = vpack.c.b16 %v755, %v751
    %v1220 = vpack.c.b16 %v756, %v752
    %v1221 = vpack.c.b16 %v757, %v753
    %v1222 = vpack.c.b16 %v762, %v758
    %v1223 = vpack.c.b16 %v763, %v759
    %v1224 = vpack.c.b16 %v764, %v760
    %v1225 = vpack.c.b16 %v765, %v761
    %v1226 = vpack.c.b16 %v770, %v766
    %v1227 = vpack.c.b16 %v771, %v767
    %v1228 = vpack.c.b16 %v772, %v768
    %v1229 = vpack.c.b16 %v773, %v769
    %v1230 = vpack.c.b16 %v778, %v774
    %v1231 = vpack.c.b16 %v779, %v775
    %v1232 = vpack.c.b16 %v780, %v776
    %v1233 = vpack.c.b16 %v781, %v777
    %v1234 = vpack.c.b16 %v786, %v782
    %v1235 = vpack.c.b16 %v787, %v783
    %v1236 = vpack.c.b16 %v788, %v784
    %v1237 = vpack.c.b16 %v789, %v785
    %v1238 = vpack.c.b16 %v794, %v790
    %v1239 = vpack.c.b16 %v795, %v791
    %v1240 = vpack.c.b16 %v796, %v792
    %v1241 = vpack.c.b16 %v797, %v793
    %v1242 = vpack.c.b16 %v802, %v798
    %v1243 = vpack.c.b16 %v803, %v799
    %v1244 = vpack.c.b16 %v804, %v800
    %v1245 = vpack.c.b16 %v805, %v801
    %v1246 = vpack.c.b16 %v810, %v806
    %v1247 = vpack.c.b16 %v811, %v807
    %v1248 = vpack.c.b16 %v812, %v808
    %v1249 = vpack.c.b16 %v813, %v809
    %v1250 = vpack.c.b16 %v818, %v814
    %v1251 = vpack.c.b16 %v819, %v815
    %v1252 = vpack.c.b16 %v820, %v816
    %v1253 = vpack.c.b16 %v821, %v817
    %v1254 = vpack.c.b16 %v826, %v822
    %v1255 = vpack.c.b16 %v827, %v823
    %v1256 = vpack.c.b16 %v828, %v824
    %v1257 = vpack.c.b16 %v829, %v825
    %v1258 = vpack.c.b16 %v834, %v830
    %v1259 = vpack.c.b16 %v835, %v831
    %v1260 = vpack.c.b16 %v836, %v832
    %v1261 = vpack.c.b16 %v837, %v833
    %v1262 = vpack.c.b16 %v842, %v838
    %v1263 = vpack.c.b16 %v843, %v839
    %v1264 = vpack.c.b16 %v844, %v840
    %v1265 = vpack.c.b16 %v845, %v841
    %v1266 = vpack.c.b16 %v850, %v846
    %v1267 = vpack.c.b16 %v851, %v847
    %v1268 = vpack.c.b16 %v852, %v848
    %v1269 = vpack.c.b16 %v853, %v849
    %v1270 = vpack.c.b16 %v858, %v854
    %v1271 = vpack.c.b16 %v859, %v855
    %v1272 = vpack.c.b16 %v860, %v856
    %v1273 = vpack.c.b16 %v861, %v857
    %v1274 = vpack.c.b16 %v866, %v862
    %v1275 = vpack.c.b16 %v867, %v863
    %v1276 = vpack.c.b16 %v868, %v864
    %v1277 = vpack.c.b16 %v869, %v865
    %v1278 = vpack.c.b16 %v874, %v870
    %v1279 = vpack.c.b16 %v875, %v871
    %v1280 = vpack.c.b16 %v876, %v872
    %v1281 = vpack.c.b16 %v877, %v873
    %v1282 = vpack.c.b16 %v882, %v878
    %v1283 = vpack.c.b16 %v883, %v879
    %v1284 = vpack.c.b16 %v884, %v880
    %v1285 = vpack.c.b16 %v885, %v881
    %v1286 = vpack.c.b16 %v890, %v886
    %v1287 = vpack.c.b16 %v891, %v887
    %v1288 = vpack.c.b16 %v892, %v888
    %v1289 = vpack.c.b16 %v893, %v889
    %v1290 = vpack.c.b16 %v898, %v894
    %v1291 = vpack.c.b16 %v899, %v895
    %v1292 = vpack.c.b16 %v900, %v896
    %v1293 = vpack.c.b16 %v901, %v897
    %v1294 = vpack.c.b16 %v906, %v902
    %v1295 = vpack.c.b16 %v907, %v903
    %v1296 = vpack.c.b16 %v908, %v904
    %v1297 = vpack.c.b16 %v909, %v905
    %v1298 = vpack.c.b16 %v914, %v910
    %v1299 = vpack.c.b16 %v915, %v911
    %v1300 = vpack.c.b16 %v916, %v912
    %v1301 = vpack.c.b16 %v917, %v913
    %v1302 = vpack.c.b16 %v922, %v918
    %v1303 = vpack.c.b16 %v923, %v919
    %v1304 = vpack.c.b16 %v924, %v920
    %v1305 = vpack.c.b16 %v925, %v921
    %v1306 = vpack.c.b16 %v930, %v926
    %v1307 = vpack.c.b16 %v931, %v927
    %v1308 = vpack.c.b16 %v932, %v928
    %v1309 = vpack.c.b16 %v933, %v929
    %v1310 = vpack.c.b16 %v938, %v934
    %v1311 = vpack.c.b16 %v939, %v935
    %v1312 = vpack.c.b16 %v940, %v936
    %v1313 = vpack.c.b16 %v941, %v937
    %v1314 = vpack.c.b16 %v946, %v942
    %v1315 = vpack.c.b16 %v947, %v943
    %v1316 = vpack.c.b16 %v948, %v944
    %v1317 = vpack.c.b16 %v949, %v945
    %v1318 = vpack.c.b16 %v954, %v950
    %v1319 = vpack.c.b16 %v955, %v951
    %v1320 = vpack.c.b16 %v956, %v952
    %v1321 = vpack.c.b16 %v957, %v953
    %v1322 = vpack.c.b16 %v962, %v958
    %v1323 = vpack.c.b16 %v963, %v959
    %v1324 = vpack.c.b16 %v964, %v960
    %v1325 = vpack.c.b16 %v965, %v961
    %v1326 = vpack.c.b16 %v970, %v966
    %v1327 = vpack.c.b16 %v971, %v967
    %v1328 = vpack.c.b16 %v972, %v968
    %v1329 = vpack.c.b16 %v973, %v969
    %v1330 = vpack.c.b16 %v978, %v974
    %v1331 = vpack.c.b16 %v979, %v975
    %v1332 = vpack.c.b16 %v980, %v976
    %v1333 = vpack.c.b16 %v981, %v977
    %v1334 = vpack.c.b16 %v986, %v982
    %v1335 = vpack.c.b16 %v987, %v983
    %v1336 = vpack.c.b16 %v988, %v984
    %v1337 = vpack.c.b16 %v989, %v985
    %v1338 = vpack.c.b16 %v994, %v990
    %v1339 = vpack.c.b16 %v995, %v991
    %v1340 = vpack.c.b16 %v996, %v992
    %v1341 = vpack.c.b16 %v997, %v993
    %v1342 = vpack.c.b16 %v1002, %v998
    %v1343 = vpack.c.b16 %v1003, %v999
    %v1344 = vpack.c.b16 %v1004, %v1000
    %v1345 = vpack.c.b16 %v1005, %v1001
    %v1346 = vpack.c.b16 %v1010, %v1006
    %v1347 = vpack.c.b16 %v1011, %v1007
    %v1348 = vpack.c.b16 %v1012, %v1008
    %v1349 = vpack.c.b16 %v1013, %v1009
    %v1350 = vpack.c.b16 %v1018, %v1014
    %v1351 = vpack.c.b16 %v1019, %v1015
    %v1352 = vpack.c.b16 %v1020, %v1016
    %v1353 = vpack.c.b16 %v1021, %v1017
    %v1354 = vpack.c.b16 %v1026, %v1022
    %v1355 = vpack.c.b16 %v1027, %v1023
    %v1356 = vpack.c.b16 %v1028, %v1024
    %v1357 = vpack.c.b16 %v1029, %v1025
    %v1358 = vpack.c.b16 %v1034, %v1030
    %v1359 = vpack.c.b16 %v1035, %v1031
    %v1360 = vpack.c.b16 %v1036, %v1032
    %v1361 = vpack.c.b16 %v1037, %v1033
    %v1362 = vpack.c.b16 %v1042, %v1038
    %v1363 = vpack.c.b16 %v1043, %v1039
    %v1364 = vpack.c.b16 %v1044, %v1040
    %v1365 = vpack.c.b16 %v1045, %v1041
    %v1366 = vpack.c.b16 %v1050, %v1046
    %v1367 = vpack.c.b16 %v1051, %v1047
    %v1368 = vpack.c.b16 %v1052, %v1048
    %v1369 = vpack.c.b16 %v1053, %v1049
    %v1370 = vpack.c.b16 %v1058, %v1054
    %v1371 = vpack.c.b16 %v1059, %v1055
    %v1372 = vpack.c.b16 %v1060, %v1056
    %v1373 = vpack.c.b16 %v1061, %v1057
    %v1374 = vpack.c.b16 %v1066, %v1062
    %v1375 = vpack.c.b16 %v1067, %v1063
    %v1376 = vpack.c.b16 %v1068, %v1064
    %v1377 = vpack.c.b16 %v1069, %v1065
    %v1378 = vpack.c.b16 %v1074, %v1070
    %v1379 = vpack.c.b16 %v1075, %v1071
    %v1380 = vpack.c.b16 %v1076, %v1072
    %v1381 = vpack.c.b16 %v1077, %v1073
    %v1382 = vpack.c.b16 %v1082, %v1078
    %v1383 = vpack.c.b16 %v1083, %v1079
    %v1384 = vpack.c.b16 %v1084, %v1080
    %v1385 = vpack.c.b16 %v1085, %v1081
    %v1386 = vpack.c.b16 %v1090, %v1086
    %v1387 = vpack.c.b16 %v1091, %v1087
    %v1388 = vpack.c.b16 %v1092, %v1088
    %v1389 = vpack.c.b16 %v1093, %v1089
    %v1390 = vpack.c.b16 %v1098, %v1094
    %v1391 = vpack.c.b16 %v1099, %v1095
    %v1392 = vpack.c.b16 %v1100, %v1096
    %v1393 = vpack.c.b16 %v1101, %v1097
    %v1394 = vpack.c.b16 %v1106, %v1102
    %v1395 = vpack.c.b16 %v1107, %v1103
    %v1396 = vpack.c.b16 %v1108, %v1104
    %v1397 = vpack.c.b16 %v1109, %v1105
    %v1398 = vpack.c.b16 %v1114, %v1110
    %v1399 = vpack.c.b16 %v1115, %v1111
    %v1400 = vpack.c.b16 %v1116, %v1112
    %v1401 = vpack.c.b16 %v1117, %v1113
    %v1402 = vpack.c.b16 %v1122, %v1118
    %v1403 = vpack.c.b16 %v1123, %v1119
    %v1404 = vpack.c.b16 %v1124, %v1120
    %v1405 = vpack.c.b16 %v1125, %v1121
    %v1406 = vpack.c.b16 %v1130, %v1126
    %v1407 = vpack.c.b16 %v1131, %v1127
    %v1408 = vpack.c.b16 %v1132, %v1128
    %v1409 = vpack.c.b16 %v1133, %v1129
    %v1410 = vpack.c.b16 %v1138, %v1134
    %v1411 = vpack.c.b16 %v1139, %v1135
    %v1412 = vpack.c.b16 %v1140, %v1136
    %v1413 = vpack.c.b16 %v1141, %v1137
    %v1414 = vpack.c.b16 %v1146, %v1142
    %v1415 = vpack.c.b16 %v1147, %v1143
    %v1416 = vpack.c.b16 %v1148, %v1144
    %v1417 = vpack.c.b16 %v1149, %v1145
    %v1418 = vpack.c.b16 %v1154, %v1150
    %v1419 = vpack.c.b16 %v1155, %v1151
    %v1420 = vpack.c.b16 %v1156, %v1152
    %v1421 = vpack.c.b16 %v1157, %v1153
    %v1422 = vpack.c.b16 %v1162, %v1158
    %v1423 = vpack.c.b16 %v1163, %v1159
    %v1424 = vpack.c.b16 %v1164, %v1160
    %v1425 = vpack.c.b16 %v1165, %v1161
    %v1426 = vpack.c.b16 %v1170, %v1166
    %v1427 = vpack.c.b16 %v1171, %v1167
    %v1428 = vpack.c.b16 %v1172, %v1168
    %v1429 = vpack.c.b16 %v1173, %v1169
    %1686 = vmatprep.subr.bf16.mxu0 %v1175
    %1687 = vmatpush1.bf16.msra.mxu0 %v1174
    %1688 = vmatprep.subr.bf16.mxu0 %v1179
    %1689 = vmatpush1.bf16.msra.mxu0 %v1178
    %1690 = vmatprep.subr.bf16.mxu0 %v1183
    %1691 = vmatpush1.bf16.msra.mxu0 %v1182
    %1692 = vmatprep.subr.bf16.mxu0 %v1187
    %1693 = vmatpush1.bf16.msra.mxu0 %v1186
    %1694 = vmatprep.subr.bf16.mxu0 %v1191
    %1695 = vmatpush1.bf16.msra.mxu0 %v1190
    %1696 = vmatprep.subr.bf16.mxu0 %v1195
    %1697 = vmatpush1.bf16.msra.mxu0 %v1194
    %1698 = vmatprep.subr.bf16.mxu0 %v1199
    %1699 = vmatpush1.bf16.msra.mxu0 %v1198
    %1700 = vmatprep.subr.bf16.mxu0 %v1203
    %1701 = vmatpush1.bf16.msra.mxu0 %v1202
    %1702 = vmatprep.subr.bf16.mxu0 %v1207
    %1703 = vmatpush1.bf16.msra.mxu0 %v1206
    %1704 = vmatprep.subr.bf16.mxu0 %v1211
    %1705 = vmatpush1.bf16.msra.mxu0 %v1210
    %1706 = vmatprep.subr.bf16.mxu0 %v1215
    %1707 = vmatpush1.bf16.msra.mxu0 %v1214
    %1708 = vmatprep.subr.bf16.mxu0 %v1219
    %1709 = vmatpush1.bf16.msra.mxu0 %v1218
    %1710 = vmatprep.subr.bf16.mxu0 %v1223
    %1711 = vmatpush1.bf16.msra.mxu0 %v1222
    %1712 = vmatprep.subr.bf16.mxu0 %v1227
    %1713 = vmatpush1.bf16.msra.mxu0 %v1226
    %1714 = vmatprep.subr.bf16.mxu0 %v1231
    %1715 = vmatpush1.bf16.msra.mxu0 %v1230
    %1716 = vmatprep.subr.bf16.mxu0 %v1235
    %1717 = vmatpush1.bf16.msra.mxu0 %v1234
    %1718 = vmatprep.mubr.bf16.mxu0 %v143
    %1719 = vmatmul.mubr.bf16.gmra.mrb[0].mxu0 %v142
    %v1720 = vpop.f32.mrb[0].mxu0
    %v1721 = vadd.f32 0.0, %v1720
    %v1722 = vpop.f32.mrb[0].mxu0
    %v1723 = vadd.f32 0.0, %v1722
    %v1724 = vpop.f32.mrb[0].mxu0
    %v1725 = vpop.f32.mrb[0].mxu0
    %1726 = vdwg.mxu0
    %1727 = vmatprep.subr.bf16.mxu0 %v1239
    %1728 = vmatpush1.bf16.msra.mxu0 %v1238
    %1729 = vmatprep.subr.bf16.mxu0 %v1243
    %1730 = vmatpush1.bf16.msra.mxu0 %v1242
    %1731 = vmatprep.subr.bf16.mxu0 %v1247
    %1732 = vmatpush1.bf16.msra.mxu0 %v1246
    %1733 = vmatprep.subr.bf16.mxu0 %v1251
    %1734 = vmatpush1.bf16.msra.mxu0 %v1250
    %1735 = vmatprep.subr.bf16.mxu0 %v1255
    %1736 = vmatpush1.bf16.msra.mxu0 %v1254
    %1737 = vmatprep.subr.bf16.mxu0 %v1259
    %1738 = vmatpush1.bf16.msra.mxu0 %v1258
    %1739 = vmatprep.subr.bf16.mxu0 %v1263
    %1740 = vmatpush1.bf16.msra.mxu0 %v1262
    %1741 = vmatprep.subr.bf16.mxu0 %v1267
    %1742 = vmatpush1.bf16.msra.mxu0 %v1266
    %1743 = vmatprep.subr.bf16.mxu0 %v1271
    %1744 = vmatpush1.bf16.msra.mxu0 %v1270
    %1745 = vmatprep.subr.bf16.mxu0 %v1275
    %1746 = vmatpush1.bf16.msra.mxu0 %v1274
    %1747 = vmatprep.subr.bf16.mxu0 %v1279
    %1748 = vmatpush1.bf16.msra.mxu0 %v1278
    %1749 = vmatprep.subr.bf16.mxu0 %v1283
    %1750 = vmatpush1.bf16.msra.mxu0 %v1282
    %1751 = vmatprep.subr.bf16.mxu0 %v1287
    %1752 = vmatpush1.bf16.msra.mxu0 %v1286
    %1753 = vmatprep.subr.bf16.mxu0 %v1291
    %1754 = vmatpush1.bf16.msra.mxu0 %v1290
    %1755 = vmatprep.subr.bf16.mxu0 %v1295
    %1756 = vmatpush1.bf16.msra.mxu0 %v1294
    %1757 = vmatprep.subr.bf16.mxu0 %v1299
    %1758 = vmatpush1.bf16.msra.mxu0 %v1298
    %1759 = vmatprep.mubr.bf16.mxu0 %v145
    %1760 = vmatmul.mubr.bf16.gmra.mrb[0].mxu0 %v144
    %v1761 = vpop.f32.mrb[0].mxu0
    %v1762 = vadd.f32 %v1721, %v1761
    %v1763 = vpop.f32.mrb[0].mxu0
    %v1764 = vadd.f32 %v1723, %v1763
    %v1765 = vpop.f32.mrb[0].mxu0
    %v1766 = vpop.f32.mrb[0].mxu0
    %1767 = vdwg.mxu0
    %1768 = vmatprep.subr.bf16.mxu0 %v1303
    %1769 = vmatpush1.bf16.msra.mxu0 %v1302
    %1770 = vmatprep.subr.bf16.mxu0 %v1307
    %1771 = vmatpush1.bf16.msra.mxu0 %v1306
    %1772 = vmatprep.subr.bf16.mxu0 %v1311
    %1773 = vmatpush1.bf16.msra.mxu0 %v1310
    %1774 = vmatprep.subr.bf16.mxu0 %v1315
    %1775 = vmatpush1.bf16.msra.mxu0 %v1314
    %1776 = vmatprep.subr.bf16.mxu0 %v1319
    %1777 = vmatpush1.bf16.msra.mxu0 %v1318
    %1778 = vmatprep.subr.bf16.mxu0 %v1323
    %1779 = vmatpush1.bf16.msra.mxu0 %v1322
    %1780 = vmatprep.subr.bf16.mxu0 %v1327
    %1781 = vmatpush1.bf16.msra.mxu0 %v1326
    %1782 = vmatprep.subr.bf16.mxu0 %v1331
    %1783 = vmatpush1.bf16.msra.mxu0 %v1330
    %1784 = vmatprep.subr.bf16.mxu0 %v1335
    %1785 = vmatpush1.bf16.msra.mxu0 %v1334
    %1786 = vmatprep.subr.bf16.mxu0 %v1339
    %1787 = vmatpush1.bf16.msra.mxu0 %v1338
    %1788 = vmatprep.subr.bf16.mxu0 %v1343
    %1789 = vmatpush1.bf16.msra.mxu0 %v1342
    %1790 = vmatprep.subr.bf16.mxu0 %v1347
    %1791 = vmatpush1.bf16.msra.mxu0 %v1346
    %1792 = vmatprep.subr.bf16.mxu0 %v1351
    %1793 = vmatpush1.bf16.msra.mxu0 %v1350
    %1794 = vmatprep.subr.bf16.mxu0 %v1355
    %1795 = vmatpush1.bf16.msra.mxu0 %v1354
    %1796 = vmatprep.subr.bf16.mxu0 %v1359
    %1797 = vmatpush1.bf16.msra.mxu0 %v1358
    %1798 = vmatprep.subr.bf16.mxu0 %v1363
    %1799 = vmatpush1.bf16.msra.mxu0 %v1362
    %1800 = vmatprep.mubr.bf16.mxu0 %v147
    %1801 = vmatmul.mubr.bf16.gmra.mrb[0].mxu0 %v146
    %v1802 = vpop.f32.mrb[0].mxu0
    %v1803 = vadd.f32 %v1762, %v1802
    %v1804 = vpop.f32.mrb[0].mxu0
    %v1805 = vadd.f32 %v1764, %v1804
    %v1806 = vpop.f32.mrb[0].mxu0
    %v1807 = vpop.f32.mrb[0].mxu0
    %1808 = vdwg.mxu0
    %1809 = vmatprep.subr.bf16.mxu0 %v1367
    %1810 = vmatpush1.bf16.msra.mxu0 %v1366
    %1811 = vmatprep.subr.bf16.mxu0 %v1371
    %1812 = vmatpush1.bf16.msra.mxu0 %v1370
    %1813 = vmatprep.subr.bf16.mxu0 %v1375
    %1814 = vmatpush1.bf16.msra.mxu0 %v1374
    %1815 = vmatprep.subr.bf16.mxu0 %v1379
    %1816 = vmatpush1.bf16.msra.mxu0 %v1378
    %1817 = vmatprep.subr.bf16.mxu0 %v1383
    %1818 = vmatpush1.bf16.msra.mxu0 %v1382
    %1819 = vmatprep.subr.bf16.mxu0 %v1387
    %1820 = vmatpush1.bf16.msra.mxu0 %v1386
    %1821 = vmatprep.subr.bf16.mxu0 %v1391
    %1822 = vmatpush1.bf16.msra.mxu0 %v1390
    %1823 = vmatprep.subr.bf16.mxu0 %v1395
    %1824 = vmatpush1.bf16.msra.mxu0 %v1394
    %1825 = vmatprep.subr.bf16.mxu0 %v1399
    %1826 = vmatpush1.bf16.msra.mxu0 %v1398
    %1827 = vmatprep.subr.bf16.mxu0 %v1403
    %1828 = vmatpush1.bf16.msra.mxu0 %v1402
    %1829 = vmatprep.subr.bf16.mxu0 %v1407
    %1830 = vmatpush1.bf16.msra.mxu0 %v1406
    %1831 = vmatprep.subr.bf16.mxu0 %v1411
    %1832 = vmatpush1.bf16.msra.mxu0 %v1410
    %1833 = vmatprep.subr.bf16.mxu0 %v1415
    %1834 = vmatpush1.bf16.msra.mxu0 %v1414
    %1835 = vmatprep.subr.bf16.mxu0 %v1419
    %1836 = vmatpush1.bf16.msra.mxu0 %v1418
    %1837 = vmatprep.subr.bf16.mxu0 %v1423
    %1838 = vmatpush1.bf16.msra.mxu0 %v1422
    %1839 = vmatprep.subr.bf16.mxu0 %v1427
    %1840 = vmatpush1.bf16.msra.mxu0 %v1426
    %1841 = vmatprep.mubr.bf16.mxu0 %v149
    %1842 = vmatmul.mubr.bf16.gmra.mrb[0].mxu0 %v148
    %v1843 = vpop.f32.mrb[0].mxu0
    %v1844 = vadd.f32 %v1803, %v1843
    %v1845 = vpop.f32.mrb[0].mxu0
    %v1846 = vadd.f32 %v1805, %v1845
    %v1847 = vpop.f32.mrb[0].mxu0
    %v1848 = vpop.f32.mrb[0].mxu0
    %1849 = vdwg.mxu0
    %1850 = vmatprep.subr.bf16.mxu0 %v1177
    %1851 = vmatpush1.bf16.msra.mxu0 %v1176
    %1852 = vmatprep.subr.bf16.mxu0 %v1181
    %1853 = vmatpush1.bf16.msra.mxu0 %v1180
    %1854 = vmatprep.subr.bf16.mxu0 %v1185
    %1855 = vmatpush1.bf16.msra.mxu0 %v1184
    %1856 = vmatprep.subr.bf16.mxu0 %v1189
    %1857 = vmatpush1.bf16.msra.mxu0 %v1188
    %1858 = vmatprep.subr.bf16.mxu0 %v1193
    %1859 = vmatpush1.bf16.msra.mxu0 %v1192
    %1860 = vmatprep.subr.bf16.mxu0 %v1197
    %1861 = vmatpush1.bf16.msra.mxu0 %v1196
    %1862 = vmatprep.subr.bf16.mxu0 %v1201
    %1863 = vmatpush1.bf16.msra.mxu0 %v1200
    %1864 = vmatprep.subr.bf16.mxu0 %v1205
    %1865 = vmatpush1.bf16.msra.mxu0 %v1204
    %1866 = vmatprep.subr.bf16.mxu0 %v1209
    %1867 = vmatpush1.bf16.msra.mxu0 %v1208
    %1868 = vmatprep.subr.bf16.mxu0 %v1213
    %1869 = vmatpush1.bf16.msra.mxu0 %v1212
    %1870 = vmatprep.subr.bf16.mxu0 %v1217
    %1871 = vmatpush1.bf16.msra.mxu0 %v1216
    %1872 = vmatprep.subr.bf16.mxu0 %v1221
    %1873 = vmatpush1.bf16.msra.mxu0 %v1220
    %1874 = vmatprep.subr.bf16.mxu0 %v1225
    %1875 = vmatpush1.bf16.msra.mxu0 %v1224
    %1876 = vmatprep.subr.bf16.mxu0 %v1229
    %1877 = vmatpush1.bf16.msra.mxu0 %v1228
    %1878 = vmatprep.subr.bf16.mxu0 %v1233
    %1879 = vmatpush1.bf16.msra.mxu0 %v1232
    %1880 = vmatprep.subr.bf16.mxu0 %v1237
    %1881 = vmatpush1.bf16.msra.mxu0 %v1236
    %1882 = vmatprep.mubr.bf16.mxu0 %v143
    %1883 = vmatmul.mubr.bf16.gmra.mrb[0].mxu0 %v142
    %v1884 = vpop.f32.mrb[0].mxu0
    %v1885 = vadd.f32 0.0, %v1884
    %v1886 = vpop.f32.mrb[0].mxu0
    %v1887 = vadd.f32 0.0, %v1886
    %v1888 = vpop.f32.mrb[0].mxu0
    %v1889 = vpop.f32.mrb[0].mxu0
    %1890 = vdwg.mxu0
    %1891 = vmatprep.subr.bf16.mxu0 %v1241
    %1892 = vmatpush1.bf16.msra.mxu0 %v1240
    %1893 = vmatprep.subr.bf16.mxu0 %v1245
    %1894 = vmatpush1.bf16.msra.mxu0 %v1244
    %1895 = vmatprep.subr.bf16.mxu0 %v1249
    %1896 = vmatpush1.bf16.msra.mxu0 %v1248
    %1897 = vmatprep.subr.bf16.mxu0 %v1253
    %1898 = vmatpush1.bf16.msra.mxu0 %v1252
    %1899 = vmatprep.subr.bf16.mxu0 %v1257
    %1900 = vmatpush1.bf16.msra.mxu0 %v1256
    %1901 = vmatprep.subr.bf16.mxu0 %v1261
    %1902 = vmatpush1.bf16.msra.mxu0 %v1260
    %1903 = vmatprep.subr.bf16.mxu0 %v1265
    %1904 = vmatpush1.bf16.msra.mxu0 %v1264
    %1905 = vmatprep.subr.bf16.mxu0 %v1269
    %1906 = vmatpush1.bf16.msra.mxu0 %v1268
    %1907 = vmatprep.subr.bf16.mxu0 %v1273
    %1908 = vmatpush1.bf16.msra.mxu0 %v1272
    %1909 = vmatprep.subr.bf16.mxu0 %v1277
    %1910 = vmatpush1.bf16.msra.mxu0 %v1276
    %1911 = vmatprep.subr.bf16.mxu0 %v1281
    %1912 = vmatpush1.bf16.msra.mxu0 %v1280
    %1913 = vmatprep.subr.bf16.mxu0 %v1285
    %1914 = vmatpush1.bf16.msra.mxu0 %v1284
    %1915 = vmatprep.subr.bf16.mxu0 %v1289
    %1916 = vmatpush1.bf16.msra.mxu0 %v1288
    %1917 = vmatprep.subr.bf16.mxu0 %v1293
    %1918 = vmatpush1.bf16.msra.mxu0 %v1292
    %1919 = vmatprep.subr.bf16.mxu0 %v1297
    %1920 = vmatpush1.bf16.msra.mxu0 %v1296
    %1921 = vmatprep.subr.bf16.mxu0 %v1301
    %1922 = vmatpush1.bf16.msra.mxu0 %v1300
    %1923 = vmatprep.mubr.bf16.mxu0 %v145
    %1924 = vmatmul.mubr.bf16.gmra.mrb[0].mxu0 %v144
    %v1925 = vpop.f32.mrb[0].mxu0
    %v1926 = vadd.f32 %v1885, %v1925
    %v1927 = vpop.f32.mrb[0].mxu0
    %v1928 = vadd.f32 %v1887, %v1927
    %v1929 = vpop.f32.mrb[0].mxu0
    %v1930 = vpop.f32.mrb[0].mxu0
    %1931 = vdwg.mxu0
    %1932 = vmatprep.subr.bf16.mxu0 %v1305
    %1933 = vmatpush1.bf16.msra.mxu0 %v1304
    %1934 = vmatprep.subr.bf16.mxu0 %v1309
    %1935 = vmatpush1.bf16.msra.mxu0 %v1308
    %1936 = vmatprep.subr.bf16.mxu0 %v1313
    %1937 = vmatpush1.bf16.msra.mxu0 %v1312
    %1938 = vmatprep.subr.bf16.mxu0 %v1317
    %1939 = vmatpush1.bf16.msra.mxu0 %v1316
    %1940 = vmatprep.subr.bf16.mxu0 %v1321
    %1941 = vmatpush1.bf16.msra.mxu0 %v1320
    %1942 = vmatprep.subr.bf16.mxu0 %v1325
    %1943 = vmatpush1.bf16.msra.mxu0 %v1324
    %1944 = vmatprep.subr.bf16.mxu0 %v1329
    %1945 = vmatpush1.bf16.msra.mxu0 %v1328
    %1946 = vmatprep.subr.bf16.mxu0 %v1333
    %1947 = vmatpush1.bf16.msra.mxu0 %v1332
    %1948 = vmatprep.subr.bf16.mxu0 %v1337
    %1949 = vmatpush1.bf16.msra.mxu0 %v1336
    %1950 = vmatprep.subr.bf16.mxu0 %v1341
    %1951 = vmatpush1.bf16.msra.mxu0 %v1340
    %1952 = vmatprep.subr.bf16.mxu0 %v1345
    %1953 = vmatpush1.bf16.msra.mxu0 %v1344
    %1954 = vmatprep.subr.bf16.mxu0 %v1349
    %1955 = vmatpush1.bf16.msra.mxu0 %v1348
    %1956 = vmatprep.subr.bf16.mxu0 %v1353
    %1957 = vmatpush1.bf16.msra.mxu0 %v1352
    %1958 = vmatprep.subr.bf16.mxu0 %v1357
    %1959 = vmatpush1.bf16.msra.mxu0 %v1356
    %1960 = vmatprep.subr.bf16.mxu0 %v1361
    %1961 = vmatpush1.bf16.msra.mxu0 %v1360
    %1962 = vmatprep.subr.bf16.mxu0 %v1365
    %1963 = vmatpush1.bf16.msra.mxu0 %v1364
    %1964 = vmatprep.mubr.bf16.mxu0 %v147
    %1965 = vmatmul.mubr.bf16.gmra.mrb[0].mxu0 %v146
    %v1966 = vpop.f32.mrb[0].mxu0
    %v1967 = vadd.f32 %v1926, %v1966
    %v1968 = vpop.f32.mrb[0].mxu0
    %v1969 = vadd.f32 %v1928, %v1968
    %v1970 = vpop.f32.mrb[0].mxu0
    %v1971 = vpop.f32.mrb[0].mxu0
    %1972 = vdwg.mxu0
    %1973 = vmatprep.subr.bf16.mxu0 %v1369
    %1974 = vmatpush1.bf16.msra.mxu0 %v1368
    %1975 = vmatprep.subr.bf16.mxu0 %v1373
    %1976 = vmatpush1.bf16.msra.mxu0 %v1372
    %1977 = vmatprep.subr.bf16.mxu0 %v1377
    %1978 = vmatpush1.bf16.msra.mxu0 %v1376
    %1979 = vmatprep.subr.bf16.mxu0 %v1381
    %1980 = vmatpush1.bf16.msra.mxu0 %v1380
    %1981 = vmatprep.subr.bf16.mxu0 %v1385
    %1982 = vmatpush1.bf16.msra.mxu0 %v1384
    %1983 = vmatprep.subr.bf16.mxu0 %v1389
    %1984 = vmatpush1.bf16.msra.mxu0 %v1388
    %1985 = vmatprep.subr.bf16.mxu0 %v1393
    %1986 = vmatpush1.bf16.msra.mxu0 %v1392
    %1987 = vmatprep.subr.bf16.mxu0 %v1397
    %1988 = vmatpush1.bf16.msra.mxu0 %v1396
    %1989 = vmatprep.subr.bf16.mxu0 %v1401
    %1990 = vmatpush1.bf16.msra.mxu0 %v1400
    %1991 = vmatprep.subr.bf16.mxu0 %v1405
    %1992 = vmatpush1.bf16.msra.mxu0 %v1404
    %1993 = vmatprep.subr.bf16.mxu0 %v1409
    %1994 = vmatpush1.bf16.msra.mxu0 %v1408
    %1995 = vmatprep.subr.bf16.mxu0 %v1413
    %1996 = vmatpush1.bf16.msra.mxu0 %v1412
    %1997 = vmatprep.subr.bf16.mxu0 %v1417
    %1998 = vmatpush1.bf16.msra.mxu0 %v1416
    %1999 = vmatprep.subr.bf16.mxu0 %v1421
    %2000 = vmatpush1.bf16.msra.mxu0 %v1420
    %2001 = vmatprep.subr.bf16.mxu0 %v1425
    %2002 = vmatpush1.bf16.msra.mxu0 %v1424
    %2003 = vmatprep.subr.bf16.mxu0 %v1429
    %2004 = vmatpush1.bf16.msra.mxu0 %v1428
    %2005 = vmatprep.mubr.bf16.mxu0 %v149
    %2006 = vmatmul.mubr.bf16.gmra.mrb[0].mxu0 %v148
    %v2007 = vpop.f32.mrb[0].mxu0
    %v2008 = vadd.f32 %v1967, %v2007
    %v2009 = vpop.f32.mrb[0].mxu0
    %v2010 = vadd.f32 %v1969, %v2009
    %v2011 = vpop.f32.mrb[0].mxu0
    %v2012 = vpop.f32.mrb[0].mxu0
    %2013 = vdwg.mxu0
    %v2014 = vld [vmem:[#allocation14] ss:$8 sm:$0xf]
    %s2015 = scalar_lea.vmem [#allocation14], 1
    %v2016 = vld [vmem:[%s2015] ss:$8 sm:$0xf]
    %v2017 = vrot.slane %v1844, 4
    %v2018 = vadd.f32 %v1844, %v2017
    %v2019 = vrot.slane %v2018, 2
    %v2020 = vadd.f32 %v2018, %v2019
    %v2021 = vrot.slane %v2020, 1
    %v2022 = vadd.f32 %v2020, %v2021
    %v2023 = vrot.slane %v1846, 4
    %v2024 = vadd.f32 %v1846, %v2023
    %v2025 = vrot.slane %v2024, 2
    %v2026 = vadd.f32 %v2024, %v2025
    %v2027 = vrot.slane %v2026, 1
    %v2028 = vadd.f32 %v2026, %v2027
    %v2029 = vrot.slane %v2008, 4
    %v2030 = vadd.f32 %v2008, %v2029
    %v2031 = vrot.slane %v2030, 2
    %v2032 = vadd.f32 %v2030, %v2031
    %v2033 = vrot.slane %v2032, 1
    %v2034 = vadd.f32 %v2032, %v2033
    %v2035 = vrot.slane %v2010, 4
    %v2036 = vadd.f32 %v2010, %v2035
    %v2037 = vrot.slane %v2036, 2
    %v2038 = vadd.f32 %v2036, %v2037
    %v2039 = vrot.slane %v2038, 1
    %v2040 = vadd.f32 %v2038, %v2039
    %v2041 = vrcp.pop 8.0
    %v2042 = vmul.f32 %v2022, %v2041
    %v2043 = vmul.f32 %v2028, %v2041
    %v2044 = vmul.f32 %v2034, %v2041
    %v2045 = vmul.f32 %v2040, %v2041
    %v2046 = vsub.f32 %v1844, %v2042
    %v2047 = vsub.f32 %v1846, %v2043
    %v2048 = vsub.f32 %v2008, %v2044
    %v2049 = vsub.f32 %v2010, %v2045
    %v2050 = vmul.f32 %v2046, %v2046
    %v2051 = vmul.f32 %v2047, %v2047
    %v2052 = vmul.f32 %v2048, %v2048
    %v2053 = vmul.f32 %v2049, %v2049
    %v2054 = vrot.slane %v2050, 4
    %v2055 = vadd.f32 %v2050, %v2054
    %v2056 = vrot.slane %v2055, 2
    %v2057 = vadd.f32 %v2055, %v2056
    %v2058 = vrot.slane %v2057, 1
    %v2059 = vadd.f32 %v2057, %v2058
    %v2060 = vrot.slane %v2051, 4
    %v2061 = vadd.f32 %v2051, %v2060
    %v2062 = vrot.slane %v2061, 2
    %v2063 = vadd.f32 %v2061, %v2062
    %v2064 = vrot.slane %v2063, 1
    %v2065 = vadd.f32 %v2063, %v2064
    %v2066 = vrot.slane %v2052, 4
    %v2067 = vadd.f32 %v2052, %v2066
    %v2068 = vrot.slane %v2067, 2
    %v2069 = vadd.f32 %v2067, %v2068
    %v2070 = vrot.slane %v2069, 1
    %v2071 = vadd.f32 %v2069, %v2070
    %v2072 = vrot.slane %v2053, 4
    %v2073 = vadd.f32 %v2053, %v2072
    %v2074 = vrot.slane %v2073, 2
    %v2075 = vadd.f32 %v2073, %v2074
    %v2076 = vrot.slane %v2075, 1
    %v2077 = vadd.f32 %v2075, %v2076
    %v2078 = vmul.f32 %v2059, %v2041
    %v2079 = vmul.f32 %v2065, %v2041
    %v2080 = vmul.f32 %v2071, %v2041
    %v2081 = vmul.f32 %v2077, %v2041
    %v2082 = vadd.f32 %v2078, 1e-05
    %v2083 = vadd.f32 %v2079, 1e-05
    %v2084 = vadd.f32 %v2080, 1e-05
    %v2085 = vadd.f32 %v2081, 1e-05
    %v2086 = vrsqrt.pop %v2082
    %v2087 = vrsqrt.pop %v2083
    %v2088 = vrsqrt.pop %v2084
    %v2089 = vrsqrt.pop %v2085
    %v2094 = vcombine.low %v2086, %v2087
    %v2095 = vcombine.low %v2088, %v2089
    %v2097 = vunpack.c.l.s4 1966171168
    %v2098 = vunpack.c.0.s8 %v2097
    %v2099 = vlaneseq
    %v2100 = vshrl.u32 %v2099, 7
    %v2101 = vsub.s32 %v2098, %v2100
    %v2102 = vrot.slane %v2094, %v2101
    %v2104 = vunpack.c.l.s4 1966171168
    %v2105 = vunpack.c.0.s8 %v2104
    %v2106 = vlaneseq
    %v2107 = vshrl.u32 %v2106, 7
    %v2108 = vsub.s32 %v2105, %v2107
    %v2109 = vrot.slane %v2095, %v2108
    %v2110 = vcombine.low %v2102, %v2109
    %v2112 = vunpack.c.l.s4 1966171168
    %v2113 = vunpack.c.0.s8 %v2112
    %v2114 = vlaneseq
    %v2115 = vshrl.u32 %v2114, 7
    %v2116 = vsub.s32 %v2113, %v2115
    %v2117 = vrot.slane %v2110, %v2116
    %v2119 = vmul.f32 %v2014, %v2117
    %v2121 = vlaneseq
    %v2122 = vshrl.u32 %v2121, 7
    %v2123 = vsub.s32 0, %v2122
    %v2124 = vrot.slane %v2119, %v2123
    %v2125 = vlaneseq
    %v2126 = vshrl.u32 %v2125, 7
    %v2127 = vsub.s32 1, %v2126
    %v2128 = vrot.slane %v2119, %v2127
    %v2129 = vlaneseq
    %v2130 = vshrl.u32 %v2129, 7
    %v2131 = vsub.s32 2, %v2130
    %v2132 = vrot.slane %v2119, %v2131
    %v2133 = vlaneseq
    %v2134 = vshrl.u32 %v2133, 7
    %v2135 = vsub.s32 3, %v2134
    %v2136 = vrot.slane %v2119, %v2135
    %v2141 = vmul.f32 %v2046, %v2124
    %v2142 = vmul.f32 %v2047, %v2128
    %v2143 = vmul.f32 %v2048, %v2132
    %v2144 = vmul.f32 %v2049, %v2136
    %v2146 = vlaneseq
    %v2147 = vshrl.u32 %v2146, 7
    %v2148 = vsub.s32 0, %v2147
    %v2149 = vrot.slane %v2016, %v2148
    %v2150 = vlaneseq
    %v2151 = vshrl.u32 %v2150, 7
    %v2152 = vsub.s32 1, %v2151
    %v2153 = vrot.slane %v2016, %v2152
    %v2154 = vlaneseq
    %v2155 = vshrl.u32 %v2154, 7
    %v2156 = vsub.s32 2, %v2155
    %v2157 = vrot.slane %v2016, %v2156
    %v2158 = vlaneseq
    %v2159 = vshrl.u32 %v2158, 7
    %v2160 = vsub.s32 3, %v2159
    %v2161 = vrot.slane %v2016, %v2160
    %v2166 = vadd.f32 %v2141, %v2149
    %v2167 = vadd.f32 %v2142, %v2153
    %v2168 = vadd.f32 %v2143, %v2157
    %v2169 = vadd.f32 %v2144, %v2161
    %vm2170 = vcmp.gt.f32.partialorder %v2166, 0.0
    %vm2171 = vcmp.gt.f32.partialorder %v2167, 0.0
    %vm2172 = vcmp.gt.f32.partialorder %v2168, 0.0
    %vm2173 = vcmp.gt.f32.partialorder %v2169, 0.0
    %v2174 = vmul.f32 %v2166, 0.2
    %v2175 = vmul.f32 %v2167, 0.2
    %v2176 = vmul.f32 %v2168, 0.2
    %v2177 = vmul.f32 %v2169, 0.2
    %v2178 = vsel %vm2170, %v2166, %v2174
    %v2179 = vsel %vm2171, %v2167, %v2175
    %v2180 = vsel %vm2172, %v2168, %v2176
    %v2181 = vsel %vm2173, %v2169, %v2177
    %v2182 = vld [vmem:[#allocation5] sm:$0xff]
    %v2183 = vld [vmem:[#allocation5 + $0x8] sm:$0xff]
    %v2184 = vpack.c.bf16 %v2182, %v2182
    %v2185 = vpack.c.bf16 %v2183, %v2183
    %v2186 = vld [vmem:[#allocation8] sm:$0xff]
    %v2187 = vld [vmem:[#allocation8 + $0x8] sm:$0xff]
    %v2188 = vld [vmem:[#allocation8 + $0x10] sm:$0xff]
    %v2189 = vld [vmem:[#allocation8 + $0x18] sm:$0xff]
    %v2190 = vld [vmem:[#allocation8 + $0x20] sm:$0xff]
    %v2191 = vld [vmem:[#allocation8 + $0x28] sm:$0xff]
    %v2192 = vld [vmem:[#allocation8 + $0x30] sm:$0xff]
    %v2193 = vld [vmem:[#allocation8 + $0x38] sm:$0xff]
    %v2194 = vld [vmem:[#allocation8 + $0x40] sm:$0xff]
    %v2195 = vld [vmem:[#allocation8 + $0x48] sm:$0xff]
    %v2196 = vld [vmem:[#allocation8 + $0x50] sm:$0xff]
    %v2197 = vld [vmem:[#allocation8 + $0x58] sm:$0xff]
    %v2198 = vld [vmem:[#allocation8 + $0x60] sm:$0xff]
    %v2199 = vld [vmem:[#allocation8 + $0x68] sm:$0xff]
    %v2200 = vld [vmem:[#allocation8 + $0x70] sm:$0xff]
    %v2201 = vld [vmem:[#allocation8 + $0x78] sm:$0xff]
    %v2202 = vld [vmem:[#allocation8 + $0x80] sm:$0xff]
    %v2203 = vld [vmem:[#allocation8 + $0x88] sm:$0xff]
    %v2204 = vld [vmem:[#allocation8 + $0x90] sm:$0xff]
    %v2205 = vld [vmem:[#allocation8 + $0x98] sm:$0xff]
    %v2206 = vld [vmem:[#allocation8 + $0xa0] sm:$0xff]
    %v2207 = vld [vmem:[#allocation8 + $0xa8] sm:$0xff]
    %v2208 = vld [vmem:[#allocation8 + $0xb0] sm:$0xff]
    %v2209 = vld [vmem:[#allocation8 + $0xb8] sm:$0xff]
    %v2210 = vld [vmem:[#allocation8 + $0xc0] sm:$0xff]
    %v2211 = vld [vmem:[#allocation8 + $0xc8] sm:$0xff]
    %v2212 = vld [vmem:[#allocation8 + $0xd0] sm:$0xff]
    %v2213 = vld [vmem:[#allocation8 + $0xd8] sm:$0xff]
    %v2214 = vld [vmem:[#allocation8 + $0xe0] sm:$0xff]
    %v2215 = vld [vmem:[#allocation8 + $0xe8] sm:$0xff]
    %v2216 = vld [vmem:[#allocation8 + $0xf0] sm:$0xff]
    %v2217 = vld [vmem:[#allocation8 + $0xf8] sm:$0xff]
    %v2218 = vld [vmem:[#allocation8 + $0x100] sm:$0xff]
    %v2219 = vld [vmem:[#allocation8 + $0x108] sm:$0xff]
    %v2220 = vld [vmem:[#allocation8 + $0x110] sm:$0xff]
    %v2221 = vld [vmem:[#allocation8 + $0x118] sm:$0xff]
    %v2222 = vld [vmem:[#allocation8 + $0x120] sm:$0xff]
    %v2223 = vld [vmem:[#allocation8 + $0x128] sm:$0xff]
    %v2224 = vld [vmem:[#allocation8 + $0x130] sm:$0xff]
    %v2225 = vld [vmem:[#allocation8 + $0x138] sm:$0xff]
    %v2226 = vld [vmem:[#allocation8 + $0x140] sm:$0xff]
    %v2227 = vld [vmem:[#allocation8 + $0x148] sm:$0xff]
    %v2228 = vld [vmem:[#allocation8 + $0x150] sm:$0xff]
    %v2229 = vld [vmem:[#allocation8 + $0x158] sm:$0xff]
    %v2230 = vld [vmem:[#allocation8 + $0x160] sm:$0xff]
    %v2231 = vld [vmem:[#allocation8 + $0x168] sm:$0xff]
    %v2232 = vld [vmem:[#allocation8 + $0x170] sm:$0xff]
    %v2233 = vld [vmem:[#allocation8 + $0x178] sm:$0xff]
    %v2234 = vld [vmem:[#allocation8 + $0x180] sm:$0xff]
    %v2235 = vld [vmem:[#allocation8 + $0x188] sm:$0xff]
    %v2236 = vld [vmem:[#allocation8 + $0x190] sm:$0xff]
    %v2237 = vld [vmem:[#allocation8 + $0x198] sm:$0xff]
    %v2238 = vld [vmem:[#allocation8 + $0x1a0] sm:$0xff]
    %v2239 = vld [vmem:[#allocation8 + $0x1a8] sm:$0xff]
    %v2240 = vld [vmem:[#allocation8 + $0x1b0] sm:$0xff]
    %v2241 = vld [vmem:[#allocation8 + $0x1b8] sm:$0xff]
    %v2242 = vld [vmem:[#allocation8 + $0x1c0] sm:$0xff]
    %v2243 = vld [vmem:[#allocation8 + $0x1c8] sm:$0xff]
    %v2244 = vld [vmem:[#allocation8 + $0x1d0] sm:$0xff]
    %v2245 = vld [vmem:[#allocation8 + $0x1d8] sm:$0xff]
    %v2246 = vld [vmem:[#allocation8 + $0x1e0] sm:$0xff]
    %v2247 = vld [vmem:[#allocation8 + $0x1e8] sm:$0xff]
    %v2248 = vld [vmem:[#allocation8 + $0x1f0] sm:$0xff]
    %v2249 = vld [vmem:[#allocation8 + $0x1f8] sm:$0xff]
    %v2314 = vunpack.c.l.b16 %v2186
    %v2315 = vunpack.c.h.b16 %v2186
    %v2316 = vunpack.c.l.b16 %v2187
    %v2317 = vunpack.c.h.b16 %v2187
    %v2318 = vunpack.c.l.b16 %v2188
    %v2319 = vunpack.c.h.b16 %v2188
    %v2320 = vunpack.c.l.b16 %v2189
    %v2321 = vunpack.c.h.b16 %v2189
    %v2322 = vunpack.c.l.b16 %v2190
    %v2323 = vunpack.c.h.b16 %v2190
    %v2324 = vunpack.c.l.b16 %v2191
    %v2325 = vunpack.c.h.b16 %v2191
    %v2326 = vunpack.c.l.b16 %v2192
    %v2327 = vunpack.c.h.b16 %v2192
    %v2328 = vunpack.c.l.b16 %v2193
    %v2329 = vunpack.c.h.b16 %v2193
    %v2330 = vunpack.c.l.b16 %v2194
    %v2331 = vunpack.c.h.b16 %v2194
    %v2332 = vunpack.c.l.b16 %v2195
    %v2333 = vunpack.c.h.b16 %v2195
    %v2334 = vunpack.c.l.b16 %v2196
    %v2335 = vunpack.c.h.b16 %v2196
    %v2336 = vunpack.c.l.b16 %v2197
    %v2337 = vunpack.c.h.b16 %v2197
    %v2338 = vunpack.c.l.b16 %v2198
    %v2339 = vunpack.c.h.b16 %v2198
    %v2340 = vunpack.c.l.b16 %v2199
    %v2341 = vunpack.c.h.b16 %v2199
    %v2342 = vunpack.c.l.b16 %v2200
    %v2343 = vunpack.c.h.b16 %v2200
    %v2344 = vunpack.c.l.b16 %v2201
    %v2345 = vunpack.c.h.b16 %v2201
    %v2346 = vunpack.c.l.b16 %v2202
    %v2347 = vunpack.c.h.b16 %v2202
    %v2348 = vunpack.c.l.b16 %v2203
    %v2349 = vunpack.c.h.b16 %v2203
    %v2350 = vunpack.c.l.b16 %v2204
    %v2351 = vunpack.c.h.b16 %v2204
    %v2352 = vunpack.c.l.b16 %v2205
    %v2353 = vunpack.c.h.b16 %v2205
    %v2354 = vunpack.c.l.b16 %v2206
    %v2355 = vunpack.c.h.b16 %v2206
    %v2356 = vunpack.c.l.b16 %v2207
    %v2357 = vunpack.c.h.b16 %v2207
    %v2358 = vunpack.c.l.b16 %v2208
    %v2359 = vunpack.c.h.b16 %v2208
    %v2360 = vunpack.c.l.b16 %v2209
    %v2361 = vunpack.c.h.b16 %v2209
    %v2362 = vunpack.c.l.b16 %v2210
    %v2363 = vunpack.c.h.b16 %v2210
    %v2364 = vunpack.c.l.b16 %v2211
    %v2365 = vunpack.c.h.b16 %v2211
    %v2366 = vunpack.c.l.b16 %v2212
    %v2367 = vunpack.c.h.b16 %v2212
    %v2368 = vunpack.c.l.b16 %v2213
    %v2369 = vunpack.c.h.b16 %v2213
    %v2370 = vunpack.c.l.b16 %v2214
    %v2371 = vunpack.c.h.b16 %v2214
    %v2372 = vunpack.c.l.b16 %v2215
    %v2373 = vunpack.c.h.b16 %v2215
    %v2374 = vunpack.c.l.b16 %v2216
    %v2375 = vunpack.c.h.b16 %v2216
    %v2376 = vunpack.c.l.b16 %v2217
    %v2377 = vunpack.c.h.b16 %v2217
    %v2378 = vunpack.c.l.b16 %v2218
    %v2379 = vunpack.c.h.b16 %v2218
    %v2380 = vunpack.c.l.b16 %v2219
    %v2381 = vunpack.c.h.b16 %v2219
    %v2382 = vunpack.c.l.b16 %v2220
    %v2383 = vunpack.c.h.b16 %v2220
    %v2384 = vunpack.c.l.b16 %v2221
    %v2385 = vunpack.c.h.b16 %v2221
    %v2386 = vunpack.c.l.b16 %v2222
    %v2387 = vunpack.c.h.b16 %v2222
    %v2388 = vunpack.c.l.b16 %v2223
    %v2389 = vunpack.c.h.b16 %v2223
    %v2390 = vunpack.c.l.b16 %v2224
    %v2391 = vunpack.c.h.b16 %v2224
    %v2392 = vunpack.c.l.b16 %v2225
    %v2393 = vunpack.c.h.b16 %v2225
    %v2394 = vunpack.c.l.b16 %v2226
    %v2395 = vunpack.c.h.b16 %v2226
    %v2396 = vunpack.c.l.b16 %v2227
    %v2397 = vunpack.c.h.b16 %v2227
    %v2398 = vunpack.c.l.b16 %v2228
    %v2399 = vunpack.c.h.b16 %v2228
    %v2400 = vunpack.c.l.b16 %v2229
    %v2401 = vunpack.c.h.b16 %v2229
    %v2402 = vunpack.c.l.b16 %v2230
    %v2403 = vunpack.c.h.b16 %v2230
    %v2404 = vunpack.c.l.b16 %v2231
    %v2405 = vunpack.c.h.b16 %v2231
    %v2406 = vunpack.c.l.b16 %v2232
    %v2407 = vunpack.c.h.b16 %v2232
    %v2408 = vunpack.c.l.b16 %v2233
    %v2409 = vunpack.c.h.b16 %v2233
    %v2410 = vunpack.c.l.b16 %v2234
    %v2411 = vunpack.c.h.b16 %v2234
    %v2412 = vunpack.c.l.b16 %v2235
    %v2413 = vunpack.c.h.b16 %v2235
    %v2414 = vunpack.c.l.b16 %v2236
    %v2415 = vunpack.c.h.b16 %v2236
    %v2416 = vunpack.c.l.b16 %v2237
    %v2417 = vunpack.c.h.b16 %v2237
    %v2418 = vunpack.c.l.b16 %v2238
    %v2419 = vunpack.c.h.b16 %v2238
    %v2420 = vunpack.c.l.b16 %v2239
    %v2421 = vunpack.c.h.b16 %v2239
    %v2422 = vunpack.c.l.b16 %v2240
    %v2423 = vunpack.c.h.b16 %v2240
    %v2424 = vunpack.c.l.b16 %v2241
    %v2425 = vunpack.c.h.b16 %v2241
    %v2426 = vunpack.c.l.b16 %v2242
    %v2427 = vunpack.c.h.b16 %v2242
    %v2428 = vunpack.c.l.b16 %v2243
    %v2429 = vunpack.c.h.b16 %v2243
    %v2430 = vunpack.c.l.b16 %v2244
    %v2431 = vunpack.c.h.b16 %v2244
    %v2432 = vunpack.c.l.b16 %v2245
    %v2433 = vunpack.c.h.b16 %v2245
    %v2434 = vunpack.c.l.b16 %v2246
    %v2435 = vunpack.c.h.b16 %v2246
    %v2436 = vunpack.c.l.b16 %v2247
    %v2437 = vunpack.c.h.b16 %v2247
    %v2438 = vunpack.c.l.b16 %v2248
    %v2439 = vunpack.c.h.b16 %v2248
    %v2440 = vunpack.c.l.b16 %v2249
    %v2441 = vunpack.c.h.b16 %v2249
    %v2442 = vpack.c.b16 %v2318, %v2314
    %v2443 = vpack.c.b16 %v2319, %v2315
    %v2444 = vpack.c.b16 %v2320, %v2316
    %v2445 = vpack.c.b16 %v2321, %v2317
    %v2446 = vpack.c.b16 %v2326, %v2322
    %v2447 = vpack.c.b16 %v2327, %v2323
    %v2448 = vpack.c.b16 %v2328, %v2324
    %v2449 = vpack.c.b16 %v2329, %v2325
    %v2450 = vpack.c.b16 %v2334, %v2330
    %v2451 = vpack.c.b16 %v2335, %v2331
    %v2452 = vpack.c.b16 %v2336, %v2332
    %v2453 = vpack.c.b16 %v2337, %v2333
    %v2454 = vpack.c.b16 %v2342, %v2338
    %v2455 = vpack.c.b16 %v2343, %v2339
    %v2456 = vpack.c.b16 %v2344, %v2340
    %v2457 = vpack.c.b16 %v2345, %v2341
    %v2458 = vpack.c.b16 %v2350, %v2346
    %v2459 = vpack.c.b16 %v2351, %v2347
    %v2460 = vpack.c.b16 %v2352, %v2348
    %v2461 = vpack.c.b16 %v2353, %v2349
    %v2462 = vpack.c.b16 %v2358, %v2354
    %v2463 = vpack.c.b16 %v2359, %v2355
    %v2464 = vpack.c.b16 %v2360, %v2356
    %v2465 = vpack.c.b16 %v2361, %v2357
    %v2466 = vpack.c.b16 %v2366, %v2362
    %v2467 = vpack.c.b16 %v2367, %v2363
    %v2468 = vpack.c.b16 %v2368, %v2364
    %v2469 = vpack.c.b16 %v2369, %v2365
    %v2470 = vpack.c.b16 %v2374, %v2370
    %v2471 = vpack.c.b16 %v2375, %v2371
    %v2472 = vpack.c.b16 %v2376, %v2372
    %v2473 = vpack.c.b16 %v2377, %v2373
    %v2474 = vpack.c.b16 %v2382, %v2378
    %v2475 = vpack.c.b16 %v2383, %v2379
    %v2476 = vpack.c.b16 %v2384, %v2380
    %v2477 = vpack.c.b16 %v2385, %v2381
    %v2478 = vpack.c.b16 %v2390, %v2386
    %v2479 = vpack.c.b16 %v2391, %v2387
    %v2480 = vpack.c.b16 %v2392, %v2388
    %v2481 = vpack.c.b16 %v2393, %v2389
    %v2482 = vpack.c.b16 %v2398, %v2394
    %v2483 = vpack.c.b16 %v2399, %v2395
    %v2484 = vpack.c.b16 %v2400, %v2396
    %v2485 = vpack.c.b16 %v2401, %v2397
    %v2486 = vpack.c.b16 %v2406, %v2402
    %v2487 = vpack.c.b16 %v2407, %v2403
    %v2488 = vpack.c.b16 %v2408, %v2404
    %v2489 = vpack.c.b16 %v2409, %v2405
    %v2490 = vpack.c.b16 %v2414, %v2410
    %v2491 = vpack.c.b16 %v2415, %v2411
    %v2492 = vpack.c.b16 %v2416, %v2412
    %v2493 = vpack.c.b16 %v2417, %v2413
    %v2494 = vpack.c.b16 %v2422, %v2418
    %v2495 = vpack.c.b16 %v2423, %v2419
    %v2496 = vpack.c.b16 %v2424, %v2420
    %v2497 = vpack.c.b16 %v2425, %v2421
    %v2498 = vpack.c.b16 %v2430, %v2426
    %v2499 = vpack.c.b16 %v2431, %v2427
    %v2500 = vpack.c.b16 %v2432, %v2428
    %v2501 = vpack.c.b16 %v2433, %v2429
    %v2502 = vpack.c.b16 %v2438, %v2434
    %v2503 = vpack.c.b16 %v2439, %v2435
    %v2504 = vpack.c.b16 %v2440, %v2436
    %v2505 = vpack.c.b16 %v2441, %v2437
    %2570 = vmatprep.subr.bf16.mxu0 %v2443
    %2571 = vmatpush1.bf16.msra.mxu0 %v2442
    %2572 = vmatprep.subr.bf16.mxu0 %v2447
    %2573 = vmatpush1.bf16.msra.mxu0 %v2446
    %2574 = vmatprep.subr.bf16.mxu0 %v2451
    %2575 = vmatpush1.bf16.msra.mxu0 %v2450
    %2576 = vmatprep.subr.bf16.mxu0 %v2455
    %2577 = vmatpush1.bf16.msra.mxu0 %v2454
    %2578 = vmatprep.subr.bf16.mxu0 %v2459
    %2579 = vmatpush1.bf16.msra.mxu0 %v2458
    %2580 = vmatprep.subr.bf16.mxu0 %v2463
    %2581 = vmatpush1.bf16.msra.mxu0 %v2462
    %2582 = vmatprep.subr.bf16.mxu0 %v2467
    %2583 = vmatpush1.bf16.msra.mxu0 %v2466
    %2584 = vmatprep.subr.bf16.mxu0 %v2471
    %2585 = vmatpush1.bf16.msra.mxu0 %v2470
    %2586 = vmatprep.subr.bf16.mxu0 %v2475
    %2587 = vmatpush1.bf16.msra.mxu0 %v2474
    %2588 = vmatprep.subr.bf16.mxu0 %v2479
    %2589 = vmatpush1.bf16.msra.mxu0 %v2478
    %2590 = vmatprep.subr.bf16.mxu0 %v2483
    %2591 = vmatpush1.bf16.msra.mxu0 %v2482
    %2592 = vmatprep.subr.bf16.mxu0 %v2487
    %2593 = vmatpush1.bf16.msra.mxu0 %v2486
    %2594 = vmatprep.subr.bf16.mxu0 %v2491
    %2595 = vmatpush1.bf16.msra.mxu0 %v2490
    %2596 = vmatprep.subr.bf16.mxu0 %v2495
    %2597 = vmatpush1.bf16.msra.mxu0 %v2494
    %2598 = vmatprep.subr.bf16.mxu0 %v2499
    %2599 = vmatpush1.bf16.msra.mxu0 %v2498
    %2600 = vmatprep.subr.bf16.mxu0 %v2503
    %2601 = vmatpush1.bf16.msra.mxu0 %v2502
    %2602 = vmatprep.mubr.bf16.mxu0 %v2185
    %2603 = vmatmul.mubr.bf16.gmra.mrb[0].mxu0 %v2184
    %v2604 = vpop.f32.mrb[0].mxu0
    %v2605 = vadd.f32 0.0, %v2604
    %v2606 = vpop.f32.mrb[0].mxu0
    %v2607 = vadd.f32 0.0, %v2606
    %v2608 = vpop.f32.mrb[0].mxu0
    %v2609 = vpop.f32.mrb[0].mxu0
    %2610 = vdwg.mxu0
    %2611 = vmatprep.subr.bf16.mxu0 %v2445
    %2612 = vmatpush1.bf16.msra.mxu0 %v2444
    %2613 = vmatprep.subr.bf16.mxu0 %v2449
    %2614 = vmatpush1.bf16.msra.mxu0 %v2448
    %2615 = vmatprep.subr.bf16.mxu0 %v2453
    %2616 = vmatpush1.bf16.msra.mxu0 %v2452
    %2617 = vmatprep.subr.bf16.mxu0 %v2457
    %2618 = vmatpush1.bf16.msra.mxu0 %v2456
    %2619 = vmatprep.subr.bf16.mxu0 %v2461
    %2620 = vmatpush1.bf16.msra.mxu0 %v2460
    %2621 = vmatprep.subr.bf16.mxu0 %v2465
    %2622 = vmatpush1.bf16.msra.mxu0 %v2464
    %2623 = vmatprep.subr.bf16.mxu0 %v2469
    %2624 = vmatpush1.bf16.msra.mxu0 %v2468
    %2625 = vmatprep.subr.bf16.mxu0 %v2473
    %2626 = vmatpush1.bf16.msra.mxu0 %v2472
    %2627 = vmatprep.subr.bf16.mxu0 %v2477
    %2628 = vmatpush1.bf16.msra.mxu0 %v2476
    %2629 = vmatprep.subr.bf16.mxu0 %v2481
    %2630 = vmatpush1.bf16.msra.mxu0 %v2480
    %2631 = vmatprep.subr.bf16.mxu0 %v2485
    %2632 = vmatpush1.bf16.msra.mxu0 %v2484
    %2633 = vmatprep.subr.bf16.mxu0 %v2489
    %2634 = vmatpush1.bf16.msra.mxu0 %v2488
    %2635 = vmatprep.subr.bf16.mxu0 %v2493
    %2636 = vmatpush1.bf16.msra.mxu0 %v2492
    %2637 = vmatprep.subr.bf16.mxu0 %v2497
    %2638 = vmatpush1.bf16.msra.mxu0 %v2496
    %2639 = vmatprep.subr.bf16.mxu0 %v2501
    %2640 = vmatpush1.bf16.msra.mxu0 %v2500
    %2641 = vmatprep.subr.bf16.mxu0 %v2505
    %2642 = vmatpush1.bf16.msra.mxu0 %v2504
    %2643 = vmatprep.mubr.bf16.mxu0 %v2185
    %2644 = vmatmul.mubr.bf16.gmra.mrb[0].mxu0 %v2184
    %v2645 = vpop.f32.mrb[0].mxu0
    %v2646 = vadd.f32 0.0, %v2645
    %v2647 = vpop.f32.mrb[0].mxu0
    %v2648 = vadd.f32 0.0, %v2647
    %v2649 = vpop.f32.mrb[0].mxu0
    %v2650 = vpop.f32.mrb[0].mxu0
    %2651 = vdwg.mxu0
    %s2652 = scalar_lea.vmem [#allocation14], 2
    %v2653 = vld [vmem:[%s2652] ss:$8 sm:$0xf]
    %s2654 = scalar_lea.vmem [#allocation14], 3
    %v2655 = vld [vmem:[%s2654] ss:$8 sm:$0xf]
    %v2656 = vrot.slane %v2605, 4
    %v2657 = vadd.f32 %v2605, %v2656
    %v2658 = vrot.slane %v2657, 2
    %v2659 = vadd.f32 %v2657, %v2658
    %v2660 = vrot.slane %v2659, 1
    %v2661 = vadd.f32 %v2659, %v2660
    %v2662 = vrot.slane %v2607, 4
    %v2663 = vadd.f32 %v2607, %v2662
    %v2664 = vrot.slane %v2663, 2
    %v2665 = vadd.f32 %v2663, %v2664
    %v2666 = vrot.slane %v2665, 1
    %v2667 = vadd.f32 %v2665, %v2666
    %v2668 = vrot.slane %v2646, 4
    %v2669 = vadd.f32 %v2646, %v2668
    %v2670 = vrot.slane %v2669, 2
    %v2671 = vadd.f32 %v2669, %v2670
    %v2672 = vrot.slane %v2671, 1
    %v2673 = vadd.f32 %v2671, %v2672
    %v2674 = vrot.slane %v2648, 4
    %v2675 = vadd.f32 %v2648, %v2674
    %v2676 = vrot.slane %v2675, 2
    %v2677 = vadd.f32 %v2675, %v2676
    %v2678 = vrot.slane %v2677, 1
    %v2679 = vadd.f32 %v2677, %v2678
    %v2680 = vmul.f32 %v2661, %v2041
    %v2681 = vmul.f32 %v2667, %v2041
    %v2682 = vmul.f32 %v2673, %v2041
    %v2683 = vmul.f32 %v2679, %v2041
    %v2684 = vsub.f32 %v2605, %v2680
    %v2685 = vsub.f32 %v2607, %v2681
    %v2686 = vsub.f32 %v2646, %v2682
    %v2687 = vsub.f32 %v2648, %v2683
    %v2688 = vmul.f32 %v2684, %v2684
    %v2689 = vmul.f32 %v2685, %v2685
    %v2690 = vmul.f32 %v2686, %v2686
    %v2691 = vmul.f32 %v2687, %v2687
    %v2692 = vrot.slane %v2688, 4
    %v2693 = vadd.f32 %v2688, %v2692
    %v2694 = vrot.slane %v2693, 2
    %v2695 = vadd.f32 %v2693, %v2694
    %v2696 = vrot.slane %v2695, 1
    %v2697 = vadd.f32 %v2695, %v2696
    %v2698 = vrot.slane %v2689, 4
    %v2699 = vadd.f32 %v2689, %v2698
    %v2700 = vrot.slane %v2699, 2
    %v2701 = vadd.f32 %v2699, %v2700
    %v2702 = vrot.slane %v2701, 1
    %v2703 = vadd.f32 %v2701, %v2702
    %v2704 = vrot.slane %v2690, 4
    %v2705 = vadd.f32 %v2690, %v2704
    %v2706 = vrot.slane %v2705, 2
    %v2707 = vadd.f32 %v2705, %v2706
    %v2708 = vrot.slane %v2707, 1
    %v2709 = vadd.f32 %v2707, %v2708
    %v2710 = vrot.slane %v2691, 4
    %v2711 = vadd.f32 %v2691, %v2710
    %v2712 = vrot.slane %v2711, 2
    %v2713 = vadd.f32 %v2711, %v2712
    %v2714 = vrot.slane %v2713, 1
    %v2715 = vadd.f32 %v2713, %v2714
    %v2716 = vmul.f32 %v2697, %v2041
    %v2717 = vmul.f32 %v2703, %v2041
    %v2718 = vmul.f32 %v2709, %v2041
    %v2719 = vmul.f32 %v2715, %v2041
    %v2720 = vadd.f32 %v2716, 1e-05
    %v2721 = vadd.f32 %v2717, 1e-05
    %v2722 = vadd.f32 %v2718, 1e-05
    %v2723 = vadd.f32 %v2719, 1e-05
    %v2724 = vrsqrt.pop %v2720
    %v2725 = vrsqrt.pop %v2721
    %v2726 = vrsqrt.pop %v2722
    %v2727 = vrsqrt.pop %v2723
    %v2732 = vcombine.low %v2724, %v2725
    %v2733 = vcombine.low %v2726, %v2727
    %v2735 = vunpack.c.l.s4 1966171168
    %v2736 = vunpack.c.0.s8 %v2735
    %v2737 = vlaneseq
    %v2738 = vshrl.u32 %v2737, 7
    %v2739 = vsub.s32 %v2736, %v2738
    %v2740 = vrot.slane %v2732, %v2739
    %v2742 = vunpack.c.l.s4 1966171168
    %v2743 = vunpack.c.0.s8 %v2742
    %v2744 = vlaneseq
    %v2745 = vshrl.u32 %v2744, 7
    %v2746 = vsub.s32 %v2743, %v2745
    %v2747 = vrot.slane %v2733, %v2746
    %v2748 = vcombine.low %v2740, %v2747
    %v2750 = vunpack.c.l.s4 1966171168
    %v2751 = vunpack.c.0.s8 %v2750
    %v2752 = vlaneseq
    %v2753 = vshrl.u32 %v2752, 7
    %v2754 = vsub.s32 %v2751, %v2753
    %v2755 = vrot.slane %v2748, %v2754
    %v2757 = vmul.f32 %v2653, %v2755
    %v2759 = vlaneseq
    %v2760 = vshrl.u32 %v2759, 7
    %v2761 = vsub.s32 0, %v2760
    %v2762 = vrot.slane %v2757, %v2761
    %v2763 = vlaneseq
    %v2764 = vshrl.u32 %v2763, 7
    %v2765 = vsub.s32 1, %v2764
    %v2766 = vrot.slane %v2757, %v2765
    %v2767 = vlaneseq
    %v2768 = vshrl.u32 %v2767, 7
    %v2769 = vsub.s32 2, %v2768
    %v2770 = vrot.slane %v2757, %v2769
    %v2771 = vlaneseq
    %v2772 = vshrl.u32 %v2771, 7
    %v2773 = vsub.s32 3, %v2772
    %v2774 = vrot.slane %v2757, %v2773
    %v2779 = vmul.f32 %v2684, %v2762
    %v2780 = vmul.f32 %v2685, %v2766
    %v2781 = vmul.f32 %v2686, %v2770
    %v2782 = vmul.f32 %v2687, %v2774
    %v2784 = vlaneseq
    %v2785 = vshrl.u32 %v2784, 7
    %v2786 = vsub.s32 0, %v2785
    %v2787 = vrot.slane %v2655, %v2786
    %v2788 = vlaneseq
    %v2789 = vshrl.u32 %v2788, 7
    %v2790 = vsub.s32 1, %v2789
    %v2791 = vrot.slane %v2655, %v2790
    %v2792 = vlaneseq
    %v2793 = vshrl.u32 %v2792, 7
    %v2794 = vsub.s32 2, %v2793
    %v2795 = vrot.slane %v2655, %v2794
    %v2796 = vlaneseq
    %v2797 = vshrl.u32 %v2796, 7
    %v2798 = vsub.s32 3, %v2797
    %v2799 = vrot.slane %v2655, %v2798
    %v2804 = vadd.f32 %v2779, %v2787
    %v2805 = vadd.f32 %v2780, %v2791
    %v2806 = vadd.f32 %v2781, %v2795
    %v2807 = vadd.f32 %v2782, %v2799
    %vm2808 = vcmp.gt.f32.partialorder %v2804, 0.0
    %vm2809 = vcmp.gt.f32.partialorder %v2805, 0.0
    %vm2810 = vcmp.gt.f32.partialorder %v2806, 0.0
    %vm2811 = vcmp.gt.f32.partialorder %v2807, 0.0
    %v2812 = vmul.f32 %v2804, 0.2
    %v2813 = vmul.f32 %v2805, 0.2
    %v2814 = vmul.f32 %v2806, 0.2
    %v2815 = vmul.f32 %v2807, 0.2
    %v2816 = vsel %vm2808, %v2804, %v2812
    %v2817 = vsel %vm2809, %v2805, %v2813
    %v2818 = vsel %vm2810, %v2806, %v2814
    %v2819 = vsel %vm2811, %v2807, %v2815
    %v2820 = vpack.c.bf16 %v2178, %v2178
    %v2821 = vpack.c.bf16 %v2179, %v2179
    %v2822 = vpack.c.bf16 %v2180, %v2180
    %v2823 = vpack.c.bf16 %v2181, %v2181
    %v2824 = vld [vmem:[#allocation10] sm:$0xff]
    %v2825 = vld [vmem:[#allocation10 + $0x8] sm:$0xff]
    %v2826 = vld [vmem:[#allocation10 + $0x10] sm:$0xff]
    %v2827 = vld [vmem:[#allocation10 + $0x18] sm:$0xff]
    %v2828 = vld [vmem:[#allocation10 + $0x20] sm:$0xff]
    %v2829 = vld [vmem:[#allocation10 + $0x28] sm:$0xff]
    %v2830 = vld [vmem:[#allocation10 + $0x30] sm:$0xff]
    %v2831 = vld [vmem:[#allocation10 + $0x38] sm:$0xff]
    %v2832 = vld [vmem:[#allocation10 + $0x40] sm:$0xff]
    %v2833 = vld [vmem:[#allocation10 + $0x48] sm:$0xff]
    %v2834 = vld [vmem:[#allocation10 + $0x50] sm:$0xff]
    %v2835 = vld [vmem:[#allocation10 + $0x58] sm:$0xff]
    %v2836 = vld [vmem:[#allocation10 + $0x60] sm:$0xff]
    %v2837 = vld [vmem:[#allocation10 + $0x68] sm:$0xff]
    %v2838 = vld [vmem:[#allocation10 + $0x70] sm:$0xff]
    %v2839 = vld [vmem:[#allocation10 + $0x78] sm:$0xff]
    %v2840 = vld [vmem:[#allocation10 + $0x80] sm:$0xff]
    %v2841 = vld [vmem:[#allocation10 + $0x88] sm:$0xff]
    %v2842 = vld [vmem:[#allocation10 + $0x90] sm:$0xff]
    %v2843 = vld [vmem:[#allocation10 + $0x98] sm:$0xff]
    %v2844 = vld [vmem:[#allocation10 + $0xa0] sm:$0xff]
    %v2845 = vld [vmem:[#allocation10 + $0xa8] sm:$0xff]
    %v2846 = vld [vmem:[#allocation10 + $0xb0] sm:$0xff]
    %v2847 = vld [vmem:[#allocation10 + $0xb8] sm:$0xff]
    %v2848 = vld [vmem:[#allocation10 + $0xc0] sm:$0xff]
    %v2849 = vld [vmem:[#allocation10 + $0xc8] sm:$0xff]
    %v2850 = vld [vmem:[#allocation10 + $0xd0] sm:$0xff]
    %v2851 = vld [vmem:[#allocation10 + $0xd8] sm:$0xff]
    %v2852 = vld [vmem:[#allocation10 + $0xe0] sm:$0xff]
    %v2853 = vld [vmem:[#allocation10 + $0xe8] sm:$0xff]
    %v2854 = vld [vmem:[#allocation10 + $0xf0] sm:$0xff]
    %v2855 = vld [vmem:[#allocation10 + $0xf8] sm:$0xff]
    %v2856 = vld [vmem:[#allocation10 + $0x100] sm:$0xff]
    %v2857 = vld [vmem:[#allocation10 + $0x108] sm:$0xff]
    %v2858 = vld [vmem:[#allocation10 + $0x110] sm:$0xff]
    %v2859 = vld [vmem:[#allocation10 + $0x118] sm:$0xff]
    %v2860 = vld [vmem:[#allocation10 + $0x120] sm:$0xff]
    %v2861 = vld [vmem:[#allocation10 + $0x128] sm:$0xff]
    %v2862 = vld [vmem:[#allocation10 + $0x130] sm:$0xff]
    %v2863 = vld [vmem:[#allocation10 + $0x138] sm:$0xff]
    %v2864 = vld [vmem:[#allocation10 + $0x140] sm:$0xff]
    %v2865 = vld [vmem:[#allocation10 + $0x148] sm:$0xff]
    %v2866 = vld [vmem:[#allocation10 + $0x150] sm:$0xff]
    %v2867 = vld [vmem:[#allocation10 + $0x158] sm:$0xff]
    %v2868 = vld [vmem:[#allocation10 + $0x160] sm:$0xff]
    %v2869 = vld [vmem:[#allocation10 + $0x168] sm:$0xff]
    %v2870 = vld [vmem:[#allocation10 + $0x170] sm:$0xff]
    %v2871 = vld [vmem:[#allocation10 + $0x178] sm:$0xff]
    %v2872 = vld [vmem:[#allocation10 + $0x180] sm:$0xff]
    %v2873 = vld [vmem:[#allocation10 + $0x188] sm:$0xff]
    %v2874 = vld [vmem:[#allocation10 + $0x190] sm:$0xff]
    %v2875 = vld [vmem:[#allocation10 + $0x198] sm:$0xff]
    %v2876 = vld [vmem:[#allocation10 + $0x1a0] sm:$0xff]
    %v2877 = vld [vmem:[#allocation10 + $0x1a8] sm:$0xff]
    %v2878 = vld [vmem:[#allocation10 + $0x1b0] sm:$0xff]
    %v2879 = vld [vmem:[#allocation10 + $0x1b8] sm:$0xff]
    %v2880 = vld [vmem:[#allocation10 + $0x1c0] sm:$0xff]
    %v2881 = vld [vmem:[#allocation10 + $0x1c8] sm:$0xff]
    %v2882 = vld [vmem:[#allocation10 + $0x1d0] sm:$0xff]
    %v2883 = vld [vmem:[#allocation10 + $0x1d8] sm:$0xff]
    %v2884 = vld [vmem:[#allocation10 + $0x1e0] sm:$0xff]
    %v2885 = vld [vmem:[#allocation10 + $0x1e8] sm:$0xff]
    %v2886 = vld [vmem:[#allocation10 + $0x1f0] sm:$0xff]
    %v2887 = vld [vmem:[#allocation10 + $0x1f8] sm:$0xff]
    %v2888 = vld [vmem:[#allocation10 + $0x200] sm:$0xff]
    %v2889 = vld [vmem:[#allocation10 + $0x208] sm:$0xff]
    %v2890 = vld [vmem:[#allocation10 + $0x210] sm:$0xff]
    %v2891 = vld [vmem:[#allocation10 + $0x218] sm:$0xff]
    %v2892 = vld [vmem:[#allocation10 + $0x220] sm:$0xff]
    %v2893 = vld [vmem:[#allocation10 + $0x228] sm:$0xff]
    %v2894 = vld [vmem:[#allocation10 + $0x230] sm:$0xff]
    %v2895 = vld [vmem:[#allocation10 + $0x238] sm:$0xff]
    %v2896 = vld [vmem:[#allocation10 + $0x240] sm:$0xff]
    %v2897 = vld [vmem:[#allocation10 + $0x248] sm:$0xff]
    %v2898 = vld [vmem:[#allocation10 + $0x250] sm:$0xff]
    %v2899 = vld [vmem:[#allocation10 + $0x258] sm:$0xff]
    %v2900 = vld [vmem:[#allocation10 + $0x260] sm:$0xff]
    %v2901 = vld [vmem:[#allocation10 + $0x268] sm:$0xff]
    %v2902 = vld [vmem:[#allocation10 + $0x270] sm:$0xff]
    %v2903 = vld [vmem:[#allocation10 + $0x278] sm:$0xff]
    %v2904 = vld [vmem:[#allocation10 + $0x280] sm:$0xff]
    %v2905 = vld [vmem:[#allocation10 + $0x288] sm:$0xff]
    %v2906 = vld [vmem:[#allocation10 + $0x290] sm:$0xff]
    %v2907 = vld [vmem:[#allocation10 + $0x298] sm:$0xff]
    %v2908 = vld [vmem:[#allocation10 + $0x2a0] sm:$0xff]
    %v2909 = vld [vmem:[#allocation10 + $0x2a8] sm:$0xff]
    %v2910 = vld [vmem:[#allocation10 + $0x2b0] sm:$0xff]
    %v2911 = vld [vmem:[#allocation10 + $0x2b8] sm:$0xff]
    %v2912 = vld [vmem:[#allocation10 + $0x2c0] sm:$0xff]
    %v2913 = vld [vmem:[#allocation10 + $0x2c8] sm:$0xff]
    %v2914 = vld [vmem:[#allocation10 + $0x2d0] sm:$0xff]
    %v2915 = vld [vmem:[#allocation10 + $0x2d8] sm:$0xff]
    %v2916 = vld [vmem:[#allocation10 + $0x2e0] sm:$0xff]
    %v2917 = vld [vmem:[#allocation10 + $0x2e8] sm:$0xff]
    %v2918 = vld [vmem:[#allocation10 + $0x2f0] sm:$0xff]
    %v2919 = vld [vmem:[#allocation10 + $0x2f8] sm:$0xff]
    %v2920 = vld [vmem:[#allocation10 + $0x300] sm:$0xff]
    %v2921 = vld [vmem:[#allocation10 + $0x308] sm:$0xff]
    %v2922 = vld [vmem:[#allocation10 + $0x310] sm:$0xff]
    %v2923 = vld [vmem:[#allocation10 + $0x318] sm:$0xff]
    %v2924 = vld [vmem:[#allocation10 + $0x320] sm:$0xff]
    %v2925 = vld [vmem:[#allocation10 + $0x328] sm:$0xff]
    %v2926 = vld [vmem:[#allocation10 + $0x330] sm:$0xff]
    %v2927 = vld [vmem:[#allocation10 + $0x338] sm:$0xff]
    %v2928 = vld [vmem:[#allocation10 + $0x340] sm:$0xff]
    %v2929 = vld [vmem:[#allocation10 + $0x348] sm:$0xff]
    %v2930 = vld [vmem:[#allocation10 + $0x350] sm:$0xff]
    %v2931 = vld [vmem:[#allocation10 + $0x358] sm:$0xff]
    %v2932 = vld [vmem:[#allocation10 + $0x360] sm:$0xff]
    %v2933 = vld [vmem:[#allocation10 + $0x368] sm:$0xff]
    %v2934 = vld [vmem:[#allocation10 + $0x370] sm:$0xff]
    %v2935 = vld [vmem:[#allocation10 + $0x378] sm:$0xff]
    %v2936 = vld [vmem:[#allocation10 + $0x380] sm:$0xff]
    %v2937 = vld [vmem:[#allocation10 + $0x388] sm:$0xff]
    %v2938 = vld [vmem:[#allocation10 + $0x390] sm:$0xff]
    %v2939 = vld [vmem:[#allocation10 + $0x398] sm:$0xff]
    %v2940 = vld [vmem:[#allocation10 + $0x3a0] sm:$0xff]
    %v2941 = vld [vmem:[#allocation10 + $0x3a8] sm:$0xff]
    %v2942 = vld [vmem:[#allocation10 + $0x3b0] sm:$0xff]
    %v2943 = vld [vmem:[#allocation10 + $0x3b8] sm:$0xff]
    %v2944 = vld [vmem:[#allocation10 + $0x3c0] sm:$0xff]
    %v2945 = vld [vmem:[#allocation10 + $0x3c8] sm:$0xff]
    %v2946 = vld [vmem:[#allocation10 + $0x3d0] sm:$0xff]
    %v2947 = vld [vmem:[#allocation10 + $0x3d8] sm:$0xff]
    %v2948 = vld [vmem:[#allocation10 + $0x3e0] sm:$0xff]
    %v2949 = vld [vmem:[#allocation10 + $0x3e8] sm:$0xff]
    %v2950 = vld [vmem:[#allocation10 + $0x3f0] sm:$0xff]
    %v2951 = vld [vmem:[#allocation10 + $0x3f8] sm:$0xff]
    %v2952 = vpack.c.bf16 %v2816, %v2816
    %v2953 = vpack.c.bf16 %v2817, %v2817
    %v2954 = vpack.c.bf16 %v2818, %v2818
    %v2955 = vpack.c.bf16 %v2819, %v2819
    %v2956 = vld [vmem:[#allocation11] sm:$0xff]
    %v2957 = vld [vmem:[#allocation11 + $0x8] sm:$0xff]
    %v2958 = vld [vmem:[#allocation11 + $0x10] sm:$0xff]
    %v2959 = vld [vmem:[#allocation11 + $0x18] sm:$0xff]
    %v2960 = vld [vmem:[#allocation11 + $0x20] sm:$0xff]
    %v2961 = vld [vmem:[#allocation11 + $0x28] sm:$0xff]
    %v2962 = vld [vmem:[#allocation11 + $0x30] sm:$0xff]
    %v2963 = vld [vmem:[#allocation11 + $0x38] sm:$0xff]
    %v2964 = vld [vmem:[#allocation11 + $0x40] sm:$0xff]
    %v2965 = vld [vmem:[#allocation11 + $0x48] sm:$0xff]
    %v2966 = vld [vmem:[#allocation11 + $0x50] sm:$0xff]
    %v2967 = vld [vmem:[#allocation11 + $0x58] sm:$0xff]
    %v2968 = vld [vmem:[#allocation11 + $0x60] sm:$0xff]
    %v2969 = vld [vmem:[#allocation11 + $0x68] sm:$0xff]
    %v2970 = vld [vmem:[#allocation11 + $0x70] sm:$0xff]
    %v2971 = vld [vmem:[#allocation11 + $0x78] sm:$0xff]
    %v2972 = vld [vmem:[#allocation11 + $0x80] sm:$0xff]
    %v2973 = vld [vmem:[#allocation11 + $0x88] sm:$0xff]
    %v2974 = vld [vmem:[#allocation11 + $0x90] sm:$0xff]
    %v2975 = vld [vmem:[#allocation11 + $0x98] sm:$0xff]
    %v2976 = vld [vmem:[#allocation11 + $0xa0] sm:$0xff]
    %v2977 = vld [vmem:[#allocation11 + $0xa8] sm:$0xff]
    %v2978 = vld [vmem:[#allocation11 + $0xb0] sm:$0xff]
    %v2979 = vld [vmem:[#allocation11 + $0xb8] sm:$0xff]
    %v2980 = vld [vmem:[#allocation11 + $0xc0] sm:$0xff]
    %v2981 = vld [vmem:[#allocation11 + $0xc8] sm:$0xff]
    %v2982 = vld [vmem:[#allocation11 + $0xd0] sm:$0xff]
    %v2983 = vld [vmem:[#allocation11 + $0xd8] sm:$0xff]
    %v2984 = vld [vmem:[#allocation11 + $0xe0] sm:$0xff]
    %v2985 = vld [vmem:[#allocation11 + $0xe8] sm:$0xff]
    %v2986 = vld [vmem:[#allocation11 + $0xf0] sm:$0xff]
    %v2987 = vld [vmem:[#allocation11 + $0xf8] sm:$0xff]
    %v2988 = vld [vmem:[#allocation11 + $0x100] sm:$0xff]
    %v2989 = vld [vmem:[#allocation11 + $0x108] sm:$0xff]
    %v2990 = vld [vmem:[#allocation11 + $0x110] sm:$0xff]
    %v2991 = vld [vmem:[#allocation11 + $0x118] sm:$0xff]
    %v2992 = vld [vmem:[#allocation11 + $0x120] sm:$0xff]
    %v2993 = vld [vmem:[#allocation11 + $0x128] sm:$0xff]
    %v2994 = vld [vmem:[#allocation11 + $0x130] sm:$0xff]
    %v2995 = vld [vmem:[#allocation11 + $0x138] sm:$0xff]
    %v2996 = vld [vmem:[#allocation11 + $0x140] sm:$0xff]
    %v2997 = vld [vmem:[#allocation11 + $0x148] sm:$0xff]
    %v2998 = vld [vmem:[#allocation11 + $0x150] sm:$0xff]
    %v2999 = vld [vmem:[#allocation11 + $0x158] sm:$0xff]
    %v3000 = vld [vmem:[#allocation11 + $0x160] sm:$0xff]
    %v3001 = vld [vmem:[#allocation11 + $0x168] sm:$0xff]
    %v3002 = vld [vmem:[#allocation11 + $0x170] sm:$0xff]
    %v3003 = vld [vmem:[#allocation11 + $0x178] sm:$0xff]
    %v3004 = vld [vmem:[#allocation11 + $0x180] sm:$0xff]
    %v3005 = vld [vmem:[#allocation11 + $0x188] sm:$0xff]
    %v3006 = vld [vmem:[#allocation11 + $0x190] sm:$0xff]
    %v3007 = vld [vmem:[#allocation11 + $0x198] sm:$0xff]
    %v3008 = vld [vmem:[#allocation11 + $0x1a0] sm:$0xff]
    %v3009 = vld [vmem:[#allocation11 + $0x1a8] sm:$0xff]
    %v3010 = vld [vmem:[#allocation11 + $0x1b0] sm:$0xff]
    %v3011 = vld [vmem:[#allocation11 + $0x1b8] sm:$0xff]
    %v3012 = vld [vmem:[#allocation11 + $0x1c0] sm:$0xff]
    %v3013 = vld [vmem:[#allocation11 + $0x1c8] sm:$0xff]
    %v3014 = vld [vmem:[#allocation11 + $0x1d0] sm:$0xff]
    %v3015 = vld [vmem:[#allocation11 + $0x1d8] sm:$0xff]
    %v3016 = vld [vmem:[#allocation11 + $0x1e0] sm:$0xff]
    %v3017 = vld [vmem:[#allocation11 + $0x1e8] sm:$0xff]
    %v3018 = vld [vmem:[#allocation11 + $0x1f0] sm:$0xff]
    %v3019 = vld [vmem:[#allocation11 + $0x1f8] sm:$0xff]
    %v3020 = vld [vmem:[#allocation11 + $0x200] sm:$0xff]
    %v3021 = vld [vmem:[#allocation11 + $0x208] sm:$0xff]
    %v3022 = vld [vmem:[#allocation11 + $0x210] sm:$0xff]
    %v3023 = vld [vmem:[#allocation11 + $0x218] sm:$0xff]
    %v3024 = vld [vmem:[#allocation11 + $0x220] sm:$0xff]
    %v3025 = vld [vmem:[#allocation11 + $0x228] sm:$0xff]
    %v3026 = vld [vmem:[#allocation11 + $0x230] sm:$0xff]
    %v3027 = vld [vmem:[#allocation11 + $0x238] sm:$0xff]
    %v3028 = vld [vmem:[#allocation11 + $0x240] sm:$0xff]
    %v3029 = vld [vmem:[#allocation11 + $0x248] sm:$0xff]
    %v3030 = vld [vmem:[#allocation11 + $0x250] sm:$0xff]
    %v3031 = vld [vmem:[#allocation11 + $0x258] sm:$0xff]
    %v3032 = vld [vmem:[#allocation11 + $0x260] sm:$0xff]
    %v3033 = vld [vmem:[#allocation11 + $0x268] sm:$0xff]
    %v3034 = vld [vmem:[#allocation11 + $0x270] sm:$0xff]
    %v3035 = vld [vmem:[#allocation11 + $0x278] sm:$0xff]
    %v3036 = vld [vmem:[#allocation11 + $0x280] sm:$0xff]
    %v3037 = vld [vmem:[#allocation11 + $0x288] sm:$0xff]
    %v3038 = vld [vmem:[#allocation11 + $0x290] sm:$0xff]
    %v3039 = vld [vmem:[#allocation11 + $0x298] sm:$0xff]
    %v3040 = vld [vmem:[#allocation11 + $0x2a0] sm:$0xff]
    %v3041 = vld [vmem:[#allocation11 + $0x2a8] sm:$0xff]
    %v3042 = vld [vmem:[#allocation11 + $0x2b0] sm:$0xff]
    %v3043 = vld [vmem:[#allocation11 + $0x2b8] sm:$0xff]
    %v3044 = vld [vmem:[#allocation11 + $0x2c0] sm:$0xff]
    %v3045 = vld [vmem:[#allocation11 + $0x2c8] sm:$0xff]
    %v3046 = vld [vmem:[#allocation11 + $0x2d0] sm:$0xff]
    %v3047 = vld [vmem:[#allocation11 + $0x2d8] sm:$0xff]
    %v3048 = vld [vmem:[#allocation11 + $0x2e0] sm:$0xff]
    %v3049 = vld [vmem:[#allocation11 + $0x2e8] sm:$0xff]
    %v3050 = vld [vmem:[#allocation11 + $0x2f0] sm:$0xff]
    %v3051 = vld [vmem:[#allocation11 + $0x2f8] sm:$0xff]
    %v3052 = vld [vmem:[#allocation11 + $0x300] sm:$0xff]
    %v3053 = vld [vmem:[#allocation11 + $0x308] sm:$0xff]
    %v3054 = vld [vmem:[#allocation11 + $0x310] sm:$0xff]
    %v3055 = vld [vmem:[#allocation11 + $0x318] sm:$0xff]
    %v3056 = vld [vmem:[#allocation11 + $0x320] sm:$0xff]
    %v3057 = vld [vmem:[#allocation11 + $0x328] sm:$0xff]
    %v3058 = vld [vmem:[#allocation11 + $0x330] sm:$0xff]
    %v3059 = vld [vmem:[#allocation11 + $0x338] sm:$0xff]
    %v3060 = vld [vmem:[#allocation11 + $0x340] sm:$0xff]
    %v3061 = vld [vmem:[#allocation11 + $0x348] sm:$0xff]
    %v3062 = vld [vmem:[#allocation11 + $0x350] sm:$0xff]
    %v3063 = vld [vmem:[#allocation11 + $0x358] sm:$0xff]
    %v3064 = vld [vmem:[#allocation11 + $0x360] sm:$0xff]
    %v3065 = vld [vmem:[#allocation11 + $0x368] sm:$0xff]
    %v3066 = vld [vmem:[#allocation11 + $0x370] sm:$0xff]
    %v3067 = vld [vmem:[#allocation11 + $0x378] sm:$0xff]
    %v3068 = vld [vmem:[#allocation11 + $0x380] sm:$0xff]
    %v3069 = vld [vmem:[#allocation11 + $0x388] sm:$0xff]
    %v3070 = vld [vmem:[#allocation11 + $0x390] sm:$0xff]
    %v3071 = vld [vmem:[#allocation11 + $0x398] sm:$0xff]
    %v3072 = vld [vmem:[#allocation11 + $0x3a0] sm:$0xff]
    %v3073 = vld [vmem:[#allocation11 + $0x3a8] sm:$0xff]
    %v3074 = vld [vmem:[#allocation11 + $0x3b0] sm:$0xff]
    %v3075 = vld [vmem:[#allocation11 + $0x3b8] sm:$0xff]
    %v3076 = vld [vmem:[#allocation11 + $0x3c0] sm:$0xff]
    %v3077 = vld [vmem:[#allocation11 + $0x3c8] sm:$0xff]
    %v3078 = vld [vmem:[#allocation11 + $0x3d0] sm:$0xff]
    %v3079 = vld [vmem:[#allocation11 + $0x3d8] sm:$0xff]
    %v3080 = vld [vmem:[#allocation11 + $0x3e0] sm:$0xff]
    %v3081 = vld [vmem:[#allocation11 + $0x3e8] sm:$0xff]
    %v3082 = vld [vmem:[#allocation11 + $0x3f0] sm:$0xff]
    %v3083 = vld [vmem:[#allocation11 + $0x3f8] sm:$0xff]
    %v3212 = vunpack.c.l.b16 %v2956
    %v3213 = vunpack.c.h.b16 %v2956
    %v3214 = vunpack.c.l.b16 %v2957
    %v3215 = vunpack.c.h.b16 %v2957
    %v3216 = vunpack.c.l.b16 %v2958
    %v3217 = vunpack.c.h.b16 %v2958
    %v3218 = vunpack.c.l.b16 %v2959
    %v3219 = vunpack.c.h.b16 %v2959
    %v3220 = vunpack.c.l.b16 %v2960
    %v3221 = vunpack.c.h.b16 %v2960
    %v3222 = vunpack.c.l.b16 %v2961
    %v3223 = vunpack.c.h.b16 %v2961
    %v3224 = vunpack.c.l.b16 %v2962
    %v3225 = vunpack.c.h.b16 %v2962
    %v3226 = vunpack.c.l.b16 %v2963
    %v3227 = vunpack.c.h.b16 %v2963
    %v3228 = vunpack.c.l.b16 %v2964
    %v3229 = vunpack.c.h.b16 %v2964
    %v3230 = vunpack.c.l.b16 %v2965
    %v3231 = vunpack.c.h.b16 %v2965
    %v3232 = vunpack.c.l.b16 %v2966
    %v3233 = vunpack.c.h.b16 %v2966
    %v3234 = vunpack.c.l.b16 %v2967
    %v3235 = vunpack.c.h.b16 %v2967
    %v3236 = vunpack.c.l.b16 %v2968
    %v3237 = vunpack.c.h.b16 %v2968
    %v3238 = vunpack.c.l.b16 %v2969
    %v3239 = vunpack.c.h.b16 %v2969
    %v3240 = vunpack.c.l.b16 %v2970
    %v3241 = vunpack.c.h.b16 %v2970
    %v3242 = vunpack.c.l.b16 %v2971
    %v3243 = vunpack.c.h.b16 %v2971
    %v3244 = vunpack.c.l.b16 %v2972
    %v3245 = vunpack.c.h.b16 %v2972
    %v3246 = vunpack.c.l.b16 %v2973
    %v3247 = vunpack.c.h.b16 %v2973
    %v3248 = vunpack.c.l.b16 %v2974
    %v3249 = vunpack.c.h.b16 %v2974
    %v3250 = vunpack.c.l.b16 %v2975
    %v3251 = vunpack.c.h.b16 %v2975
    %v3252 = vunpack.c.l.b16 %v2976
    %v3253 = vunpack.c.h.b16 %v2976
    %v3254 = vunpack.c.l.b16 %v2977
    %v3255 = vunpack.c.h.b16 %v2977
    %v3256 = vunpack.c.l.b16 %v2978
    %v3257 = vunpack.c.h.b16 %v2978
    %v3258 = vunpack.c.l.b16 %v2979
    %v3259 = vunpack.c.h.b16 %v2979
    %v3260 = vunpack.c.l.b16 %v2980
    %v3261 = vunpack.c.h.b16 %v2980
    %v3262 = vunpack.c.l.b16 %v2981
    %v3263 = vunpack.c.h.b16 %v2981
    %v3264 = vunpack.c.l.b16 %v2982
    %v3265 = vunpack.c.h.b16 %v2982
    %v3266 = vunpack.c.l.b16 %v2983
    %v3267 = vunpack.c.h.b16 %v2983
    %v3268 = vunpack.c.l.b16 %v2984
    %v3269 = vunpack.c.h.b16 %v2984
    %v3270 = vunpack.c.l.b16 %v2985
    %v3271 = vunpack.c.h.b16 %v2985
    %v3272 = vunpack.c.l.b16 %v2986
    %v3273 = vunpack.c.h.b16 %v2986
    %v3274 = vunpack.c.l.b16 %v2987
    %v3275 = vunpack.c.h.b16 %v2987
    %v3276 = vunpack.c.l.b16 %v2988
    %v3277 = vunpack.c.h.b16 %v2988
    %v3278 = vunpack.c.l.b16 %v2989
    %v3279 = vunpack.c.h.b16 %v2989
    %v3280 = vunpack.c.l.b16 %v2990
    %v3281 = vunpack.c.h.b16 %v2990
    %v3282 = vunpack.c.l.b16 %v2991
    %v3283 = vunpack.c.h.b16 %v2991
    %v3284 = vunpack.c.l.b16 %v2992
    %v3285 = vunpack.c.h.b16 %v2992
    %v3286 = vunpack.c.l.b16 %v2993
    %v3287 = vunpack.c.h.b16 %v2993
    %v3288 = vunpack.c.l.b16 %v2994
    %v3289 = vunpack.c.h.b16 %v2994
    %v3290 = vunpack.c.l.b16 %v2995
    %v3291 = vunpack.c.h.b16 %v2995
    %v3292 = vunpack.c.l.b16 %v2996
    %v3293 = vunpack.c.h.b16 %v2996
    %v3294 = vunpack.c.l.b16 %v2997
    %v3295 = vunpack.c.h.b16 %v2997
    %v3296 = vunpack.c.l.b16 %v2998
    %v3297 = vunpack.c.h.b16 %v2998
    %v3298 = vunpack.c.l.b16 %v2999
    %v3299 = vunpack.c.h.b16 %v2999
    %v3300 = vunpack.c.l.b16 %v3000
    %v3301 = vunpack.c.h.b16 %v3000
    %v3302 = vunpack.c.l.b16 %v3001
    %v3303 = vunpack.c.h.b16 %v3001
    %v3304 = vunpack.c.l.b16 %v3002
    %v3305 = vunpack.c.h.b16 %v3002
    %v3306 = vunpack.c.l.b16 %v3003
    %v3307 = vunpack.c.h.b16 %v3003
    %v3308 = vunpack.c.l.b16 %v3004
    %v3309 = vunpack.c.h.b16 %v3004
    %v3310 = vunpack.c.l.b16 %v3005
    %v3311 = vunpack.c.h.b16 %v3005
    %v3312 = vunpack.c.l.b16 %v3006
    %v3313 = vunpack.c.h.b16 %v3006
    %v3314 = vunpack.c.l.b16 %v3007
    %v3315 = vunpack.c.h.b16 %v3007
    %v3316 = vunpack.c.l.b16 %v3008
    %v3317 = vunpack.c.h.b16 %v3008
    %v3318 = vunpack.c.l.b16 %v3009
    %v3319 = vunpack.c.h.b16 %v3009
    %v3320 = vunpack.c.l.b16 %v3010
    %v3321 = vunpack.c.h.b16 %v3010
    %v3322 = vunpack.c.l.b16 %v3011
    %v3323 = vunpack.c.h.b16 %v3011
    %v3324 = vunpack.c.l.b16 %v3012
    %v3325 = vunpack.c.h.b16 %v3012
    %v3326 = vunpack.c.l.b16 %v3013
    %v3327 = vunpack.c.h.b16 %v3013
    %v3328 = vunpack.c.l.b16 %v3014
    %v3329 = vunpack.c.h.b16 %v3014
    %v3330 = vunpack.c.l.b16 %v3015
    %v3331 = vunpack.c.h.b16 %v3015
    %v3332 = vunpack.c.l.b16 %v3016
    %v3333 = vunpack.c.h.b16 %v3016
    %v3334 = vunpack.c.l.b16 %v3017
    %v3335 = vunpack.c.h.b16 %v3017
    %v3336 = vunpack.c.l.b16 %v3018
    %v3337 = vunpack.c.h.b16 %v3018
    %v3338 = vunpack.c.l.b16 %v3019
    %v3339 = vunpack.c.h.b16 %v3019
    %v3340 = vunpack.c.l.b16 %v3020
    %v3341 = vunpack.c.h.b16 %v3020
    %v3342 = vunpack.c.l.b16 %v3021
    %v3343 = vunpack.c.h.b16 %v3021
    %v3344 = vunpack.c.l.b16 %v3022
    %v3345 = vunpack.c.h.b16 %v3022
    %v3346 = vunpack.c.l.b16 %v3023
    %v3347 = vunpack.c.h.b16 %v3023
    %v3348 = vunpack.c.l.b16 %v3024
    %v3349 = vunpack.c.h.b16 %v3024
    %v3350 = vunpack.c.l.b16 %v3025
    %v3351 = vunpack.c.h.b16 %v3025
    %v3352 = vunpack.c.l.b16 %v3026
    %v3353 = vunpack.c.h.b16 %v3026
    %v3354 = vunpack.c.l.b16 %v3027
    %v3355 = vunpack.c.h.b16 %v3027
    %v3356 = vunpack.c.l.b16 %v3028
    %v3357 = vunpack.c.h.b16 %v3028
    %v3358 = vunpack.c.l.b16 %v3029
    %v3359 = vunpack.c.h.b16 %v3029
    %v3360 = vunpack.c.l.b16 %v3030
    %v3361 = vunpack.c.h.b16 %v3030
    %v3362 = vunpack.c.l.b16 %v3031
    %v3363 = vunpack.c.h.b16 %v3031
    %v3364 = vunpack.c.l.b16 %v3032
    %v3365 = vunpack.c.h.b16 %v3032
    %v3366 = vunpack.c.l.b16 %v3033
    %v3367 = vunpack.c.h.b16 %v3033
    %v3368 = vunpack.c.l.b16 %v3034
    %v3369 = vunpack.c.h.b16 %v3034
    %v3370 = vunpack.c.l.b16 %v3035
    %v3371 = vunpack.c.h.b16 %v3035
    %v3372 = vunpack.c.l.b16 %v3036
    %v3373 = vunpack.c.h.b16 %v3036
    %v3374 = vunpack.c.l.b16 %v3037
    %v3375 = vunpack.c.h.b16 %v3037
    %v3376 = vunpack.c.l.b16 %v3038
    %v3377 = vunpack.c.h.b16 %v3038
    %v3378 = vunpack.c.l.b16 %v3039
    %v3379 = vunpack.c.h.b16 %v3039
    %v3380 = vunpack.c.l.b16 %v3040
    %v3381 = vunpack.c.h.b16 %v3040
    %v3382 = vunpack.c.l.b16 %v3041
    %v3383 = vunpack.c.h.b16 %v3041
    %v3384 = vunpack.c.l.b16 %v3042
    %v3385 = vunpack.c.h.b16 %v3042
    %v3386 = vunpack.c.l.b16 %v3043
    %v3387 = vunpack.c.h.b16 %v3043
    %v3388 = vunpack.c.l.b16 %v3044
    %v3389 = vunpack.c.h.b16 %v3044
    %v3390 = vunpack.c.l.b16 %v3045
    %v3391 = vunpack.c.h.b16 %v3045
    %v3392 = vunpack.c.l.b16 %v3046
    %v3393 = vunpack.c.h.b16 %v3046
    %v3394 = vunpack.c.l.b16 %v3047
    %v3395 = vunpack.c.h.b16 %v3047
    %v3396 = vunpack.c.l.b16 %v3048
    %v3397 = vunpack.c.h.b16 %v3048
    %v3398 = vunpack.c.l.b16 %v3049
    %v3399 = vunpack.c.h.b16 %v3049
    %v3400 = vunpack.c.l.b16 %v3050
    %v3401 = vunpack.c.h.b16 %v3050
    %v3402 = vunpack.c.l.b16 %v3051
    %v3403 = vunpack.c.h.b16 %v3051
    %v3404 = vunpack.c.l.b16 %v3052
    %v3405 = vunpack.c.h.b16 %v3052
    %v3406 = vunpack.c.l.b16 %v3053
    %v3407 = vunpack.c.h.b16 %v3053
    %v3408 = vunpack.c.l.b16 %v3054
    %v3409 = vunpack.c.h.b16 %v3054
    %v3410 = vunpack.c.l.b16 %v3055
    %v3411 = vunpack.c.h.b16 %v3055
    %v3412 = vunpack.c.l.b16 %v3056
    %v3413 = vunpack.c.h.b16 %v3056
    %v3414 = vunpack.c.l.b16 %v3057
    %v3415 = vunpack.c.h.b16 %v3057
    %v3416 = vunpack.c.l.b16 %v3058
    %v3417 = vunpack.c.h.b16 %v3058
    %v3418 = vunpack.c.l.b16 %v3059
    %v3419 = vunpack.c.h.b16 %v3059
    %v3420 = vunpack.c.l.b16 %v3060
    %v3421 = vunpack.c.h.b16 %v3060
    %v3422 = vunpack.c.l.b16 %v3061
    %v3423 = vunpack.c.h.b16 %v3061
    %v3424 = vunpack.c.l.b16 %v3062
    %v3425 = vunpack.c.h.b16 %v3062
    %v3426 = vunpack.c.l.b16 %v3063
    %v3427 = vunpack.c.h.b16 %v3063
    %v3428 = vunpack.c.l.b16 %v3064
    %v3429 = vunpack.c.h.b16 %v3064
    %v3430 = vunpack.c.l.b16 %v3065
    %v3431 = vunpack.c.h.b16 %v3065
    %v3432 = vunpack.c.l.b16 %v3066
    %v3433 = vunpack.c.h.b16 %v3066
    %v3434 = vunpack.c.l.b16 %v3067
    %v3435 = vunpack.c.h.b16 %v3067
    %v3436 = vunpack.c.l.b16 %v3068
    %v3437 = vunpack.c.h.b16 %v3068
    %v3438 = vunpack.c.l.b16 %v3069
    %v3439 = vunpack.c.h.b16 %v3069
    %v3440 = vunpack.c.l.b16 %v3070
    %v3441 = vunpack.c.h.b16 %v3070
    %v3442 = vunpack.c.l.b16 %v3071
    %v3443 = vunpack.c.h.b16 %v3071
    %v3444 = vunpack.c.l.b16 %v3072
    %v3445 = vunpack.c.h.b16 %v3072
    %v3446 = vunpack.c.l.b16 %v3073
    %v3447 = vunpack.c.h.b16 %v3073
    %v3448 = vunpack.c.l.b16 %v3074
    %v3449 = vunpack.c.h.b16 %v3074
    %v3450 = vunpack.c.l.b16 %v3075
    %v3451 = vunpack.c.h.b16 %v3075
    %v3452 = vunpack.c.l.b16 %v3076
    %v3453 = vunpack.c.h.b16 %v3076
    %v3454 = vunpack.c.l.b16 %v3077
    %v3455 = vunpack.c.h.b16 %v3077
    %v3456 = vunpack.c.l.b16 %v3078
    %v3457 = vunpack.c.h.b16 %v3078
    %v3458 = vunpack.c.l.b16 %v3079
    %v3459 = vunpack.c.h.b16 %v3079
    %v3460 = vunpack.c.l.b16 %v3080
    %v3461 = vunpack.c.h.b16 %v3080
    %v3462 = vunpack.c.l.b16 %v3081
    %v3463 = vunpack.c.h.b16 %v3081
    %v3464 = vunpack.c.l.b16 %v3082
    %v3465 = vunpack.c.h.b16 %v3082
    %v3466 = vunpack.c.l.b16 %v3083
    %v3467 = vunpack.c.h.b16 %v3083
    %v3468 = vpack.c.b16 %v3216, %v3212
    %v3469 = vpack.c.b16 %v3217, %v3213
    %v3470 = vpack.c.b16 %v3218, %v3214
    %v3471 = vpack.c.b16 %v3219, %v3215
    %v3472 = vpack.c.b16 %v3224, %v3220
    %v3473 = vpack.c.b16 %v3225, %v3221
    %v3474 = vpack.c.b16 %v3226, %v3222
    %v3475 = vpack.c.b16 %v3227, %v3223
    %v3476 = vpack.c.b16 %v3232, %v3228
    %v3477 = vpack.c.b16 %v3233, %v3229
    %v3478 = vpack.c.b16 %v3234, %v3230
    %v3479 = vpack.c.b16 %v3235, %v3231
    %v3480 = vpack.c.b16 %v3240, %v3236
    %v3481 = vpack.c.b16 %v3241, %v3237
    %v3482 = vpack.c.b16 %v3242, %v3238
    %v3483 = vpack.c.b16 %v3243, %v3239
    %v3484 = vpack.c.b16 %v3248, %v3244
    %v3485 = vpack.c.b16 %v3249, %v3245
    %v3486 = vpack.c.b16 %v3250, %v3246
    %v3487 = vpack.c.b16 %v3251, %v3247
    %v3488 = vpack.c.b16 %v3256, %v3252
    %v3489 = vpack.c.b16 %v3257, %v3253
    %v3490 = vpack.c.b16 %v3258, %v3254
    %v3491 = vpack.c.b16 %v3259, %v3255
    %v3492 = vpack.c.b16 %v3264, %v3260
    %v3493 = vpack.c.b16 %v3265, %v3261
    %v3494 = vpack.c.b16 %v3266, %v3262
    %v3495 = vpack.c.b16 %v3267, %v3263
    %v3496 = vpack.c.b16 %v3272, %v3268
    %v3497 = vpack.c.b16 %v3273, %v3269
    %v3498 = vpack.c.b16 %v3274, %v3270
    %v3499 = vpack.c.b16 %v3275, %v3271
    %v3500 = vpack.c.b16 %v3280, %v3276
    %v3501 = vpack.c.b16 %v3281, %v3277
    %v3502 = vpack.c.b16 %v3282, %v3278
    %v3503 = vpack.c.b16 %v3283, %v3279
    %v3504 = vpack.c.b16 %v3288, %v3284
    %v3505 = vpack.c.b16 %v3289, %v3285
    %v3506 = vpack.c.b16 %v3290, %v3286
    %v3507 = vpack.c.b16 %v3291, %v3287
    %v3508 = vpack.c.b16 %v3296, %v3292
    %v3509 = vpack.c.b16 %v3297, %v3293
    %v3510 = vpack.c.b16 %v3298, %v3294
    %v3511 = vpack.c.b16 %v3299, %v3295
    %v3512 = vpack.c.b16 %v3304, %v3300
    %v3513 = vpack.c.b16 %v3305, %v3301
    %v3514 = vpack.c.b16 %v3306, %v3302
    %v3515 = vpack.c.b16 %v3307, %v3303
    %v3516 = vpack.c.b16 %v3312, %v3308
    %v3517 = vpack.c.b16 %v3313, %v3309
    %v3518 = vpack.c.b16 %v3314, %v3310
    %v3519 = vpack.c.b16 %v3315, %v3311
    %v3520 = vpack.c.b16 %v3320, %v3316
    %v3521 = vpack.c.b16 %v3321, %v3317
    %v3522 = vpack.c.b16 %v3322, %v3318
    %v3523 = vpack.c.b16 %v3323, %v3319
    %v3524 = vpack.c.b16 %v3328, %v3324
    %v3525 = vpack.c.b16 %v3329, %v3325
    %v3526 = vpack.c.b16 %v3330, %v3326
    %v3527 = vpack.c.b16 %v3331, %v3327
    %v3528 = vpack.c.b16 %v3336, %v3332
    %v3529 = vpack.c.b16 %v3337, %v3333
    %v3530 = vpack.c.b16 %v3338, %v3334
    %v3531 = vpack.c.b16 %v3339, %v3335
    %v3532 = vpack.c.b16 %v3344, %v3340
    %v3533 = vpack.c.b16 %v3345, %v3341
    %v3534 = vpack.c.b16 %v3346, %v3342
    %v3535 = vpack.c.b16 %v3347, %v3343
    %v3536 = vpack.c.b16 %v3352, %v3348
    %v3537 = vpack.c.b16 %v3353, %v3349
    %v3538 = vpack.c.b16 %v3354, %v3350
    %v3539 = vpack.c.b16 %v3355, %v3351
    %v3540 = vpack.c.b16 %v3360, %v3356
    %v3541 = vpack.c.b16 %v3361, %v3357
    %v3542 = vpack.c.b16 %v3362, %v3358
    %v3543 = vpack.c.b16 %v3363, %v3359
    %v3544 = vpack.c.b16 %v3368, %v3364
    %v3545 = vpack.c.b16 %v3369, %v3365
    %v3546 = vpack.c.b16 %v3370, %v3366
    %v3547 = vpack.c.b16 %v3371, %v3367
    %v3548 = vpack.c.b16 %v3376, %v3372
    %v3549 = vpack.c.b16 %v3377, %v3373
    %v3550 = vpack.c.b16 %v3378, %v3374
    %v3551 = vpack.c.b16 %v3379, %v3375
    %v3552 = vpack.c.b16 %v3384, %v3380
    %v3553 = vpack.c.b16 %v3385, %v3381
    %v3554 = vpack.c.b16 %v3386, %v3382
    %v3555 = vpack.c.b16 %v3387, %v3383
    %v3556 = vpack.c.b16 %v3392, %v3388
    %v3557 = vpack.c.b16 %v3393, %v3389
    %v3558 = vpack.c.b16 %v3394, %v3390
    %v3559 = vpack.c.b16 %v3395, %v3391
    %v3560 = vpack.c.b16 %v3400, %v3396
    %v3561 = vpack.c.b16 %v3401, %v3397
    %v3562 = vpack.c.b16 %v3402, %v3398
    %v3563 = vpack.c.b16 %v3403, %v3399
    %v3564 = vpack.c.b16 %v3408, %v3404
    %v3565 = vpack.c.b16 %v3409, %v3405
    %v3566 = vpack.c.b16 %v3410, %v3406
    %v3567 = vpack.c.b16 %v3411, %v3407
    %v3568 = vpack.c.b16 %v3416, %v3412
    %v3569 = vpack.c.b16 %v3417, %v3413
    %v3570 = vpack.c.b16 %v3418, %v3414
    %v3571 = vpack.c.b16 %v3419, %v3415
    %v3572 = vpack.c.b16 %v3424, %v3420
    %v3573 = vpack.c.b16 %v3425, %v3421
    %v3574 = vpack.c.b16 %v3426, %v3422
    %v3575 = vpack.c.b16 %v3427, %v3423
    %v3576 = vpack.c.b16 %v3432, %v3428
    %v3577 = vpack.c.b16 %v3433, %v3429
    %v3578 = vpack.c.b16 %v3434, %v3430
    %v3579 = vpack.c.b16 %v3435, %v3431
    %v3580 = vpack.c.b16 %v3440, %v3436
    %v3581 = vpack.c.b16 %v3441, %v3437
    %v3582 = vpack.c.b16 %v3442, %v3438
    %v3583 = vpack.c.b16 %v3443, %v3439
    %v3584 = vpack.c.b16 %v3448, %v3444
    %v3585 = vpack.c.b16 %v3449, %v3445
    %v3586 = vpack.c.b16 %v3450, %v3446
    %v3587 = vpack.c.b16 %v3451, %v3447
    %v3588 = vpack.c.b16 %v3456, %v3452
    %v3589 = vpack.c.b16 %v3457, %v3453
    %v3590 = vpack.c.b16 %v3458, %v3454
    %v3591 = vpack.c.b16 %v3459, %v3455
    %v3592 = vpack.c.b16 %v3464, %v3460
    %v3593 = vpack.c.b16 %v3465, %v3461
    %v3594 = vpack.c.b16 %v3466, %v3462
    %v3595 = vpack.c.b16 %v3467, %v3463
    %3724 = vmatprep.subr.bf16.mxu0 %v3469
    %3725 = vmatpush1.bf16.msra.mxu0 %v3468
    %3726 = vmatprep.subr.bf16.mxu0 %v3473
    %3727 = vmatpush1.bf16.msra.mxu0 %v3472
    %3728 = vmatprep.subr.bf16.mxu0 %v3477
    %3729 = vmatpush1.bf16.msra.mxu0 %v3476
    %3730 = vmatprep.subr.bf16.mxu0 %v3481
    %3731 = vmatpush1.bf16.msra.mxu0 %v3480
    %3732 = vmatprep.subr.bf16.mxu0 %v3485
    %3733 = vmatpush1.bf16.msra.mxu0 %v3484
    %3734 = vmatprep.subr.bf16.mxu0 %v3489
    %3735 = vmatpush1.bf16.msra.mxu0 %v3488
    %3736 = vmatprep.subr.bf16.mxu0 %v3493
    %3737 = vmatpush1.bf16.msra.mxu0 %v3492
    %3738 = vmatprep.subr.bf16.mxu0 %v3497
    %3739 = vmatpush1.bf16.msra.mxu0 %v3496
    %3740 = vmatprep.subr.bf16.mxu0 %v3501
    %3741 = vmatpush1.bf16.msra.mxu0 %v3500
    %3742 = vmatprep.subr.bf16.mxu0 %v3505
    %3743 = vmatpush1.bf16.msra.mxu0 %v3504
    %3744 = vmatprep.subr.bf16.mxu0 %v3509
    %3745 = vmatpush1.bf16.msra.mxu0 %v3508
    %3746 = vmatprep.subr.bf16.mxu0 %v3513
    %3747 = vmatpush1.bf16.msra.mxu0 %v3512
    %3748 = vmatprep.subr.bf16.mxu0 %v3517
    %3749 = vmatpush1.bf16.msra.mxu0 %v3516
    %3750 = vmatprep.subr.bf16.mxu0 %v3521
    %3751 = vmatpush1.bf16.msra.mxu0 %v3520
    %3752 = vmatprep.subr.bf16.mxu0 %v3525
    %3753 = vmatpush1.bf16.msra.mxu0 %v3524
    %3754 = vmatprep.subr.bf16.mxu0 %v3529
    %3755 = vmatpush1.bf16.msra.mxu0 %v3528
    %3756 = vmatprep.mubr.bf16.mxu0 %v2953
    %3757 = vmatmul.mubr.bf16.gmra.mrb[0].mxu0 %v2952
    %v3758 = vpop.f32.mrb[0].mxu0
    %v3759 = vadd.f32 0.0, %v3758
    %v3760 = vpop.f32.mrb[0].mxu0
    %v3761 = vadd.f32 0.0, %v3760
    %v3762 = vpop.f32.mrb[0].mxu0
    %v3763 = vpop.f32.mrb[0].mxu0
    %3764 = vdwg.mxu0
    %3765 = vmatprep.subr.bf16.mxu0 %v3533
    %3766 = vmatpush1.bf16.msra.mxu0 %v3532
    %3767 = vmatprep.subr.bf16.mxu0 %v3537
    %3768 = vmatpush1.bf16.msra.mxu0 %v3536
    %3769 = vmatprep.subr.bf16.mxu0 %v3541
    %3770 = vmatpush1.bf16.msra.mxu0 %v3540
    %3771 = vmatprep.subr.bf16.mxu0 %v3545
    %3772 = vmatpush1.bf16.msra.mxu0 %v3544
    %3773 = vmatprep.subr.bf16.mxu0 %v3549
    %3774 = vmatpush1.bf16.msra.mxu0 %v3548
    %3775 = vmatprep.subr.bf16.mxu0 %v3553
    %3776 = vmatpush1.bf16.msra.mxu0 %v3552
    %3777 = vmatprep.subr.bf16.mxu0 %v3557
    %3778 = vmatpush1.bf16.msra.mxu0 %v3556
    %3779 = vmatprep.subr.bf16.mxu0 %v3561
    %3780 = vmatpush1.bf16.msra.mxu0 %v3560
    %3781 = vmatprep.subr.bf16.mxu0 %v3565
    %3782 = vmatpush1.bf16.msra.mxu0 %v3564
    %3783 = vmatprep.subr.bf16.mxu0 %v3569
    %3784 = vmatpush1.bf16.msra.mxu0 %v3568
    %3785 = vmatprep.subr.bf16.mxu0 %v3573
    %3786 = vmatpush1.bf16.msra.mxu0 %v3572
    %3787 = vmatprep.subr.bf16.mxu0 %v3577
    %3788 = vmatpush1.bf16.msra.mxu0 %v3576
    %3789 = vmatprep.subr.bf16.mxu0 %v3581
    %3790 = vmatpush1.bf16.msra.mxu0 %v3580
    %3791 = vmatprep.subr.bf16.mxu0 %v3585
    %3792 = vmatpush1.bf16.msra.mxu0 %v3584
    %3793 = vmatprep.subr.bf16.mxu0 %v3589
    %3794 = vmatpush1.bf16.msra.mxu0 %v3588
    %3795 = vmatprep.subr.bf16.mxu0 %v3593
    %3796 = vmatpush1.bf16.msra.mxu0 %v3592
    %3797 = vmatprep.mubr.bf16.mxu0 %v2955
    %3798 = vmatmul.mubr.bf16.gmra.mrb[0].mxu0 %v2954
    %v3799 = vpop.f32.mrb[0].mxu0
    %v3800 = vadd.f32 %v3759, %v3799
    %v3801 = vpop.f32.mrb[0].mxu0
    %v3802 = vadd.f32 %v3761, %v3801
    %v3803 = vpop.f32.mrb[0].mxu0
    %v3804 = vpop.f32.mrb[0].mxu0
    %3805 = vdwg.mxu0
    %3806 = vmatprep.subr.bf16.mxu0 %v3471
    %3807 = vmatpush1.bf16.msra.mxu0 %v3470
    %3808 = vmatprep.subr.bf16.mxu0 %v3475
    %3809 = vmatpush1.bf16.msra.mxu0 %v3474
    %3810 = vmatprep.subr.bf16.mxu0 %v3479
    %3811 = vmatpush1.bf16.msra.mxu0 %v3478
    %3812 = vmatprep.subr.bf16.mxu0 %v3483
    %3813 = vmatpush1.bf16.msra.mxu0 %v3482
    %3814 = vmatprep.subr.bf16.mxu0 %v3487
    %3815 = vmatpush1.bf16.msra.mxu0 %v3486
    %3816 = vmatprep.subr.bf16.mxu0 %v3491
    %3817 = vmatpush1.bf16.msra.mxu0 %v3490
    %3818 = vmatprep.subr.bf16.mxu0 %v3495
    %3819 = vmatpush1.bf16.msra.mxu0 %v3494
    %3820 = vmatprep.subr.bf16.mxu0 %v3499
    %3821 = vmatpush1.bf16.msra.mxu0 %v3498
    %3822 = vmatprep.subr.bf16.mxu0 %v3503
    %3823 = vmatpush1.bf16.msra.mxu0 %v3502
    %3824 = vmatprep.subr.bf16.mxu0 %v3507
    %3825 = vmatpush1.bf16.msra.mxu0 %v3506
    %3826 = vmatprep.subr.bf16.mxu0 %v3511
    %3827 = vmatpush1.bf16.msra.mxu0 %v3510
    %3828 = vmatprep.subr.bf16.mxu0 %v3515
    %3829 = vmatpush1.bf16.msra.mxu0 %v3514
    %3830 = vmatprep.subr.bf16.mxu0 %v3519
    %3831 = vmatpush1.bf16.msra.mxu0 %v3518
    %3832 = vmatprep.subr.bf16.mxu0 %v3523
    %3833 = vmatpush1.bf16.msra.mxu0 %v3522
    %3834 = vmatprep.subr.bf16.mxu0 %v3527
    %3835 = vmatpush1.bf16.msra.mxu0 %v3526
    %3836 = vmatprep.subr.bf16.mxu0 %v3531
    %3837 = vmatpush1.bf16.msra.mxu0 %v3530
    %3838 = vmatprep.mubr.bf16.mxu0 %v2953
    %3839 = vmatmul.mubr.bf16.gmra.mrb[0].mxu0 %v2952
    %v3840 = vpop.f32.mrb[0].mxu0
    %v3841 = vadd.f32 0.0, %v3840
    %v3842 = vpop.f32.mrb[0].mxu0
    %v3843 = vadd.f32 0.0, %v3842
    %v3844 = vpop.f32.mrb[0].mxu0
    %v3845 = vpop.f32.mrb[0].mxu0
    %3846 = vdwg.mxu0
    %3847 = vmatprep.subr.bf16.mxu0 %v3535
    %3848 = vmatpush1.bf16.msra.mxu0 %v3534
    %3849 = vmatprep.subr.bf16.mxu0 %v3539
    %3850 = vmatpush1.bf16.msra.mxu0 %v3538
    %3851 = vmatprep.subr.bf16.mxu0 %v3543
    %3852 = vmatpush1.bf16.msra.mxu0 %v3542
    %3853 = vmatprep.subr.bf16.mxu0 %v3547
    %3854 = vmatpush1.bf16.msra.mxu0 %v3546
    %3855 = vmatprep.subr.bf16.mxu0 %v3551
    %3856 = vmatpush1.bf16.msra.mxu0 %v3550
    %3857 = vmatprep.subr.bf16.mxu0 %v3555
    %3858 = vmatpush1.bf16.msra.mxu0 %v3554
    %3859 = vmatprep.subr.bf16.mxu0 %v3559
    %3860 = vmatpush1.bf16.msra.mxu0 %v3558
    %3861 = vmatprep.subr.bf16.mxu0 %v3563
    %3862 = vmatpush1.bf16.msra.mxu0 %v3562
    %3863 = vmatprep.subr.bf16.mxu0 %v3567
    %3864 = vmatpush1.bf16.msra.mxu0 %v3566
    %3865 = vmatprep.subr.bf16.mxu0 %v3571
    %3866 = vmatpush1.bf16.msra.mxu0 %v3570
    %3867 = vmatprep.subr.bf16.mxu0 %v3575
    %3868 = vmatpush1.bf16.msra.mxu0 %v3574
    %3869 = vmatprep.subr.bf16.mxu0 %v3579
    %3870 = vmatpush1.bf16.msra.mxu0 %v3578
    %3871 = vmatprep.subr.bf16.mxu0 %v3583
    %3872 = vmatpush1.bf16.msra.mxu0 %v3582
    %3873 = vmatprep.subr.bf16.mxu0 %v3587
    %3874 = vmatpush1.bf16.msra.mxu0 %v3586
    %3875 = vmatprep.subr.bf16.mxu0 %v3591
    %3876 = vmatpush1.bf16.msra.mxu0 %v3590
    %3877 = vmatprep.subr.bf16.mxu0 %v3595
    %3878 = vmatpush1.bf16.msra.mxu0 %v3594
    %3879 = vmatprep.mubr.bf16.mxu0 %v2955
    %3880 = vmatmul.mubr.bf16.gmra.mrb[0].mxu0 %v2954
    %v3881 = vpop.f32.mrb[0].mxu0
    %v3882 = vadd.f32 %v3841, %v3881
    %v3883 = vpop.f32.mrb[0].mxu0
    %v3884 = vadd.f32 %v3843, %v3883
    %v3885 = vpop.f32.mrb[0].mxu0
    %v3886 = vpop.f32.mrb[0].mxu0
    %3887 = vdwg.mxu0
    %v4016 = vunpack.c.l.b16 %v2824
    %v4017 = vunpack.c.h.b16 %v2824
    %v4018 = vunpack.c.l.b16 %v2825
    %v4019 = vunpack.c.h.b16 %v2825
    %v4020 = vunpack.c.l.b16 %v2826
    %v4021 = vunpack.c.h.b16 %v2826
    %v4022 = vunpack.c.l.b16 %v2827
    %v4023 = vunpack.c.h.b16 %v2827
    %v4024 = vunpack.c.l.b16 %v2828
    %v4025 = vunpack.c.h.b16 %v2828
    %v4026 = vunpack.c.l.b16 %v2829
    %v4027 = vunpack.c.h.b16 %v2829
    %v4028 = vunpack.c.l.b16 %v2830
    %v4029 = vunpack.c.h.b16 %v2830
    %v4030 = vunpack.c.l.b16 %v2831
    %v4031 = vunpack.c.h.b16 %v2831
    %v4032 = vunpack.c.l.b16 %v2832
    %v4033 = vunpack.c.h.b16 %v2832
    %v4034 = vunpack.c.l.b16 %v2833
    %v4035 = vunpack.c.h.b16 %v2833
    %v4036 = vunpack.c.l.b16 %v2834
    %v4037 = vunpack.c.h.b16 %v2834
    %v4038 = vunpack.c.l.b16 %v2835
    %v4039 = vunpack.c.h.b16 %v2835
    %v4040 = vunpack.c.l.b16 %v2836
    %v4041 = vunpack.c.h.b16 %v2836
    %v4042 = vunpack.c.l.b16 %v2837
    %v4043 = vunpack.c.h.b16 %v2837
    %v4044 = vunpack.c.l.b16 %v2838
    %v4045 = vunpack.c.h.b16 %v2838
    %v4046 = vunpack.c.l.b16 %v2839
    %v4047 = vunpack.c.h.b16 %v2839
    %v4048 = vunpack.c.l.b16 %v2840
    %v4049 = vunpack.c.h.b16 %v2840
    %v4050 = vunpack.c.l.b16 %v2841
    %v4051 = vunpack.c.h.b16 %v2841
    %v4052 = vunpack.c.l.b16 %v2842
    %v4053 = vunpack.c.h.b16 %v2842
    %v4054 = vunpack.c.l.b16 %v2843
    %v4055 = vunpack.c.h.b16 %v2843
    %v4056 = vunpack.c.l.b16 %v2844
    %v4057 = vunpack.c.h.b16 %v2844
    %v4058 = vunpack.c.l.b16 %v2845
    %v4059 = vunpack.c.h.b16 %v2845
    %v4060 = vunpack.c.l.b16 %v2846
    %v4061 = vunpack.c.h.b16 %v2846
    %v4062 = vunpack.c.l.b16 %v2847
    %v4063 = vunpack.c.h.b16 %v2847
    %v4064 = vunpack.c.l.b16 %v2848
    %v4065 = vunpack.c.h.b16 %v2848
    %v4066 = vunpack.c.l.b16 %v2849
    %v4067 = vunpack.c.h.b16 %v2849
    %v4068 = vunpack.c.l.b16 %v2850
    %v4069 = vunpack.c.h.b16 %v2850
    %v4070 = vunpack.c.l.b16 %v2851
    %v4071 = vunpack.c.h.b16 %v2851
    %v4072 = vunpack.c.l.b16 %v2852
    %v4073 = vunpack.c.h.b16 %v2852
    %v4074 = vunpack.c.l.b16 %v2853
    %v4075 = vunpack.c.h.b16 %v2853
    %v4076 = vunpack.c.l.b16 %v2854
    %v4077 = vunpack.c.h.b16 %v2854
    %v4078 = vunpack.c.l.b16 %v2855
    %v4079 = vunpack.c.h.b16 %v2855
    %v4080 = vunpack.c.l.b16 %v2856
    %v4081 = vunpack.c.h.b16 %v2856
    %v4082 = vunpack.c.l.b16 %v2857
    %v4083 = vunpack.c.h.b16 %v2857
    %v4084 = vunpack.c.l.b16 %v2858
    %v4085 = vunpack.c.h.b16 %v2858
    %v4086 = vunpack.c.l.b16 %v2859
    %v4087 = vunpack.c.h.b16 %v2859
    %v4088 = vunpack.c.l.b16 %v2860
    %v4089 = vunpack.c.h.b16 %v2860
    %v4090 = vunpack.c.l.b16 %v2861
    %v4091 = vunpack.c.h.b16 %v2861
    %v4092 = vunpack.c.l.b16 %v2862
    %v4093 = vunpack.c.h.b16 %v2862
    %v4094 = vunpack.c.l.b16 %v2863
    %v4095 = vunpack.c.h.b16 %v2863
    %v4096 = vunpack.c.l.b16 %v2864
    %v4097 = vunpack.c.h.b16 %v2864
    %v4098 = vunpack.c.l.b16 %v2865
    %v4099 = vunpack.c.h.b16 %v2865
    %v4100 = vunpack.c.l.b16 %v2866
    %v4101 = vunpack.c.h.b16 %v2866
    %v4102 = vunpack.c.l.b16 %v2867
    %v4103 = vunpack.c.h.b16 %v2867
    %v4104 = vunpack.c.l.b16 %v2868
    %v4105 = vunpack.c.h.b16 %v2868
    %v4106 = vunpack.c.l.b16 %v2869
    %v4107 = vunpack.c.h.b16 %v2869
    %v4108 = vunpack.c.l.b16 %v2870
    %v4109 = vunpack.c.h.b16 %v2870
    %v4110 = vunpack.c.l.b16 %v2871
    %v4111 = vunpack.c.h.b16 %v2871
    %v4112 = vunpack.c.l.b16 %v2872
    %v4113 = vunpack.c.h.b16 %v2872
    %v4114 = vunpack.c.l.b16 %v2873
    %v4115 = vunpack.c.h.b16 %v2873
    %v4116 = vunpack.c.l.b16 %v2874
    %v4117 = vunpack.c.h.b16 %v2874
    %v4118 = vunpack.c.l.b16 %v2875
    %v4119 = vunpack.c.h.b16 %v2875
    %v4120 = vunpack.c.l.b16 %v2876
    %v4121 = vunpack.c.h.b16 %v2876
    %v4122 = vunpack.c.l.b16 %v2877
    %v4123 = vunpack.c.h.b16 %v2877
    %v4124 = vunpack.c.l.b16 %v2878
    %v4125 = vunpack.c.h.b16 %v2878
    %v4126 = vunpack.c.l.b16 %v2879
    %v4127 = vunpack.c.h.b16 %v2879
    %v4128 = vunpack.c.l.b16 %v2880
    %v4129 = vunpack.c.h.b16 %v2880
    %v4130 = vunpack.c.l.b16 %v2881
    %v4131 = vunpack.c.h.b16 %v2881
    %v4132 = vunpack.c.l.b16 %v2882
    %v4133 = vunpack.c.h.b16 %v2882
    %v4134 = vunpack.c.l.b16 %v2883
    %v4135 = vunpack.c.h.b16 %v2883
    %v4136 = vunpack.c.l.b16 %v2884
    %v4137 = vunpack.c.h.b16 %v2884
    %v4138 = vunpack.c.l.b16 %v2885
    %v4139 = vunpack.c.h.b16 %v2885
    %v4140 = vunpack.c.l.b16 %v2886
    %v4141 = vunpack.c.h.b16 %v2886
    %v4142 = vunpack.c.l.b16 %v2887
    %v4143 = vunpack.c.h.b16 %v2887
    %v4144 = vunpack.c.l.b16 %v2888
    %v4145 = vunpack.c.h.b16 %v2888
    %v4146 = vunpack.c.l.b16 %v2889
    %v4147 = vunpack.c.h.b16 %v2889
    %v4148 = vunpack.c.l.b16 %v2890
    %v4149 = vunpack.c.h.b16 %v2890
    %v4150 = vunpack.c.l.b16 %v2891
    %v4151 = vunpack.c.h.b16 %v2891
    %v4152 = vunpack.c.l.b16 %v2892
    %v4153 = vunpack.c.h.b16 %v2892
    %v4154 = vunpack.c.l.b16 %v2893
    %v4155 = vunpack.c.h.b16 %v2893
    %v4156 = vunpack.c.l.b16 %v2894
    %v4157 = vunpack.c.h.b16 %v2894
    %v4158 = vunpack.c.l.b16 %v2895
    %v4159 = vunpack.c.h.b16 %v2895
    %v4160 = vunpack.c.l.b16 %v2896
    %v4161 = vunpack.c.h.b16 %v2896
    %v4162 = vunpack.c.l.b16 %v2897
    %v4163 = vunpack.c.h.b16 %v2897
    %v4164 = vunpack.c.l.b16 %v2898
    %v4165 = vunpack.c.h.b16 %v2898
    %v4166 = vunpack.c.l.b16 %v2899
    %v4167 = vunpack.c.h.b16 %v2899
    %v4168 = vunpack.c.l.b16 %v2900
    %v4169 = vunpack.c.h.b16 %v2900
    %v4170 = vunpack.c.l.b16 %v2901
    %v4171 = vunpack.c.h.b16 %v2901
    %v4172 = vunpack.c.l.b16 %v2902
    %v4173 = vunpack.c.h.b16 %v2902
    %v4174 = vunpack.c.l.b16 %v2903
    %v4175 = vunpack.c.h.b16 %v2903
    %v4176 = vunpack.c.l.b16 %v2904
    %v4177 = vunpack.c.h.b16 %v2904
    %v4178 = vunpack.c.l.b16 %v2905
    %v4179 = vunpack.c.h.b16 %v2905
    %v4180 = vunpack.c.l.b16 %v2906
    %v4181 = vunpack.c.h.b16 %v2906
    %v4182 = vunpack.c.l.b16 %v2907
    %v4183 = vunpack.c.h.b16 %v2907
    %v4184 = vunpack.c.l.b16 %v2908
    %v4185 = vunpack.c.h.b16 %v2908
    %v4186 = vunpack.c.l.b16 %v2909
    %v4187 = vunpack.c.h.b16 %v2909
    %v4188 = vunpack.c.l.b16 %v2910
    %v4189 = vunpack.c.h.b16 %v2910
    %v4190 = vunpack.c.l.b16 %v2911
    %v4191 = vunpack.c.h.b16 %v2911
    %v4192 = vunpack.c.l.b16 %v2912
    %v4193 = vunpack.c.h.b16 %v2912
    %v4194 = vunpack.c.l.b16 %v2913
    %v4195 = vunpack.c.h.b16 %v2913
    %v4196 = vunpack.c.l.b16 %v2914
    %v4197 = vunpack.c.h.b16 %v2914
    %v4198 = vunpack.c.l.b16 %v2915
    %v4199 = vunpack.c.h.b16 %v2915
    %v4200 = vunpack.c.l.b16 %v2916
    %v4201 = vunpack.c.h.b16 %v2916
    %v4202 = vunpack.c.l.b16 %v2917
    %v4203 = vunpack.c.h.b16 %v2917
    %v4204 = vunpack.c.l.b16 %v2918
    %v4205 = vunpack.c.h.b16 %v2918
    %v4206 = vunpack.c.l.b16 %v2919
    %v4207 = vunpack.c.h.b16 %v2919
    %v4208 = vunpack.c.l.b16 %v2920
    %v4209 = vunpack.c.h.b16 %v2920
    %v4210 = vunpack.c.l.b16 %v2921
    %v4211 = vunpack.c.h.b16 %v2921
    %v4212 = vunpack.c.l.b16 %v2922
    %v4213 = vunpack.c.h.b16 %v2922
    %v4214 = vunpack.c.l.b16 %v2923
    %v4215 = vunpack.c.h.b16 %v2923
    %v4216 = vunpack.c.l.b16 %v2924
    %v4217 = vunpack.c.h.b16 %v2924
    %v4218 = vunpack.c.l.b16 %v2925
    %v4219 = vunpack.c.h.b16 %v2925
    %v4220 = vunpack.c.l.b16 %v2926
    %v4221 = vunpack.c.h.b16 %v2926
    %v4222 = vunpack.c.l.b16 %v2927
    %v4223 = vunpack.c.h.b16 %v2927
    %v4224 = vunpack.c.l.b16 %v2928
    %v4225 = vunpack.c.h.b16 %v2928
    %v4226 = vunpack.c.l.b16 %v2929
    %v4227 = vunpack.c.h.b16 %v2929
    %v4228 = vunpack.c.l.b16 %v2930
    %v4229 = vunpack.c.h.b16 %v2930
    %v4230 = vunpack.c.l.b16 %v2931
    %v4231 = vunpack.c.h.b16 %v2931
    %v4232 = vunpack.c.l.b16 %v2932
    %v4233 = vunpack.c.h.b16 %v2932
    %v4234 = vunpack.c.l.b16 %v2933
    %v4235 = vunpack.c.h.b16 %v2933
    %v4236 = vunpack.c.l.b16 %v2934
    %v4237 = vunpack.c.h.b16 %v2934
    %v4238 = vunpack.c.l.b16 %v2935
    %v4239 = vunpack.c.h.b16 %v2935
    %v4240 = vunpack.c.l.b16 %v2936
    %v4241 = vunpack.c.h.b16 %v2936
    %v4242 = vunpack.c.l.b16 %v2937
    %v4243 = vunpack.c.h.b16 %v2937
    %v4244 = vunpack.c.l.b16 %v2938
    %v4245 = vunpack.c.h.b16 %v2938
    %v4246 = vunpack.c.l.b16 %v2939
    %v4247 = vunpack.c.h.b16 %v2939
    %v4248 = vunpack.c.l.b16 %v2940
    %v4249 = vunpack.c.h.b16 %v2940
    %v4250 = vunpack.c.l.b16 %v2941
    %v4251 = vunpack.c.h.b16 %v2941
    %v4252 = vunpack.c.l.b16 %v2942
    %v4253 = vunpack.c.h.b16 %v2942
    %v4254 = vunpack.c.l.b16 %v2943
    %v4255 = vunpack.c.h.b16 %v2943
    %v4256 = vunpack.c.l.b16 %v2944
    %v4257 = vunpack.c.h.b16 %v2944
    %v4258 = vunpack.c.l.b16 %v2945
    %v4259 = vunpack.c.h.b16 %v2945
    %v4260 = vunpack.c.l.b16 %v2946
    %v4261 = vunpack.c.h.b16 %v2946
    %v4262 = vunpack.c.l.b16 %v2947
    %v4263 = vunpack.c.h.b16 %v2947
    %v4264 = vunpack.c.l.b16 %v2948
    %v4265 = vunpack.c.h.b16 %v2948
    %v4266 = vunpack.c.l.b16 %v2949
    %v4267 = vunpack.c.h.b16 %v2949
    %v4268 = vunpack.c.l.b16 %v2950
    %v4269 = vunpack.c.h.b16 %v2950
    %v4270 = vunpack.c.l.b16 %v2951
    %v4271 = vunpack.c.h.b16 %v2951
    %v4272 = vpack.c.b16 %v4020, %v4016
    %v4273 = vpack.c.b16 %v4021, %v4017
    %v4274 = vpack.c.b16 %v4022, %v4018
    %v4275 = vpack.c.b16 %v4023, %v4019
    %v4276 = vpack.c.b16 %v4028, %v4024
    %v4277 = vpack.c.b16 %v4029, %v4025
    %v4278 = vpack.c.b16 %v4030, %v4026
    %v4279 = vpack.c.b16 %v4031, %v4027
    %v4280 = vpack.c.b16 %v4036, %v4032
    %v4281 = vpack.c.b16 %v4037, %v4033
    %v4282 = vpack.c.b16 %v4038, %v4034
    %v4283 = vpack.c.b16 %v4039, %v4035
    %v4284 = vpack.c.b16 %v4044, %v4040
    %v4285 = vpack.c.b16 %v4045, %v4041
    %v4286 = vpack.c.b16 %v4046, %v4042
    %v4287 = vpack.c.b16 %v4047, %v4043
    %v4288 = vpack.c.b16 %v4052, %v4048
    %v4289 = vpack.c.b16 %v4053, %v4049
    %v4290 = vpack.c.b16 %v4054, %v4050
    %v4291 = vpack.c.b16 %v4055, %v4051
    %v4292 = vpack.c.b16 %v4060, %v4056
    %v4293 = vpack.c.b16 %v4061, %v4057
    %v4294 = vpack.c.b16 %v4062, %v4058
    %v4295 = vpack.c.b16 %v4063, %v4059
    %v4296 = vpack.c.b16 %v4068, %v4064
    %v4297 = vpack.c.b16 %v4069, %v4065
    %v4298 = vpack.c.b16 %v4070, %v4066
    %v4299 = vpack.c.b16 %v4071, %v4067
    %v4300 = vpack.c.b16 %v4076, %v4072
    %v4301 = vpack.c.b16 %v4077, %v4073
    %v4302 = vpack.c.b16 %v4078, %v4074
    %v4303 = vpack.c.b16 %v4079, %v4075
    %v4304 = vpack.c.b16 %v4084, %v4080
    %v4305 = vpack.c.b16 %v4085, %v4081
    %v4306 = vpack.c.b16 %v4086, %v4082
    %v4307 = vpack.c.b16 %v4087, %v4083
    %v4308 = vpack.c.b16 %v4092, %v4088
    %v4309 = vpack.c.b16 %v4093, %v4089
    %v4310 = vpack.c.b16 %v4094, %v4090
    %v4311 = vpack.c.b16 %v4095, %v4091
    %v4312 = vpack.c.b16 %v4100, %v4096
    %v4313 = vpack.c.b16 %v4101, %v4097
    %v4314 = vpack.c.b16 %v4102, %v4098
    %v4315 = vpack.c.b16 %v4103, %v4099
    %v4316 = vpack.c.b16 %v4108, %v4104
    %v4317 = vpack.c.b16 %v4109, %v4105
    %v4318 = vpack.c.b16 %v4110, %v4106
    %v4319 = vpack.c.b16 %v4111, %v4107
    %v4320 = vpack.c.b16 %v4116, %v4112
    %v4321 = vpack.c.b16 %v4117, %v4113
    %v4322 = vpack.c.b16 %v4118, %v4114
    %v4323 = vpack.c.b16 %v4119, %v4115
    %v4324 = vpack.c.b16 %v4124, %v4120
    %v4325 = vpack.c.b16 %v4125, %v4121
    %v4326 = vpack.c.b16 %v4126, %v4122
    %v4327 = vpack.c.b16 %v4127, %v4123
    %v4328 = vpack.c.b16 %v4132, %v4128
    %v4329 = vpack.c.b16 %v4133, %v4129
    %v4330 = vpack.c.b16 %v4134, %v4130
    %v4331 = vpack.c.b16 %v4135, %v4131
    %v4332 = vpack.c.b16 %v4140, %v4136
    %v4333 = vpack.c.b16 %v4141, %v4137
    %v4334 = vpack.c.b16 %v4142, %v4138
    %v4335 = vpack.c.b16 %v4143, %v4139
    %v4336 = vpack.c.b16 %v4148, %v4144
    %v4337 = vpack.c.b16 %v4149, %v4145
    %v4338 = vpack.c.b16 %v4150, %v4146
    %v4339 = vpack.c.b16 %v4151, %v4147
    %v4340 = vpack.c.b16 %v4156, %v4152
    %v4341 = vpack.c.b16 %v4157, %v4153
    %v4342 = vpack.c.b16 %v4158, %v4154
    %v4343 = vpack.c.b16 %v4159, %v4155
    %v4344 = vpack.c.b16 %v4164, %v4160
    %v4345 = vpack.c.b16 %v4165, %v4161
    %v4346 = vpack.c.b16 %v4166, %v4162
    %v4347 = vpack.c.b16 %v4167, %v4163
    %v4348 = vpack.c.b16 %v4172, %v4168
    %v4349 = vpack.c.b16 %v4173, %v4169
    %v4350 = vpack.c.b16 %v4174, %v4170
    %v4351 = vpack.c.b16 %v4175, %v4171
    %v4352 = vpack.c.b16 %v4180, %v4176
    %v4353 = vpack.c.b16 %v4181, %v4177
    %v4354 = vpack.c.b16 %v4182, %v4178
    %v4355 = vpack.c.b16 %v4183, %v4179
    %v4356 = vpack.c.b16 %v4188, %v4184
    %v4357 = vpack.c.b16 %v4189, %v4185
    %v4358 = vpack.c.b16 %v4190, %v4186
    %v4359 = vpack.c.b16 %v4191, %v4187
    %v4360 = vpack.c.b16 %v4196, %v4192
    %v4361 = vpack.c.b16 %v4197, %v4193
    %v4362 = vpack.c.b16 %v4198, %v4194
    %v4363 = vpack.c.b16 %v4199, %v4195
    %v4364 = vpack.c.b16 %v4204, %v4200
    %v4365 = vpack.c.b16 %v4205, %v4201
    %v4366 = vpack.c.b16 %v4206, %v4202
    %v4367 = vpack.c.b16 %v4207, %v4203
    %v4368 = vpack.c.b16 %v4212, %v4208
    %v4369 = vpack.c.b16 %v4213, %v4209
    %v4370 = vpack.c.b16 %v4214, %v4210
    %v4371 = vpack.c.b16 %v4215, %v4211
    %v4372 = vpack.c.b16 %v4220, %v4216
    %v4373 = vpack.c.b16 %v4221, %v4217
    %v4374 = vpack.c.b16 %v4222, %v4218
    %v4375 = vpack.c.b16 %v4223, %v4219
    %v4376 = vpack.c.b16 %v4228, %v4224
    %v4377 = vpack.c.b16 %v4229, %v4225
    %v4378 = vpack.c.b16 %v4230, %v4226
    %v4379 = vpack.c.b16 %v4231, %v4227
    %v4380 = vpack.c.b16 %v4236, %v4232
    %v4381 = vpack.c.b16 %v4237, %v4233
    %v4382 = vpack.c.b16 %v4238, %v4234
    %v4383 = vpack.c.b16 %v4239, %v4235
    %v4384 = vpack.c.b16 %v4244, %v4240
    %v4385 = vpack.c.b16 %v4245, %v4241
    %v4386 = vpack.c.b16 %v4246, %v4242
    %v4387 = vpack.c.b16 %v4247, %v4243
    %v4388 = vpack.c.b16 %v4252, %v4248
    %v4389 = vpack.c.b16 %v4253, %v4249
    %v4390 = vpack.c.b16 %v4254, %v4250
    %v4391 = vpack.c.b16 %v4255, %v4251
    %v4392 = vpack.c.b16 %v4260, %v4256
    %v4393 = vpack.c.b16 %v4261, %v4257
    %v4394 = vpack.c.b16 %v4262, %v4258
    %v4395 = vpack.c.b16 %v4263, %v4259
    %v4396 = vpack.c.b16 %v4268, %v4264
    %v4397 = vpack.c.b16 %v4269, %v4265
    %v4398 = vpack.c.b16 %v4270, %v4266
    %v4399 = vpack.c.b16 %v4271, %v4267
    %4528 = vmatprep.subr.bf16.mxu0 %v4273
    %4529 = vmatpush1.bf16.msra.mxu0 %v4272
    %4530 = vmatprep.subr.bf16.mxu0 %v4277
    %4531 = vmatpush1.bf16.msra.mxu0 %v4276
    %4532 = vmatprep.subr.bf16.mxu0 %v4281
    %4533 = vmatpush1.bf16.msra.mxu0 %v4280
    %4534 = vmatprep.subr.bf16.mxu0 %v4285
    %4535 = vmatpush1.bf16.msra.mxu0 %v4284
    %4536 = vmatprep.subr.bf16.mxu0 %v4289
    %4537 = vmatpush1.bf16.msra.mxu0 %v4288
    %4538 = vmatprep.subr.bf16.mxu0 %v4293
    %4539 = vmatpush1.bf16.msra.mxu0 %v4292
    %4540 = vmatprep.subr.bf16.mxu0 %v4297
    %4541 = vmatpush1.bf16.msra.mxu0 %v4296
    %4542 = vmatprep.subr.bf16.mxu0 %v4301
    %4543 = vmatpush1.bf16.msra.mxu0 %v4300
    %4544 = vmatprep.subr.bf16.mxu0 %v4305
    %4545 = vmatpush1.bf16.msra.mxu0 %v4304
    %4546 = vmatprep.subr.bf16.mxu0 %v4309
    %4547 = vmatpush1.bf16.msra.mxu0 %v4308
    %4548 = vmatprep.subr.bf16.mxu0 %v4313
    %4549 = vmatpush1.bf16.msra.mxu0 %v4312
    %4550 = vmatprep.subr.bf16.mxu0 %v4317
    %4551 = vmatpush1.bf16.msra.mxu0 %v4316
    %4552 = vmatprep.subr.bf16.mxu0 %v4321
    %4553 = vmatpush1.bf16.msra.mxu0 %v4320
    %4554 = vmatprep.subr.bf16.mxu0 %v4325
    %4555 = vmatpush1.bf16.msra.mxu0 %v4324
    %4556 = vmatprep.subr.bf16.mxu0 %v4329
    %4557 = vmatpush1.bf16.msra.mxu0 %v4328
    %4558 = vmatprep.subr.bf16.mxu0 %v4333
    %4559 = vmatpush1.bf16.msra.mxu0 %v4332
    %4560 = vmatprep.mubr.bf16.mxu0 %v2821
    %4561 = vmatmul.mubr.bf16.gmra.mrb[0].mxu0 %v2820
    %v4562 = vpop.f32.mrb[0].mxu0
    %v4563 = vadd.f32 %v3800, %v4562
    %v4564 = vpop.f32.mrb[0].mxu0
    %v4565 = vadd.f32 %v3802, %v4564
    %v4566 = vpop.f32.mrb[0].mxu0
    %v4567 = vpop.f32.mrb[0].mxu0
    %4568 = vdwg.mxu0
    %4569 = vmatprep.subr.bf16.mxu0 %v4337
    %4570 = vmatpush1.bf16.msra.mxu0 %v4336
    %4571 = vmatprep.subr.bf16.mxu0 %v4341
    %4572 = vmatpush1.bf16.msra.mxu0 %v4340
    %4573 = vmatprep.subr.bf16.mxu0 %v4345
    %4574 = vmatpush1.bf16.msra.mxu0 %v4344
    %4575 = vmatprep.subr.bf16.mxu0 %v4349
    %4576 = vmatpush1.bf16.msra.mxu0 %v4348
    %4577 = vmatprep.subr.bf16.mxu0 %v4353
    %4578 = vmatpush1.bf16.msra.mxu0 %v4352
    %4579 = vmatprep.subr.bf16.mxu0 %v4357
    %4580 = vmatpush1.bf16.msra.mxu0 %v4356
    %4581 = vmatprep.subr.bf16.mxu0 %v4361
    %4582 = vmatpush1.bf16.msra.mxu0 %v4360
    %4583 = vmatprep.subr.bf16.mxu0 %v4365
    %4584 = vmatpush1.bf16.msra.mxu0 %v4364
    %4585 = vmatprep.subr.bf16.mxu0 %v4369
    %4586 = vmatpush1.bf16.msra.mxu0 %v4368
    %4587 = vmatprep.subr.bf16.mxu0 %v4373
    %4588 = vmatpush1.bf16.msra.mxu0 %v4372
    %4589 = vmatprep.subr.bf16.mxu0 %v4377
    %4590 = vmatpush1.bf16.msra.mxu0 %v4376
    %4591 = vmatprep.subr.bf16.mxu0 %v4381
    %4592 = vmatpush1.bf16.msra.mxu0 %v4380
    %4593 = vmatprep.subr.bf16.mxu0 %v4385
    %4594 = vmatpush1.bf16.msra.mxu0 %v4384
    %4595 = vmatprep.subr.bf16.mxu0 %v4389
    %4596 = vmatpush1.bf16.msra.mxu0 %v4388
    %4597 = vmatprep.subr.bf16.mxu0 %v4393
    %4598 = vmatpush1.bf16.msra.mxu0 %v4392
    %4599 = vmatprep.subr.bf16.mxu0 %v4397
    %4600 = vmatpush1.bf16.msra.mxu0 %v4396
    %4601 = vmatprep.mubr.bf16.mxu0 %v2823
    %4602 = vmatmul.mubr.bf16.gmra.mrb[0].mxu0 %v2822
    %v4603 = vpop.f32.mrb[0].mxu0
    %v4604 = vadd.f32 %v4563, %v4603
    %v4605 = vpop.f32.mrb[0].mxu0
    %v4606 = vadd.f32 %v4565, %v4605
    %v4607 = vpop.f32.mrb[0].mxu0
    %v4608 = vpop.f32.mrb[0].mxu0
    %4609 = vdwg.mxu0
    %4610 = vmatprep.subr.bf16.mxu0 %v4275
    %4611 = vmatpush1.bf16.msra.mxu0 %v4274
    %4612 = vmatprep.subr.bf16.mxu0 %v4279
    %4613 = vmatpush1.bf16.msra.mxu0 %v4278
    %4614 = vmatprep.subr.bf16.mxu0 %v4283
    %4615 = vmatpush1.bf16.msra.mxu0 %v4282
    %4616 = vmatprep.subr.bf16.mxu0 %v4287
    %4617 = vmatpush1.bf16.msra.mxu0 %v4286
    %4618 = vmatprep.subr.bf16.mxu0 %v4291
    %4619 = vmatpush1.bf16.msra.mxu0 %v4290
    %4620 = vmatprep.subr.bf16.mxu0 %v4295
    %4621 = vmatpush1.bf16.msra.mxu0 %v4294
    %4622 = vmatprep.subr.bf16.mxu0 %v4299
    %4623 = vmatpush1.bf16.msra.mxu0 %v4298
    %4624 = vmatprep.subr.bf16.mxu0 %v4303
    %4625 = vmatpush1.bf16.msra.mxu0 %v4302
    %4626 = vmatprep.subr.bf16.mxu0 %v4307
    %4627 = vmatpush1.bf16.msra.mxu0 %v4306
    %4628 = vmatprep.subr.bf16.mxu0 %v4311
    %4629 = vmatpush1.bf16.msra.mxu0 %v4310
    %4630 = vmatprep.subr.bf16.mxu0 %v4315
    %4631 = vmatpush1.bf16.msra.mxu0 %v4314
    %4632 = vmatprep.subr.bf16.mxu0 %v4319
    %4633 = vmatpush1.bf16.msra.mxu0 %v4318
    %4634 = vmatprep.subr.bf16.mxu0 %v4323
    %4635 = vmatpush1.bf16.msra.mxu0 %v4322
    %4636 = vmatprep.subr.bf16.mxu0 %v4327
    %4637 = vmatpush1.bf16.msra.mxu0 %v4326
    %4638 = vmatprep.subr.bf16.mxu0 %v4331
    %4639 = vmatpush1.bf16.msra.mxu0 %v4330
    %4640 = vmatprep.subr.bf16.mxu0 %v4335
    %4641 = vmatpush1.bf16.msra.mxu0 %v4334
    %4642 = vmatprep.mubr.bf16.mxu0 %v2821
    %4643 = vmatmul.mubr.bf16.gmra.mrb[0].mxu0 %v2820
    %v4644 = vpop.f32.mrb[0].mxu0
    %v4645 = vadd.f32 %v3882, %v4644
    %v4646 = vpop.f32.mrb[0].mxu0
    %v4647 = vadd.f32 %v3884, %v4646
    %v4648 = vpop.f32.mrb[0].mxu0
    %v4649 = vpop.f32.mrb[0].mxu0
    %4650 = vdwg.mxu0
    %4651 = vmatprep.subr.bf16.mxu0 %v4339
    %4652 = vmatpush1.bf16.msra.mxu0 %v4338
    %4653 = vmatprep.subr.bf16.mxu0 %v4343
    %4654 = vmatpush1.bf16.msra.mxu0 %v4342
    %4655 = vmatprep.subr.bf16.mxu0 %v4347
    %4656 = vmatpush1.bf16.msra.mxu0 %v4346
    %4657 = vmatprep.subr.bf16.mxu0 %v4351
    %4658 = vmatpush1.bf16.msra.mxu0 %v4350
    %4659 = vmatprep.subr.bf16.mxu0 %v4355
    %4660 = vmatpush1.bf16.msra.mxu0 %v4354
    %4661 = vmatprep.subr.bf16.mxu0 %v4359
    %4662 = vmatpush1.bf16.msra.mxu0 %v4358
    %4663 = vmatprep.subr.bf16.mxu0 %v4363
    %4664 = vmatpush1.bf16.msra.mxu0 %v4362
    %4665 = vmatprep.subr.bf16.mxu0 %v4367
    %4666 = vmatpush1.bf16.msra.mxu0 %v4366
    %4667 = vmatprep.subr.bf16.mxu0 %v4371
    %4668 = vmatpush1.bf16.msra.mxu0 %v4370
    %4669 = vmatprep.subr.bf16.mxu0 %v4375
    %4670 = vmatpush1.bf16.msra.mxu0 %v4374
    %4671 = vmatprep.subr.bf16.mxu0 %v4379
    %4672 = vmatpush1.bf16.msra.mxu0 %v4378
    %4673 = vmatprep.subr.bf16.mxu0 %v4383
    %4674 = vmatpush1.bf16.msra.mxu0 %v4382
    %4675 = vmatprep.subr.bf16.mxu0 %v4387
    %4676 = vmatpush1.bf16.msra.mxu0 %v4386
    %4677 = vmatprep.subr.bf16.mxu0 %v4391
    %4678 = vmatpush1.bf16.msra.mxu0 %v4390
    %4679 = vmatprep.subr.bf16.mxu0 %v4395
    %4680 = vmatpush1.bf16.msra.mxu0 %v4394
    %4681 = vmatprep.subr.bf16.mxu0 %v4399
    %4682 = vmatpush1.bf16.msra.mxu0 %v4398
    %4683 = vmatprep.mubr.bf16.mxu0 %v2823
    %4684 = vmatmul.mubr.bf16.gmra.mrb[0].mxu0 %v2822
    %v4685 = vpop.f32.mrb[0].mxu0
    %v4686 = vadd.f32 %v4645, %v4685
    %v4687 = vpop.f32.mrb[0].mxu0
    %v4688 = vadd.f32 %v4647, %v4687
    %v4689 = vpop.f32.mrb[0].mxu0
    %v4690 = vpop.f32.mrb[0].mxu0
    %4691 = vdwg.mxu0
    %s4692 = scalar_lea.vmem [#allocation14], 4
    %v4693 = vld [vmem:[%s4692] ss:$8 sm:$0xf]
    %s4694 = scalar_lea.vmem [#allocation14], 5
    %v4695 = vld [vmem:[%s4694] ss:$8 sm:$0xf]
    %v4696 = vrot.slane %v4604, 4
    %v4697 = vadd.f32 %v4604, %v4696
    %v4698 = vrot.slane %v4697, 2
    %v4699 = vadd.f32 %v4697, %v4698
    %v4700 = vrot.slane %v4699, 1
    %v4701 = vadd.f32 %v4699, %v4700
    %v4702 = vrot.slane %v4606, 4
    %v4703 = vadd.f32 %v4606, %v4702
    %v4704 = vrot.slane %v4703, 2
    %v4705 = vadd.f32 %v4703, %v4704
    %v4706 = vrot.slane %v4705, 1
    %v4707 = vadd.f32 %v4705, %v4706
    %v4708 = vrot.slane %v4686, 4
    %v4709 = vadd.f32 %v4686, %v4708
    %v4710 = vrot.slane %v4709, 2
    %v4711 = vadd.f32 %v4709, %v4710
    %v4712 = vrot.slane %v4711, 1
    %v4713 = vadd.f32 %v4711, %v4712
    %v4714 = vrot.slane %v4688, 4
    %v4715 = vadd.f32 %v4688, %v4714
    %v4716 = vrot.slane %v4715, 2
    %v4717 = vadd.f32 %v4715, %v4716
    %v4718 = vrot.slane %v4717, 1
    %v4719 = vadd.f32 %v4717, %v4718
    %v4720 = vmul.f32 %v4701, %v2041
    %v4721 = vmul.f32 %v4707, %v2041
    %v4722 = vmul.f32 %v4713, %v2041
    %v4723 = vmul.f32 %v4719, %v2041
    %v4724 = vsub.f32 %v4604, %v4720
    %v4725 = vsub.f32 %v4606, %v4721
    %v4726 = vsub.f32 %v4686, %v4722
    %v4727 = vsub.f32 %v4688, %v4723
    %v4728 = vmul.f32 %v4724, %v4724
    %v4729 = vmul.f32 %v4725, %v4725
    %v4730 = vmul.f32 %v4726, %v4726
    %v4731 = vmul.f32 %v4727, %v4727
    %v4732 = vrot.slane %v4728, 4
    %v4733 = vadd.f32 %v4728, %v4732
    %v4734 = vrot.slane %v4733, 2
    %v4735 = vadd.f32 %v4733, %v4734
    %v4736 = vrot.slane %v4735, 1
    %v4737 = vadd.f32 %v4735, %v4736
    %v4738 = vrot.slane %v4729, 4
    %v4739 = vadd.f32 %v4729, %v4738
    %v4740 = vrot.slane %v4739, 2
    %v4741 = vadd.f32 %v4739, %v4740
    %v4742 = vrot.slane %v4741, 1
    %v4743 = vadd.f32 %v4741, %v4742
    %v4744 = vrot.slane %v4730, 4
    %v4745 = vadd.f32 %v4730, %v4744
    %v4746 = vrot.slane %v4745, 2
    %v4747 = vadd.f32 %v4745, %v4746
    %v4748 = vrot.slane %v4747, 1
    %v4749 = vadd.f32 %v4747, %v4748
    %v4750 = vrot.slane %v4731, 4
    %v4751 = vadd.f32 %v4731, %v4750
    %v4752 = vrot.slane %v4751, 2
    %v4753 = vadd.f32 %v4751, %v4752
    %v4754 = vrot.slane %v4753, 1
    %v4755 = vadd.f32 %v4753, %v4754
    %v4756 = vmul.f32 %v4737, %v2041
    %v4757 = vmul.f32 %v4743, %v2041
    %v4758 = vmul.f32 %v4749, %v2041
    %v4759 = vmul.f32 %v4755, %v2041
    %v4760 = vadd.f32 %v4756, 1e-05
    %v4761 = vadd.f32 %v4757, 1e-05
    %v4762 = vadd.f32 %v4758, 1e-05
    %v4763 = vadd.f32 %v4759, 1e-05
    %v4764 = vrsqrt.pop %v4760
    %v4765 = vrsqrt.pop %v4761
    %v4766 = vrsqrt.pop %v4762
    %v4767 = vrsqrt.pop %v4763
    %v4772 = vcombine.low %v4764, %v4765
    %v4773 = vcombine.low %v4766, %v4767
    %v4775 = vunpack.c.l.s4 1966171168
    %v4776 = vunpack.c.0.s8 %v4775
    %v4777 = vlaneseq
    %v4778 = vshrl.u32 %v4777, 7
    %v4779 = vsub.s32 %v4776, %v4778
    %v4780 = vrot.slane %v4772, %v4779
    %v4782 = vunpack.c.l.s4 1966171168
    %v4783 = vunpack.c.0.s8 %v4782
    %v4784 = vlaneseq
    %v4785 = vshrl.u32 %v4784, 7
    %v4786 = vsub.s32 %v4783, %v4785
    %v4787 = vrot.slane %v4773, %v4786
    %v4788 = vcombine.low %v4780, %v4787
    %v4790 = vunpack.c.l.s4 1966171168
    %v4791 = vunpack.c.0.s8 %v4790
    %v4792 = vlaneseq
    %v4793 = vshrl.u32 %v4792, 7
    %v4794 = vsub.s32 %v4791, %v4793
    %v4795 = vrot.slane %v4788, %v4794
    %v4797 = vmul.f32 %v4693, %v4795
    %v4799 = vlaneseq
    %v4800 = vshrl.u32 %v4799, 7
    %v4801 = vsub.s32 0, %v4800
    %v4802 = vrot.slane %v4797, %v4801
    %v4803 = vlaneseq
    %v4804 = vshrl.u32 %v4803, 7
    %v4805 = vsub.s32 1, %v4804
    %v4806 = vrot.slane %v4797, %v4805
    %v4807 = vlaneseq
    %v4808 = vshrl.u32 %v4807, 7
    %v4809 = vsub.s32 2, %v4808
    %v4810 = vrot.slane %v4797, %v4809
    %v4811 = vlaneseq
    %v4812 = vshrl.u32 %v4811, 7
    %v4813 = vsub.s32 3, %v4812
    %v4814 = vrot.slane %v4797, %v4813
    %v4819 = vmul.f32 %v4724, %v4802
    %v4820 = vmul.f32 %v4725, %v4806
    %v4821 = vmul.f32 %v4726, %v4810
    %v4822 = vmul.f32 %v4727, %v4814
    %v4824 = vlaneseq
    %v4825 = vshrl.u32 %v4824, 7
    %v4826 = vsub.s32 0, %v4825
    %v4827 = vrot.slane %v4695, %v4826
    %v4828 = vlaneseq
    %v4829 = vshrl.u32 %v4828, 7
    %v4830 = vsub.s32 1, %v4829
    %v4831 = vrot.slane %v4695, %v4830
    %v4832 = vlaneseq
    %v4833 = vshrl.u32 %v4832, 7
    %v4834 = vsub.s32 2, %v4833
    %v4835 = vrot.slane %v4695, %v4834
    %v4836 = vlaneseq
    %v4837 = vshrl.u32 %v4836, 7
    %v4838 = vsub.s32 3, %v4837
    %v4839 = vrot.slane %v4695, %v4838
    %v4844 = vadd.f32 %v4819, %v4827
    %v4845 = vadd.f32 %v4820, %v4831
    %v4846 = vadd.f32 %v4821, %v4835
    %v4847 = vadd.f32 %v4822, %v4839
    %vm4848 = vcmp.gt.f32.partialorder %v4844, 0.0
    %vm4849 = vcmp.gt.f32.partialorder %v4845, 0.0
    %vm4850 = vcmp.gt.f32.partialorder %v4846, 0.0
    %vm4851 = vcmp.gt.f32.partialorder %v4847, 0.0
    %v4852 = vmul.f32 %v4844, 0.2
    %v4853 = vmul.f32 %v4845, 0.2
    %v4854 = vmul.f32 %v4846, 0.2
    %v4855 = vmul.f32 %v4847, 0.2
    %v4856 = vsel %vm4848, %v4844, %v4852
    %v4857 = vsel %vm4849, %v4845, %v4853
    %v4858 = vsel %vm4850, %v4846, %v4854
    %v4859 = vsel %vm4851, %v4847, %v4855
    %v4860 = vpack.c.bf16 %v4856, %v4856
    %v4861 = vpack.c.bf16 %v4857, %v4857
    %v4862 = vpack.c.bf16 %v4858, %v4858
    %v4863 = vpack.c.bf16 %v4859, %v4859
    %v4864 = vld [vmem:[#allocation13] sm:$0xf]
    %v4865 = vld [vmem:[#allocation13 + $0x4] sm:$0xf]
    %v4866 = vld [vmem:[#allocation13 + $0x8] sm:$0xf]
    %v4867 = vld [vmem:[#allocation13 + $0xc] sm:$0xf]
    %v4868 = vld [vmem:[#allocation13 + $0x10] sm:$0xf]
    %v4869 = vld [vmem:[#allocation13 + $0x14] sm:$0xf]
    %v4870 = vld [vmem:[#allocation13 + $0x18] sm:$0xf]
    %v4871 = vld [vmem:[#allocation13 + $0x1c] sm:$0xf]
    %v4872 = vld [vmem:[#allocation13 + $0x20] sm:$0xf]
    %v4873 = vld [vmem:[#allocation13 + $0x24] sm:$0xf]
    %v4874 = vld [vmem:[#allocation13 + $0x28] sm:$0xf]
    %v4875 = vld [vmem:[#allocation13 + $0x2c] sm:$0xf]
    %v4876 = vld [vmem:[#allocation13 + $0x30] sm:$0xf]
    %v4877 = vld [vmem:[#allocation13 + $0x34] sm:$0xf]
    %v4878 = vld [vmem:[#allocation13 + $0x38] sm:$0xf]
    %v4879 = vld [vmem:[#allocation13 + $0x3c] sm:$0xf]
    %v4880 = vld [vmem:[#allocation13 + $0x40] sm:$0xf]
    %v4881 = vld [vmem:[#allocation13 + $0x44] sm:$0xf]
    %v4882 = vld [vmem:[#allocation13 + $0x48] sm:$0xf]
    %v4883 = vld [vmem:[#allocation13 + $0x4c] sm:$0xf]
    %v4884 = vld [vmem:[#allocation13 + $0x50] sm:$0xf]
    %v4885 = vld [vmem:[#allocation13 + $0x54] sm:$0xf]
    %v4886 = vld [vmem:[#allocation13 + $0x58] sm:$0xf]
    %v4887 = vld [vmem:[#allocation13 + $0x5c] sm:$0xf]
    %v4888 = vld [vmem:[#allocation13 + $0x60] sm:$0xf]
    %v4889 = vld [vmem:[#allocation13 + $0x64] sm:$0xf]
    %v4890 = vld [vmem:[#allocation13 + $0x68] sm:$0xf]
    %v4891 = vld [vmem:[#allocation13 + $0x6c] sm:$0xf]
    %v4892 = vld [vmem:[#allocation13 + $0x70] sm:$0xf]
    %v4893 = vld [vmem:[#allocation13 + $0x74] sm:$0xf]
    %v4894 = vld [vmem:[#allocation13 + $0x78] sm:$0xf]
    %v4895 = vld [vmem:[#allocation13 + $0x7c] sm:$0xf]
    %v4896 = vld [vmem:[#allocation13 + $0x80] sm:$0xf]
    %v4897 = vld [vmem:[#allocation13 + $0x84] sm:$0xf]
    %v4898 = vld [vmem:[#allocation13 + $0x88] sm:$0xf]
    %v4899 = vld [vmem:[#allocation13 + $0x8c] sm:$0xf]
    %v4900 = vld [vmem:[#allocation13 + $0x90] sm:$0xf]
    %v4901 = vld [vmem:[#allocation13 + $0x94] sm:$0xf]
    %v4902 = vld [vmem:[#allocation13 + $0x98] sm:$0xf]
    %v4903 = vld [vmem:[#allocation13 + $0x9c] sm:$0xf]
    %v4904 = vld [vmem:[#allocation13 + $0xa0] sm:$0xf]
    %v4905 = vld [vmem:[#allocation13 + $0xa4] sm:$0xf]
    %v4906 = vld [vmem:[#allocation13 + $0xa8] sm:$0xf]
    %v4907 = vld [vmem:[#allocation13 + $0xac] sm:$0xf]
    %v4908 = vld [vmem:[#allocation13 + $0xb0] sm:$0xf]
    %v4909 = vld [vmem:[#allocation13 + $0xb4] sm:$0xf]
    %v4910 = vld [vmem:[#allocation13 + $0xb8] sm:$0xf]
    %v4911 = vld [vmem:[#allocation13 + $0xbc] sm:$0xf]
    %v4912 = vld [vmem:[#allocation13 + $0xc0] sm:$0xf]
    %v4913 = vld [vmem:[#allocation13 + $0xc4] sm:$0xf]
    %v4914 = vld [vmem:[#allocation13 + $0xc8] sm:$0xf]
    %v4915 = vld [vmem:[#allocation13 + $0xcc] sm:$0xf]
    %v4916 = vld [vmem:[#allocation13 + $0xd0] sm:$0xf]
    %v4917 = vld [vmem:[#allocation13 + $0xd4] sm:$0xf]
    %v4918 = vld [vmem:[#allocation13 + $0xd8] sm:$0xf]
    %v4919 = vld [vmem:[#allocation13 + $0xdc] sm:$0xf]
    %v4920 = vld [vmem:[#allocation13 + $0xe0] sm:$0xf]
    %v4921 = vld [vmem:[#allocation13 + $0xe4] sm:$0xf]
    %v4922 = vld [vmem:[#allocation13 + $0xe8] sm:$0xf]
    %v4923 = vld [vmem:[#allocation13 + $0xec] sm:$0xf]
    %v4924 = vld [vmem:[#allocation13 + $0xf0] sm:$0xf]
    %v4925 = vld [vmem:[#allocation13 + $0xf4] sm:$0xf]
    %v4926 = vld [vmem:[#allocation13 + $0xf8] sm:$0xf]
    %v4927 = vld [vmem:[#allocation13 + $0xfc] sm:$0xf]
    %v4928 = vld [vmem:[#allocation14 + $0x6] ss:$0 sm:$0xff]
    %v4993 = vunpack.c.l.b16 %v4864
    %v4994 = vunpack.c.l.b16 %v4865
    %v4995 = vunpack.c.l.b16 %v4866
    %v4996 = vunpack.c.l.b16 %v4867
    %v4997 = vunpack.c.l.b16 %v4868
    %v4998 = vunpack.c.l.b16 %v4869
    %v4999 = vunpack.c.l.b16 %v4870
    %v5000 = vunpack.c.l.b16 %v4871
    %v5001 = vunpack.c.l.b16 %v4872
    %v5002 = vunpack.c.l.b16 %v4873
    %v5003 = vunpack.c.l.b16 %v4874
    %v5004 = vunpack.c.l.b16 %v4875
    %v5005 = vunpack.c.l.b16 %v4876
    %v5006 = vunpack.c.l.b16 %v4877
    %v5007 = vunpack.c.l.b16 %v4878
    %v5008 = vunpack.c.l.b16 %v4879
    %v5009 = vunpack.c.l.b16 %v4880
    %v5010 = vunpack.c.l.b16 %v4881
    %v5011 = vunpack.c.l.b16 %v4882
    %v5012 = vunpack.c.l.b16 %v4883
    %v5013 = vunpack.c.l.b16 %v4884
    %v5014 = vunpack.c.l.b16 %v4885
    %v5015 = vunpack.c.l.b16 %v4886
    %v5016 = vunpack.c.l.b16 %v4887
    %v5017 = vunpack.c.l.b16 %v4888
    %v5018 = vunpack.c.l.b16 %v4889
    %v5019 = vunpack.c.l.b16 %v4890
    %v5020 = vunpack.c.l.b16 %v4891
    %v5021 = vunpack.c.l.b16 %v4892
    %v5022 = vunpack.c.l.b16 %v4893
    %v5023 = vunpack.c.l.b16 %v4894
    %v5024 = vunpack.c.l.b16 %v4895
    %v5025 = vunpack.c.l.b16 %v4896
    %v5026 = vunpack.c.l.b16 %v4897
    %v5027 = vunpack.c.l.b16 %v4898
    %v5028 = vunpack.c.l.b16 %v4899
    %v5029 = vunpack.c.l.b16 %v4900
    %v5030 = vunpack.c.l.b16 %v4901
    %v5031 = vunpack.c.l.b16 %v4902
    %v5032 = vunpack.c.l.b16 %v4903
    %v5033 = vunpack.c.l.b16 %v4904
    %v5034 = vunpack.c.l.b16 %v4905
    %v5035 = vunpack.c.l.b16 %v4906
    %v5036 = vunpack.c.l.b16 %v4907
    %v5037 = vunpack.c.l.b16 %v4908
    %v5038 = vunpack.c.l.b16 %v4909
    %v5039 = vunpack.c.l.b16 %v4910
    %v5040 = vunpack.c.l.b16 %v4911
    %v5041 = vunpack.c.l.b16 %v4912
    %v5042 = vunpack.c.l.b16 %v4913
    %v5043 = vunpack.c.l.b16 %v4914
    %v5044 = vunpack.c.l.b16 %v4915
    %v5045 = vunpack.c.l.b16 %v4916
    %v5046 = vunpack.c.l.b16 %v4917
    %v5047 = vunpack.c.l.b16 %v4918
    %v5048 = vunpack.c.l.b16 %v4919
    %v5049 = vunpack.c.l.b16 %v4920
    %v5050 = vunpack.c.l.b16 %v4921
    %v5051 = vunpack.c.l.b16 %v4922
    %v5052 = vunpack.c.l.b16 %v4923
    %v5053 = vunpack.c.l.b16 %v4924
    %v5054 = vunpack.c.l.b16 %v4925
    %v5055 = vunpack.c.l.b16 %v4926
    %v5056 = vunpack.c.l.b16 %v4927
    %v5057 = vpack.c.b16 %v4994, %v4993
    %v5058 = vpack.c.b16 %v4996, %v4995
    %v5059 = vpack.c.b16 %v4998, %v4997
    %v5060 = vpack.c.b16 %v5000, %v4999
    %v5061 = vpack.c.b16 %v5002, %v5001
    %v5062 = vpack.c.b16 %v5004, %v5003
    %v5063 = vpack.c.b16 %v5006, %v5005
    %v5064 = vpack.c.b16 %v5008, %v5007
    %v5065 = vpack.c.b16 %v5010, %v5009
    %v5066 = vpack.c.b16 %v5012, %v5011
    %v5067 = vpack.c.b16 %v5014, %v5013
    %v5068 = vpack.c.b16 %v5016, %v5015
    %v5069 = vpack.c.b16 %v5018, %v5017
    %v5070 = vpack.c.b16 %v5020, %v5019
    %v5071 = vpack.c.b16 %v5022, %v5021
    %v5072 = vpack.c.b16 %v5024, %v5023
    %v5073 = vpack.c.b16 %v5026, %v5025
    %v5074 = vpack.c.b16 %v5028, %v5027
    %v5075 = vpack.c.b16 %v5030, %v5029
    %v5076 = vpack.c.b16 %v5032, %v5031
    %v5077 = vpack.c.b16 %v5034, %v5033
    %v5078 = vpack.c.b16 %v5036, %v5035
    %v5079 = vpack.c.b16 %v5038, %v5037
    %v5080 = vpack.c.b16 %v5040, %v5039
    %v5081 = vpack.c.b16 %v5042, %v5041
    %v5082 = vpack.c.b16 %v5044, %v5043
    %v5083 = vpack.c.b16 %v5046, %v5045
    %v5084 = vpack.c.b16 %v5048, %v5047
    %v5085 = vpack.c.b16 %v5050, %v5049
    %v5086 = vpack.c.b16 %v5052, %v5051
    %v5087 = vpack.c.b16 %v5054, %v5053
    %v5088 = vpack.c.b16 %v5056, %v5055
    %5121 = vmatprep.subr.bf16.mxu0 0
    %5122 = vmatpush1.bf16.msra.mxu0 %v5057
    %5123 = vmatprep.subr.bf16.mxu0 0
    %5124 = vmatpush1.bf16.msra.mxu0 %v5058
    %5125 = vmatprep.subr.bf16.mxu0 0
    %5126 = vmatpush1.bf16.msra.mxu0 %v5059
    %5127 = vmatprep.subr.bf16.mxu0 0
    %5128 = vmatpush1.bf16.msra.mxu0 %v5060
    %5129 = vmatprep.subr.bf16.mxu0 0
    %5130 = vmatpush1.bf16.msra.mxu0 %v5061
    %5131 = vmatprep.subr.bf16.mxu0 0
    %5132 = vmatpush1.bf16.msra.mxu0 %v5062
    %5133 = vmatprep.subr.bf16.mxu0 0
    %5134 = vmatpush1.bf16.msra.mxu0 %v5063
    %5135 = vmatprep.subr.bf16.mxu0 0
    %5136 = vmatpush1.bf16.msra.mxu0 %v5064
    %5137 = vmatprep.subr.bf16.mxu0 0
    %5138 = vmatpush1.bf16.msra.mxu0 %v5065
    %5139 = vmatprep.subr.bf16.mxu0 0
    %5140 = vmatpush1.bf16.msra.mxu0 %v5066
    %5141 = vmatprep.subr.bf16.mxu0 0
    %5142 = vmatpush1.bf16.msra.mxu0 %v5067
    %5143 = vmatprep.subr.bf16.mxu0 0
    %5144 = vmatpush1.bf16.msra.mxu0 %v5068
    %5145 = vmatprep.subr.bf16.mxu0 0
    %5146 = vmatpush1.bf16.msra.mxu0 %v5069
    %5147 = vmatprep.subr.bf16.mxu0 0
    %5148 = vmatpush1.bf16.msra.mxu0 %v5070
    %5149 = vmatprep.subr.bf16.mxu0 0
    %5150 = vmatpush1.bf16.msra.mxu0 %v5071
    %5151 = vmatprep.subr.bf16.mxu0 0
    %5152 = vmatpush1.bf16.msra.mxu0 %v5072
    %5153 = vmatprep.mubr.bf16.mxu0 %v4861
    %5154 = vmatmul.mubr.bf16.gmra.mrb[0].mxu0 %v4860
    %v5155 = vpop.f32.mrb[0].mxu0
    %v5156 = vadd.f32 %v4928, %v5155
    %v5157 = vpop.f32.mrb[0].mxu0
    %v5158 = vpop.f32.mrb[0].mxu0
    %v5159 = vpop.f32.mrb[0].mxu0
    %5160 = vdwg.mxu0
    %5161 = vmatprep.subr.bf16.mxu0 0
    %5162 = vmatpush1.bf16.msra.mxu0 %v5073
    %5163 = vmatprep.subr.bf16.mxu0 0
    %5164 = vmatpush1.bf16.msra.mxu0 %v5074
    %5165 = vmatprep.subr.bf16.mxu0 0
    %5166 = vmatpush1.bf16.msra.mxu0 %v5075
    %5167 = vmatprep.subr.bf16.mxu0 0
    %5168 = vmatpush1.bf16.msra.mxu0 %v5076
    %5169 = vmatprep.subr.bf16.mxu0 0
    %5170 = vmatpush1.bf16.msra.mxu0 %v5077
    %5171 = vmatprep.subr.bf16.mxu0 0
    %5172 = vmatpush1.bf16.msra.mxu0 %v5078
    %5173 = vmatprep.subr.bf16.mxu0 0
    %5174 = vmatpush1.bf16.msra.mxu0 %v5079
    %5175 = vmatprep.subr.bf16.mxu0 0
    %5176 = vmatpush1.bf16.msra.mxu0 %v5080
    %5177 = vmatprep.subr.bf16.mxu0 0
    %5178 = vmatpush1.bf16.msra.mxu0 %v5081
    %5179 = vmatprep.subr.bf16.mxu0 0
    %5180 = vmatpush1.bf16.msra.mxu0 %v5082
    %5181 = vmatprep.subr.bf16.mxu0 0
    %5182 = vmatpush1.bf16.msra.mxu0 %v5083
    %5183 = vmatprep.subr.bf16.mxu0 0
    %5184 = vmatpush1.bf16.msra.mxu0 %v5084
    %5185 = vmatprep.subr.bf16.mxu0 0
    %5186 = vmatpush1.bf16.msra.mxu0 %v5085
    %5187 = vmatprep.subr.bf16.mxu0 0
    %5188 = vmatpush1.bf16.msra.mxu0 %v5086
    %5189 = vmatprep.subr.bf16.mxu0 0
    %5190 = vmatpush1.bf16.msra.mxu0 %v5087
    %5191 = vmatprep.subr.bf16.mxu0 0
    %5192 = vmatpush1.bf16.msra.mxu0 %v5088
    %5193 = vmatprep.mubr.bf16.mxu0 %v4863
    %5194 = vmatmul.mubr.bf16.gmra.mrb[0].mxu0 %v4862
    %v5195 = vpop.f32.mrb[0].mxu0
    %v5196 = vadd.f32 %v5156, %v5195
    %v5197 = vpop.f32.mrb[0].mxu0
    %v5198 = vpop.f32.mrb[0].mxu0
    %v5199 = vpop.f32.mrb[0].mxu0
    %5200 = vdwg.mxu0
    %v5201 = vtanh.pop %v5196
    %5202 = vst [vmem:[#allocation16] sm:$0xff] %v5201
    // Predicated region
    $region66: #{tpu_custom_call.1} parent=1 // pred_check
      _
    $region67: #{tpu_custom_call.1} parent=1 // pred_check_branch
      %5204 = sbr.rel (0) target = $region69
    $region68: #{tpu_custom_call.1} parent=1 // pred_region
      %s5206 = ssub.s32 128, 128
      %5207 = vsyncadd [#allocation4], %s5206
      %s5209 = sshll.u32 [#allocation16], 4
      %s5210 = int_to_ptr.vmem [resolvable:$true] %s5209
      %5212 = dma.vmem_to_hbm [thread:$0]  %s5210, 128, %s8, [#allocation4]
    $region69: #{tpu_custom_call.1} parent=1 // pred_fallthru
      _
    // Predicated region
    $region70: #{tpu_custom_call.1} parent=1 // pred_check
      _
    $region71: #{tpu_custom_call.1} parent=1 // pred_check_branch
      %5214 = sbr.rel (0) target = $region73
    $region72: #{tpu_custom_call.1} parent=1 // pred_region
      %5215 = dma.done [#allocation4], 128
    $region73: #{tpu_custom_call.1} parent=1 // pred_fallthru
      _
    %5216 = vsyncpa [#allocation3], 1
    %5217 = vsyncpa [#allocation6], 1
    %5218 = vsyncpa [#allocation9], 1
    %5219 = vsyncpa [#allocation12], 1
    %5220 = vsyncpa [#allocation15], 1
    %5221 = vsyncpa [#allocation4], 1

</llo_original>
